<compile_context>
chip_gen: v7x
topology: tpu7x:2x2x1
jax: 0.10.0
libtpu: 0.0.40
codegen_flags: <defaults>
</compile_context>

<pallas_src>
import math
from functools import partial

import jax
import jax.numpy as jnp
from jax import lax
from jax.experimental import pallas as pl
from jax.experimental.pallas import tpu as pltpu


# ----------------------------------------------------------------------------
# Fused kernel: projections + scores + relative shift + softmax + ctx + out
# ----------------------------------------------------------------------------
def _fused_rmha_kernel(x_ref, w_ref, b_ref, bo_ref, o_ref, *, B, H, S):
    T = S                       # module semantics require seq == d_head
    C = H * S                   # d_model
    BT = B * T

    # -- 1) all four projections in ONE batched (C x C) @ (C x B*T) MXU call --
    w_proj = w_ref[0:4]                                  # (4, C, C) rows heads-major
    x = x_ref[...]                                       # (4, C, BT) cols = (b, t)
    y = lax.dot_general(w_proj, x,
                        dimension_numbers=(((2,), (1,)), ((0,), (0,))),
                        preferred_element_type=jnp.float32)          # (4, C, BT)

    # -- 2) biases: pre-broadcast per-row slabs; q scale and u/v already folded --
    qu2 = y[0] + b_ref[0]        # (C, BT)  (q + bq + u) * 1/sqrt(d_model)
    qv2 = y[0] + b_ref[1]        #          (q + bq + v) * 1/sqrt(d_model)
    kh2 = y[1] + b_ref[2]
    vh2 = y[2] + b_ref[3]
    ph2 = y[3]                   # pos_proj has bias=False

    # -- 3) per-head core layout (B, H, S, Dh); static lane slice per batch elem,
    #       row split is a free leading reshape (rows are already (h, i)). --------
    def heads(y2d):              # (C, BT) -> (B, H, S, Dh)
        parts = [y2d[:, b * T:(b + 1) * T].reshape(H, S, T) for b in range(B)]
        return jnp.stack(parts, axis=0)

    qu, qv = heads(qu2), heads(qv2)
    kh, vh, ph = heads(kh2), heads(vh2), heads(ph2)

    # -- 4) content + positional scores fused into ONE batched dot (batch=2*B*H) --
    lhs = jnp.concatenate([qu, qv], axis=0).reshape(2 * B * H, S, T)
    rhs = jnp.concatenate([kh, ph], axis=0).reshape(2 * B * H, S, T)
    sc = lax.dot_general(lhs, rhs,
                         dimension_numbers=(((2,), (2,)), ((0,), (0,))),
                         preferred_element_type=jnp.float32)         # (2BH, S, S)
    content = sc[:B * H].reshape(B, H, S, S)
    pos_sc = sc[B * H:].reshape(B, H, S, S)

    # -- 5) Transformer-XL relative shift, value-level (no scratch buffers).
    #       Exact zero-pad + view trick in closed form:
    #       shifted[i, :] = [pos[i, S-1-i:], 0, pos[i+1, :S-2-i]]  (last row = pos[S-1, :])
    zcol = jnp.zeros((B, H, 1, 1), jnp.float32)
    rows = []
    for i in range(S):
        if i == S - 1:
            rows.append(pos_sc[:, :, i:i + 1, :])
        else:
            pieces = [pos_sc[:, :, i:i + 1, S - 1 - i:S], zcol]
            if S - 2 - i > 0:
                pieces.append(pos_sc[:, :, i + 1:i + 2, 0:S - 2 - i])
            rows.append(jnp.concatenate(pieces, axis=-1))
    pos_shift = jnp.concatenate(rows, axis=2)                        # (B, H, S, S)

    # -- 6) softmax over keys (1/sqrt(d_model) already folded into the q path) --
    score = content + pos_shift
    score = score - jnp.max(score, axis=-1, keepdims=True)
    e = jnp.exp(score)
    attn = e / jnp.sum(e, axis=-1, keepdims=True)
    # TODO(synk): optional boolean mask (masked_fill -1e9) and dropout not wired in
    # (dropout is identity at inference).

    # -- 7) context: ctx[b,h,i,k] = sum_j attn[b,h,i,j] * v[b,h,k,j] ------------
    ctx = lax.dot_general(attn.reshape(B * H, S, S), vh.reshape(B * H, S, T),
                          dimension_numbers=(((2,), (2,)), ((0,), (0,))),
                          preferred_element_type=jnp.float32)        # (BH, S_i, S_k)
    ctx4 = ctx.reshape(B, H, S, S)

    # -- 8) lane-dense (b*i, h*S+k) layout + ONE (BT,64)x(64,64) output matmul --
    ctx_t = jnp.concatenate([ctx4[:, h] for h in range(H)], axis=-1)  # (B, S, H*S)
    ctx_t = ctx_t.reshape(BT, C)
    out = lax.dot_general(ctx_t, w_ref[4],
                          dimension_numbers=(((1,), (0,)), ((), ())),
                          preferred_element_type=jnp.float32)         # (BT, C)
    o_ref[...] = (out + bo_ref[...]).astype(o_ref.dtype)


# ----------------------------------------------------------------------------
# Wrapper: one-time parameter re-layout (XLA) + single pallas_call.
# ----------------------------------------------------------------------------
def relative_mha_forward(params, query, key, value, pos_embedding, mask=None,
                         *, d_model, num_heads):
    if mask is not None:
        # TODO(synk): boolean mask (masked_fill with -1e9 before softmax) not wired in.
        raise NotImplementedError("mask is not supported in this Pallas port")

    B, C, T = query.shape
    H = num_heads
    Dh = d_model // num_heads
    S = Dh                                    # "position" extent of the torch .view trick
    assert C == d_model
    assert T == H == Dh, "module semantics require seq == num_heads == d_head"

    f32 = jnp.float32
    scale = 1.0 / math.sqrt(d_model)
    BT = B * T

    # Weights: reorder rows from torch's (i*H + h) to heads-major (h*S + i); keep
    # (C_out', C_in) so the kernel computes y = W @ x.  Scale folded into the q path.
    def row_perm(w, s=1.0):
        wp = w.reshape(S, H, d_model).transpose(1, 0, 2).reshape(d_model, d_model)
        return (wp * s).astype(f32)

    wq = row_perm(params["Wq"], scale)
    wk = row_perm(params["Wk"])
    wv = row_perm(params["Wv"])
    wp = row_perm(params["Wp"])
    wo_t = params["Wo"].T.astype(f32)         # ctx channel (h*S + k) already heads-major
    w_all = jnp.stack([wq, wk, wv, wp, wo_t], axis=0)                # (5, C, C)

    # Biases: heads-major per-row vectors, pre-broadcast over (b, t) columns so the
    # in-kernel adds are full-width vector adds (no lane broadcast in the kernel).
    def heads_major(vec_ih):                  # indexed [i, h] -> (C,) indexed h*S + i
        return vec_ih.T.reshape(d_model)

    bq_ih = params["bq"][:, 0].reshape(S, H)
    bk_ih = params["bk"][:, 0].reshape(S, H)
    bv_ih = params["bv"][:, 0].reshape(S, H)
    # u_bias/v_bias are (H, Dh, 1); torch's broadcast maps axis0->position, axis1->head.
    u_ih = params["u_bias"][:, :, 0]
    v_ih = params["v_bias"][:, :, 0]

    def slab(vec):                            # (C,) -> (C, B*T)
        return jnp.broadcast_to(vec.astype(f32)[:, None], (d_model, BT))

    b_all = jnp.stack([slab(heads_major(bq_ih + u_ih) * scale),
                       slab(heads_major(bq_ih + v_ih) * scale),
                       slab(heads_major(bk_ih)),
                       slab(heads_major(bv_ih))], axis=0)            # (4, C, BT)

    bo_b = jnp.broadcast_to(params["bo"][:, 0].astype(f32)[None, :], (BT, d_model))

    # Activations: one stacked channel-first slab, columns = (b, t).  Channel-first
    # keeps the q/k/v/p -> per-head path transpose-free inside the kernel.
    x_all = (jnp.stack([query, key, value, pos_embedding], axis=0)   # (4, B, C, T)
             .transpose(0, 2, 1, 3).reshape(4, d_model, BT).astype(f32))

    kernel = partial(_fused_rmha_kernel, B=B, H=H, S=S)
    out_flat = pl.pallas_call(
        kernel,
        grid=(1,),                 # batch folded in; on v7x a 2-TC split over B could be benchmarked
        in_specs=[
            pl.BlockSpec((4, d_model, BT), lambda i: (0, 0, 0)),        # x_all
            pl.BlockSpec((5, d_model, d_model), lambda i: (0, 0, 0)),   # w_all
            pl.BlockSpec((4, d_model, BT), lambda i: (0, 0, 0)),        # b_all
            pl.BlockSpec((BT, d_model), lambda i: (0, 0)),              # bo_b
        ],
        out_specs=pl.BlockSpec((BT, d_model), lambda i: (0, 0)),
        out_shape=jax.ShapeDtypeStruct((BT, d_model), jnp.float32),
        compiler_params=pltpu.CompilerParams(dimension_semantics=("arbitrary",)),
    )(x_all, w_all, b_all, bo_b)

    # lane-dense (b*t, o) slab -> torch layout (B, d_model, T)
    return out_flat.reshape(B, T, d_model).transpose(0, 2, 1)


# ----------------------------------------------------------------------------
# Pure-jnp reference (mirrors the torch forward op-for-op) for a sanity check
# ----------------------------------------------------------------------------
def relative_shift(pos_score):
    B, H, S1, S2 = pos_score.shape
    zeros = jnp.zeros((B, H, S1, 1), pos_score.dtype)
    padded = jnp.concatenate([zeros, pos_score], axis=-1)
    padded = padded.reshape(B, H, S2 + 1, S1)
    return padded[:, :, 1:].reshape(B, H, S1, S2)


def reference_forward(params, query, key, value, pos_embedding, *, d_model, num_heads):
    B = value.shape[0]
    d_head = d_model // num_heads

    def conv(x, W, b):
        y = jnp.einsum("oc,bct->bot", W, x)
        return y if b is None else y + b[None, :, :]

    q = conv(query, params["Wq"], params["bq"]).reshape(B, -1, num_heads, d_head)
    k = conv(key, params["Wk"], params["bk"]).reshape(B, -1, num_heads, d_head).transpose(0, 2, 1, 3)
    v = conv(value, params["Wv"], params["bv"]).reshape(B, -1, num_heads, d_head).transpose(0, 2, 1, 3)
    p = conv(pos_embedding, params["Wp"], None).reshape(B, -1, num_heads, d_head)

    content = jnp.matmul((q + params["u_bias"]).transpose(0, 2, 1, 3), jnp.swapaxes(k, 2, 3))
    pos_sc = jnp.matmul((q + params["v_bias"]).transpose(0, 2, 1, 3), p.transpose(0, 2, 3, 1))
    pos_sc = relative_shift(pos_sc)
    score = (content + pos_sc) / math.sqrt(d_model)
    attn = jax.nn.softmax(score, axis=-1)
    ctx = jnp.einsum("bhij,bhkj->bhki", attn, v)
    ctx = ctx.reshape(B, d_model, -1)
    return conv(ctx, params["Wo"], params["bo"])


# ----------------------------------------------------------------------------
# Deterministic parameter init (shapes from the module's __init__)
# ----------------------------------------------------------------------------
def init_params(key, d_model, num_heads):
    d_head = d_model // num_heads
    ks = jax.random.split(key, 11)
    s = 1.0 / math.sqrt(d_model)

    def w(k):
        return jax.random.uniform(k, (d_model, d_model), jnp.float32, -s, s)

    def b(k):
        return jax.random.uniform(k, (d_model, 1), jnp.float32, -s, s)

    xb = math.sqrt(6.0 / (num_heads + d_head))   # xavier-uniform style bound
    return dict(
        Wq=w(ks[0]), bq=b(ks[1]),
        Wk=w(ks[2]), bk=b(ks[3]),
        Wv=w(ks[4]), bv=b(ks[5]),
        Wp=w(ks[6]),                               # pos_proj has bias=False
        Wo=w(ks[7]), bo=b(ks[8]),
        u_bias=jax.random.uniform(ks[9], (num_heads, d_head, 1), jnp.float32, -xb, xb),
        v_bias=jax.random.uniform(ks[10], (num_heads, d_head, 1), jnp.float32, -xb, xb),
    )


if __name__ == "__main__":
    D_MODEL, NUM_HEADS = 64, 8     # d_head = 8
    B, T = 2, 8                    # module semantics require T == num_heads == d_head

    root = jax.random.PRNGKey(0)
    kp, kq, kk, kv, kpe = jax.random.split(root, 5)
    params = init_params(kp, D_MODEL, NUM_HEADS)

    query = jax.random.normal(kq, (B, D_MODEL, T), jnp.float32)
    key_t = jax.random.normal(kk, (B, D_MODEL, T), jnp.float32)
    value = jax.random.normal(kv, (B, D_MODEL, T), jnp.float32)
    pos_e = jax.random.normal(kpe, (B, D_MODEL, T), jnp.float32)

    fwd = jax.jit(partial(relative_mha_forward, d_model=D_MODEL, num_heads=NUM_HEADS))
    out = fwd(params, query, key_t, value, pos_e)
    out = jax.block_until_ready(out)

    ref = reference_forward(params, query, key_t, value, pos_e,
                            d_model=D_MODEL, num_heads=NUM_HEADS)
    assert out.shape == (B, D_MODEL, T)
    # f32 everywhere + exact softmax divide; tolerance covers matmul reassociation only.
    assert bool(jnp.allclose(out, ref, rtol=2e-3, atol=2e-3))
    print("KERNEL_OK")
</pallas_src>

<mosaic_0001>
module attributes {stable_mosaic.version = 11 : i64} {
  func.func @_fused_rmha_kernel(%arg0: i32, %arg1: memref<4x64x16xf32, #tpu.memory_space<vmem>>, %arg2: memref<5x64x64xf32, #tpu.memory_space<vmem>>, %arg3: memref<4x64x16xf32, #tpu.memory_space<vmem>>, %arg4: memref<16x64xf32, #tpu.memory_space<vmem>>, %arg5: memref<16x64xf32, #tpu.memory_space<vmem>>) attributes {dimension_semantics = [#tpu.dimension_semantics<arbitrary>], iteration_bounds = array<i64: 1>, scalar_prefetch = 0 : i64, scratch_operands = 0 : i64, tpu.core_type = #tpu.core_type<tc>, window_params = [{pipeline_mode = #tpu.pipeline_mode<synchronous>, transform_indices = @transform_0, window_bounds = array<i64: 4, 64, 16>}, {pipeline_mode = #tpu.pipeline_mode<synchronous>, transform_indices = @transform_1, window_bounds = array<i64: 5, 64, 64>}, {pipeline_mode = #tpu.pipeline_mode<synchronous>, transform_indices = @transform_2, window_bounds = array<i64: 4, 64, 16>}, {pipeline_mode = #tpu.pipeline_mode<synchronous>, transform_indices = @transform_3, window_bounds = array<i64: 16, 64>}, {pipeline_mode = #tpu.pipeline_mode<synchronous>, transform_indices = @transform_4, window_bounds = array<i64: 16, 64>}]} {
    %c0 = arith.constant 0 : index
    %c0_0 = arith.constant 0 : index
    %c0_1 = arith.constant 0 : index
    %0 = vector.load %arg2[%c0, %c0_0, %c0_1] : memref<5x64x64xf32, #tpu.memory_space<vmem>>, vector<4x64x64xf32>
    %c0_2 = arith.constant 0 : index
    %c0_3 = arith.constant 0 : index
    %c0_4 = arith.constant 0 : index
    %1 = vector.load %arg1[%c0_2, %c0_3, %c0_4] : memref<4x64x16xf32, #tpu.memory_space<vmem>>, vector<4x64x16xf32>
    %cst = arith.constant dense<0.000000e+00> : vector<4x64x16xf32>
    %2 = tpu.matmul %0, %1, %cst {dimension_numbers = #tpu.dot_dimension_numbers<[2], [1], [1], [2], [0, 0, 0, 1, 1, 2], [0], [0]>} : vector<4x64x64xf32>, vector<4x64x16xf32>, vector<4x64x16xf32> -> vector<4x64x16xf32>
    %3 = vector.extract_strided_slice %2 {offsets = [0, 0, 0], sizes = [1, 64, 16], strides = [1, 1, 1]} : vector<4x64x16xf32> to vector<1x64x16xf32>
    %4 = vector.shape_cast %3 : vector<1x64x16xf32> to vector<64x16xf32>
    %c0_5 = arith.constant 0 : index
    %c0_6 = arith.constant 0 : index
    %c0_7 = arith.constant 0 : index
    %5 = vector.load %arg3[%c0_5, %c0_6, %c0_7] : memref<4x64x16xf32, #tpu.memory_space<vmem>>, vector<1x64x16xf32>
    %6 = vector.shape_cast %5 : vector<1x64x16xf32> to vector<64x16xf32>
    %7 = arith.addf %4, %6 : vector<64x16xf32>
    %8 = vector.extract_strided_slice %2 {offsets = [0, 0, 0], sizes = [1, 64, 16], strides = [1, 1, 1]} : vector<4x64x16xf32> to vector<1x64x16xf32>
    %9 = vector.shape_cast %8 : vector<1x64x16xf32> to vector<64x16xf32>
    %c1 = arith.constant 1 : index
    %c0_8 = arith.constant 0 : index
    %c0_9 = arith.constant 0 : index
    %10 = vector.load %arg3[%c1, %c0_8, %c0_9] : memref<4x64x16xf32, #tpu.memory_space<vmem>>, vector<1x64x16xf32>
    %11 = vector.shape_cast %10 : vector<1x64x16xf32> to vector<64x16xf32>
    %12 = arith.addf %9, %11 : vector<64x16xf32>
    %13 = vector.extract_strided_slice %2 {offsets = [1, 0, 0], sizes = [1, 64, 16], strides = [1, 1, 1]} : vector<4x64x16xf32> to vector<1x64x16xf32>
    %14 = vector.shape_cast %13 : vector<1x64x16xf32> to vector<64x16xf32>
    %c2 = arith.constant 2 : index
    %c0_10 = arith.constant 0 : index
    %c0_11 = arith.constant 0 : index
    %15 = vector.load %arg3[%c2, %c0_10, %c0_11] : memref<4x64x16xf32, #tpu.memory_space<vmem>>, vector<1x64x16xf32>
    %16 = vector.shape_cast %15 : vector<1x64x16xf32> to vector<64x16xf32>
    %17 = arith.addf %14, %16 : vector<64x16xf32>
    %18 = vector.extract_strided_slice %2 {offsets = [2, 0, 0], sizes = [1, 64, 16], strides = [1, 1, 1]} : vector<4x64x16xf32> to vector<1x64x16xf32>
    %19 = vector.shape_cast %18 : vector<1x64x16xf32> to vector<64x16xf32>
    %c3 = arith.constant 3 : index
    %c0_12 = arith.constant 0 : index
    %c0_13 = arith.constant 0 : index
    %20 = vector.load %arg3[%c3, %c0_12, %c0_13] : memref<4x64x16xf32, #tpu.memory_space<vmem>>, vector<1x64x16xf32>
    %21 = vector.shape_cast %20 : vector<1x64x16xf32> to vector<64x16xf32>
    %22 = arith.addf %19, %21 : vector<64x16xf32>
    %23 = vector.extract_strided_slice %2 {offsets = [3, 0, 0], sizes = [1, 64, 16], strides = [1, 1, 1]} : vector<4x64x16xf32> to vector<1x64x16xf32>
    %24 = vector.shape_cast %23 : vector<1x64x16xf32> to vector<64x16xf32>
    %25 = vector.extract_strided_slice %7 {offsets = [0, 0], sizes = [64, 8], strides = [1, 1]} : vector<64x16xf32> to vector<64x8xf32>
    %26 = vector.shape_cast %25 : vector<64x8xf32> to vector<8x8x8xf32>
    %27 = vector.extract_strided_slice %7 {offsets = [0, 8], sizes = [64, 8], strides = [1, 1]} : vector<64x16xf32> to vector<64x8xf32>
    %28 = vector.shape_cast %27 : vector<64x8xf32> to vector<8x8x8xf32>
    %29 = vector.shape_cast %26 : vector<8x8x8xf32> to vector<1x8x8x8xf32>
    %30 = vector.shape_cast %28 : vector<8x8x8xf32> to vector<1x8x8x8xf32>
    %31 = tpu.concatenate %29, %30 in 0 : vector<1x8x8x8xf32>, vector<1x8x8x8xf32> -> vector<2x8x8x8xf32>
    %32 = vector.extract_strided_slice %12 {offsets = [0, 0], sizes = [64, 8], strides = [1, 1]} : vector<64x16xf32> to vector<64x8xf32>
    %33 = vector.shape_cast %32 : vector<64x8xf32> to vector<8x8x8xf32>
    %34 = vector.extract_strided_slice %12 {offsets = [0, 8], sizes = [64, 8], strides = [1, 1]} : vector<64x16xf32> to vector<64x8xf32>
    %35 = vector.shape_cast %34 : vector<64x8xf32> to vector<8x8x8xf32>
    %36 = vector.shape_cast %33 : vector<8x8x8xf32> to vector<1x8x8x8xf32>
    %37 = vector.shape_cast %35 : vector<8x8x8xf32> to vector<1x8x8x8xf32>
    %38 = tpu.concatenate %36, %37 in 0 : vector<1x8x8x8xf32>, vector<1x8x8x8xf32> -> vector<2x8x8x8xf32>
    %39 = vector.extract_strided_slice %17 {offsets = [0, 0], sizes = [64, 8], strides = [1, 1]} : vector<64x16xf32> to vector<64x8xf32>
    %40 = vector.shape_cast %39 : vector<64x8xf32> to vector<8x8x8xf32>
    %41 = vector.extract_strided_slice %17 {offsets = [0, 8], sizes = [64, 8], strides = [1, 1]} : vector<64x16xf32> to vector<64x8xf32>
    %42 = vector.shape_cast %41 : vector<64x8xf32> to vector<8x8x8xf32>
    %43 = vector.shape_cast %40 : vector<8x8x8xf32> to vector<1x8x8x8xf32>
    %44 = vector.shape_cast %42 : vector<8x8x8xf32> to vector<1x8x8x8xf32>
    %45 = tpu.concatenate %43, %44 in 0 : vector<1x8x8x8xf32>, vector<1x8x8x8xf32> -> vector<2x8x8x8xf32>
    %46 = vector.extract_strided_slice %22 {offsets = [0, 0], sizes = [64, 8], strides = [1, 1]} : vector<64x16xf32> to vector<64x8xf32>
    %47 = vector.shape_cast %46 : vector<64x8xf32> to vector<8x8x8xf32>
    %48 = vector.extract_strided_slice %22 {offsets = [0, 8], sizes = [64, 8], strides = [1, 1]} : vector<64x16xf32> to vector<64x8xf32>
    %49 = vector.shape_cast %48 : vector<64x8xf32> to vector<8x8x8xf32>
    %50 = vector.shape_cast %47 : vector<8x8x8xf32> to vector<1x8x8x8xf32>
    %51 = vector.shape_cast %49 : vector<8x8x8xf32> to vector<1x8x8x8xf32>
    %52 = tpu.concatenate %50, %51 in 0 : vector<1x8x8x8xf32>, vector<1x8x8x8xf32> -> vector<2x8x8x8xf32>
    %53 = vector.extract_strided_slice %24 {offsets = [0, 0], sizes = [64, 8], strides = [1, 1]} : vector<64x16xf32> to vector<64x8xf32>
    %54 = vector.shape_cast %53 : vector<64x8xf32> to vector<8x8x8xf32>
    %55 = vector.extract_strided_slice %24 {offsets = [0, 8], sizes = [64, 8], strides = [1, 1]} : vector<64x16xf32> to vector<64x8xf32>
    %56 = vector.shape_cast %55 : vector<64x8xf32> to vector<8x8x8xf32>
    %57 = vector.shape_cast %54 : vector<8x8x8xf32> to vector<1x8x8x8xf32>
    %58 = vector.shape_cast %56 : vector<8x8x8xf32> to vector<1x8x8x8xf32>
    %59 = tpu.concatenate %57, %58 in 0 : vector<1x8x8x8xf32>, vector<1x8x8x8xf32> -> vector<2x8x8x8xf32>
    %60 = tpu.concatenate %31, %38 in 0 : vector<2x8x8x8xf32>, vector<2x8x8x8xf32> -> vector<4x8x8x8xf32>
    %61 = vector.shape_cast %60 : vector<4x8x8x8xf32> to vector<32x8x8xf32>
    %62 = tpu.concatenate %45, %59 in 0 : vector<2x8x8x8xf32>, vector<2x8x8x8xf32> -> vector<4x8x8x8xf32>
    %63 = vector.shape_cast %62 : vector<4x8x8x8xf32> to vector<32x8x8xf32>
    %cst_14 = arith.constant dense<0.000000e+00> : vector<32x8x8xf32>
    %64 = tpu.matmul %61, %63, %cst_14 {dimension_numbers = #tpu.dot_dimension_numbers<[2], [2], [1], [1], [0, 0, 0, 1, 1, 1], [0], [0]>} : vector<32x8x8xf32>, vector<32x8x8xf32>, vector<32x8x8xf32> -> vector<32x8x8xf32>
    %65 = vector.extract_strided_slice %64 {offsets = [0, 0, 0], sizes = [16, 8, 8], strides = [1, 1, 1]} : vector<32x8x8xf32> to vector<16x8x8xf32>
    %66 = vector.shape_cast %65 : vector<16x8x8xf32> to vector<2x8x8x8xf32>
    %67 = vector.extract_strided_slice %64 {offsets = [16, 0, 0], sizes = [16, 8, 8], strides = [1, 1, 1]} : vector<32x8x8xf32> to vector<16x8x8xf32>
    %68 = vector.shape_cast %67 : vector<16x8x8xf32> to vector<2x8x8x8xf32>
    %cst_15 = arith.constant 0.000000e+00 : f32
    %69 = vector.broadcast %cst_15 : f32 to vector<2x8x1x1xf32>
    %70 = vector.extract_strided_slice %68 {offsets = [0, 0, 0, 7], sizes = [2, 8, 1, 1], strides = [1, 1, 1, 1]} : vector<2x8x8x8xf32> to vector<2x8x1x1xf32>
    %71 = vector.extract_strided_slice %68 {offsets = [0, 0, 1, 0], sizes = [2, 8, 1, 6], strides = [1, 1, 1, 1]} : vector<2x8x8x8xf32> to vector<2x8x1x6xf32>
    %72 = tpu.concatenate %70, %69, %71 in 3 : vector<2x8x1x1xf32>, vector<2x8x1x1xf32>, vector<2x8x1x6xf32> -> vector<2x8x1x8xf32>
    %73 = vector.extract_strided_slice %68 {offsets = [0, 0, 1, 6], sizes = [2, 8, 1, 2], strides = [1, 1, 1, 1]} : vector<2x8x8x8xf32> to vector<2x8x1x2xf32>
    %74 = vector.extract_strided_slice %68 {offsets = [0, 0, 2, 0], sizes = [2, 8, 1, 5], strides = [1, 1, 1, 1]} : vector<2x8x8x8xf32> to vector<2x8x1x5xf32>
    %75 = tpu.concatenate %73, %69, %74 in 3 : vector<2x8x1x2xf32>, vector<2x8x1x1xf32>, vector<2x8x1x5xf32> -> vector<2x8x1x8xf32>
    %76 = vector.extract_strided_slice %68 {offsets = [0, 0, 2, 5], sizes = [2, 8, 1, 3], strides = [1, 1, 1, 1]} : vector<2x8x8x8xf32> to vector<2x8x1x3xf32>
    %77 = vector.extract_strided_slice %68 {offsets = [0, 0, 3, 0], sizes = [2, 8, 1, 4], strides = [1, 1, 1, 1]} : vector<2x8x8x8xf32> to vector<2x8x1x4xf32>
    %78 = tpu.concatenate %76, %69, %77 in 3 : vector<2x8x1x3xf32>, vector<2x8x1x1xf32>, vector<2x8x1x4xf32> -> vector<2x8x1x8xf32>
    %79 = vector.extract_strided_slice %68 {offsets = [0, 0, 3, 4], sizes = [2, 8, 1, 4], strides = [1, 1, 1, 1]} : vector<2x8x8x8xf32> to vector<2x8x1x4xf32>
    %80 = vector.extract_strided_slice %68 {offsets = [0, 0, 4, 0], sizes = [2, 8, 1, 3], strides = [1, 1, 1, 1]} : vector<2x8x8x8xf32> to vector<2x8x1x3xf32>
    %81 = tpu.concatenate %79, %69, %80 in 3 : vector<2x8x1x4xf32>, vector<2x8x1x1xf32>, vector<2x8x1x3xf32> -> vector<2x8x1x8xf32>
    %82 = vector.extract_strided_slice %68 {offsets = [0, 0, 4, 3], sizes = [2, 8, 1, 5], strides = [1, 1, 1, 1]} : vector<2x8x8x8xf32> to vector<2x8x1x5xf32>
    %83 = vector.extract_strided_slice %68 {offsets = [0, 0, 5, 0], sizes = [2, 8, 1, 2], strides = [1, 1, 1, 1]} : vector<2x8x8x8xf32> to vector<2x8x1x2xf32>
    %84 = tpu.concatenate %82, %69, %83 in 3 : vector<2x8x1x5xf32>, vector<2x8x1x1xf32>, vector<2x8x1x2xf32> -> vector<2x8x1x8xf32>
    %85 = vector.extract_strided_slice %68 {offsets = [0, 0, 5, 2], sizes = [2, 8, 1, 6], strides = [1, 1, 1, 1]} : vector<2x8x8x8xf32> to vector<2x8x1x6xf32>
    %86 = vector.extract_strided_slice %68 {offsets = [0, 0, 6, 0], sizes = [2, 8, 1, 1], strides = [1, 1, 1, 1]} : vector<2x8x8x8xf32> to vector<2x8x1x1xf32>
    %87 = tpu.concatenate %85, %69, %86 in 3 : vector<2x8x1x6xf32>, vector<2x8x1x1xf32>, vector<2x8x1x1xf32> -> vector<2x8x1x8xf32>
    %88 = vector.extract_strided_slice %68 {offsets = [0, 0, 6, 1], sizes = [2, 8, 1, 7], strides = [1, 1, 1, 1]} : vector<2x8x8x8xf32> to vector<2x8x1x7xf32>
    %89 = tpu.concatenate %88, %69 in 3 : vector<2x8x1x7xf32>, vector<2x8x1x1xf32> -> vector<2x8x1x8xf32>
    %90 = vector.extract_strided_slice %68 {offsets = [0, 0, 7, 0], sizes = [2, 8, 1, 8], strides = [1, 1, 1, 1]} : vector<2x8x8x8xf32> to vector<2x8x1x8xf32>
    %91 = tpu.concatenate %72, %75, %78, %81, %84, %87, %89, %90 in 2 : vector<2x8x1x8xf32>, vector<2x8x1x8xf32>, vector<2x8x1x8xf32>, vector<2x8x1x8xf32>, vector<2x8x1x8xf32>, vector<2x8x1x8xf32>, vector<2x8x1x8xf32>, vector<2x8x1x8xf32> -> vector<2x8x8x8xf32>
    %92 = arith.addf %66, %91 : vector<2x8x8x8xf32>
    %cst_16 = arith.constant dense<0xFF800000> : vector<2x8x8xf32>
    %93 = vector.multi_reduction <maximumf>, %92, %cst_16 [3] : vector<2x8x8x8xf32> to vector<2x8x8xf32>
    %94 = vector.shape_cast %93 : vector<2x8x8xf32> to vector<2x8x8x1xf32>
    %95 = vector.broadcast %94 : vector<2x8x8x1xf32> to vector<2x8x8x8xf32>
    %96 = arith.subf %92, %95 : vector<2x8x8x8xf32>
    %97 = math.exp %96 : vector<2x8x8x8xf32>
    %cst_17 = arith.constant dense<0.000000e+00> : vector<2x8x8xf32>
    %98 = vector.multi_reduction <add>, %97, %cst_17 [3] : vector<2x8x8x8xf32> to vector<2x8x8xf32>
    %99 = vector.shape_cast %98 : vector<2x8x8xf32> to vector<2x8x8x1xf32>
    %100 = vector.broadcast %99 : vector<2x8x8x1xf32> to vector<2x8x8x8xf32>
    %101 = arith.divf %97, %100 : vector<2x8x8x8xf32>
    %102 = vector.shape_cast %101 : vector<2x8x8x8xf32> to vector<16x8x8xf32>
    %103 = vector.shape_cast %52 : vector<2x8x8x8xf32> to vector<16x8x8xf32>
    %cst_18 = arith.constant dense<0.000000e+00> : vector<16x8x8xf32>
    %104 = tpu.matmul %102, %103, %cst_18 {dimension_numbers = #tpu.dot_dimension_numbers<[2], [2], [1], [1], [0, 0, 0, 1, 1, 1], [0], [0]>} : vector<16x8x8xf32>, vector<16x8x8xf32>, vector<16x8x8xf32> -> vector<16x8x8xf32>
    %105 = vector.shape_cast %104 : vector<16x8x8xf32> to vector<2x8x8x8xf32>
    %106 = vector.extract_strided_slice %105 {offsets = [0, 0, 0, 0], sizes = [2, 1, 8, 8], strides = [1, 1, 1, 1]} : vector<2x8x8x8xf32> to vector<2x1x8x8xf32>
    %107 = vector.shape_cast %106 : vector<2x1x8x8xf32> to vector<2x8x8xf32>
    %108 = vector.extract_strided_slice %105 {offsets = [0, 1, 0, 0], sizes = [2, 1, 8, 8], strides = [1, 1, 1, 1]} : vector<2x8x8x8xf32> to vector<2x1x8x8xf32>
    %109 = vector.shape_cast %108 : vector<2x1x8x8xf32> to vector<2x8x8xf32>
    %110 = vector.extract_strided_slice %105 {offsets = [0, 2, 0, 0], sizes = [2, 1, 8, 8], strides = [1, 1, 1, 1]} : vector<2x8x8x8xf32> to vector<2x1x8x8xf32>
    %111 = vector.shape_cast %110 : vector<2x1x8x8xf32> to vector<2x8x8xf32>
    %112 = vector.extract_strided_slice %105 {offsets = [0, 3, 0, 0], sizes = [2, 1, 8, 8], strides = [1, 1, 1, 1]} : vector<2x8x8x8xf32> to vector<2x1x8x8xf32>
    %113 = vector.shape_cast %112 : vector<2x1x8x8xf32> to vector<2x8x8xf32>
    %114 = vector.extract_strided_slice %105 {offsets = [0, 4, 0, 0], sizes = [2, 1, 8, 8], strides = [1, 1, 1, 1]} : vector<2x8x8x8xf32> to vector<2x1x8x8xf32>
    %115 = vector.shape_cast %114 : vector<2x1x8x8xf32> to vector<2x8x8xf32>
    %116 = vector.extract_strided_slice %105 {offsets = [0, 5, 0, 0], sizes = [2, 1, 8, 8], strides = [1, 1, 1, 1]} : vector<2x8x8x8xf32> to vector<2x1x8x8xf32>
    %117 = vector.shape_cast %116 : vector<2x1x8x8xf32> to vector<2x8x8xf32>
    %118 = vector.extract_strided_slice %105 {offsets = [0, 6, 0, 0], sizes = [2, 1, 8, 8], strides = [1, 1, 1, 1]} : vector<2x8x8x8xf32> to vector<2x1x8x8xf32>
    %119 = vector.shape_cast %118 : vector<2x1x8x8xf32> to vector<2x8x8xf32>
    %120 = vector.extract_strided_slice %105 {offsets = [0, 7, 0, 0], sizes = [2, 1, 8, 8], strides = [1, 1, 1, 1]} : vector<2x8x8x8xf32> to vector<2x1x8x8xf32>
    %121 = vector.shape_cast %120 : vector<2x1x8x8xf32> to vector<2x8x8xf32>
    %122 = tpu.concatenate %107, %109, %111, %113, %115, %117, %119, %121 in 2 : vector<2x8x8xf32>, vector<2x8x8xf32>, vector<2x8x8xf32>, vector<2x8x8xf32>, vector<2x8x8xf32>, vector<2x8x8xf32>, vector<2x8x8xf32>, vector<2x8x8xf32> -> vector<2x8x64xf32>
    %123 = vector.shape_cast %122 : vector<2x8x64xf32> to vector<16x64xf32>
    %c4 = arith.constant 4 : index
    %c0_19 = arith.constant 0 : index
    %c0_20 = arith.constant 0 : index
    %124 = vector.load %arg2[%c4, %c0_19, %c0_20] : memref<5x64x64xf32, #tpu.memory_space<vmem>>, vector<1x64x64xf32>
    %125 = vector.shape_cast %124 : vector<1x64x64xf32> to vector<64x64xf32>
    %cst_21 = arith.constant dense<0.000000e+00> : vector<16x64xf32>
    %126 = tpu.matmul %123, %125, %cst_21 {dimension_numbers = #tpu.dot_dimension_numbers<[1], [0], [0], [1], [0, 0, 1, 1], [], []>} : vector<16x64xf32>, vector<64x64xf32>, vector<16x64xf32> -> vector<16x64xf32>
    %c0_22 = arith.constant 0 : index
    %c0_23 = arith.constant 0 : index
    %127 = vector.load %arg4[%c0_22, %c0_23] : memref<16x64xf32, #tpu.memory_space<vmem>>, vector<16x64xf32>
    %128 = arith.addf %126, %127 : vector<16x64xf32>
    %c0_24 = arith.constant 0 : index
    %c0_25 = arith.constant 0 : index
    %129 = vector.load %arg5[%c0_24, %c0_25] : memref<16x64xf32, #tpu.memory_space<vmem>>, vector<16x64xf32>
    tpu.vector_store %arg5[%c0_24, %c0_25], %128 {strides = array<i32>} : memref<16x64xf32, #tpu.memory_space<vmem>>, vector<16x64xf32>,
    return
  }
  func.func @transform_0(%arg0: i32) -> (i32, i32, i32) {
    %c0_i32 = arith.constant 0 : i32
    %c0_i32_0 = arith.constant 0 : i32
    %c0_i32_1 = arith.constant 0 : i32
    %c0_i32_2 = arith.constant 0 : i32
    return %c0_i32, %c0_i32_0, %c0_i32_1 : i32, i32, i32
  }
  func.func @transform_1(%arg0: i32) -> (i32, i32, i32) {
    %c0_i32 = arith.constant 0 : i32
    %c0_i32_0 = arith.constant 0 : i32
    %c0_i32_1 = arith.constant 0 : i32
    %c0_i32_2 = arith.constant 0 : i32
    return %c0_i32, %c0_i32_0, %c0_i32_1 : i32, i32, i32
  }
  func.func @transform_2(%arg0: i32) -> (i32, i32, i32) {
    %c0_i32 = arith.constant 0 : i32
    %c0_i32_0 = arith.constant 0 : i32
    %c0_i32_1 = arith.constant 0 : i32
    %c0_i32_2 = arith.constant 0 : i32
    return %c0_i32, %c0_i32_0, %c0_i32_1 : i32, i32, i32
  }
  func.func @transform_3(%arg0: i32) -> (i32, i32) {
    %c0_i32 = arith.constant 0 : i32
    %c0_i32_0 = arith.constant 0 : i32
    %c0_i32_1 = arith.constant 0 : i32
    return %c0_i32, %c0_i32_0 : i32, i32
  }
  func.func @transform_4(%arg0: i32) -> (i32, i32) {
    %c0_i32 = arith.constant 0 : i32
    %c0_i32_0 = arith.constant 0 : i32
    %c0_i32_1 = arith.constant 0 : i32
    return %c0_i32, %c0_i32_0 : i32, i32
  }
}

</mosaic_0001>

<llo_original>
// kernel: squeeze.6
$region0: #{squeeze.6}
  %s0 = inlined_call_operand.vmem [shape: f32[64], index: 0, kind: input, shape index: {}]
  %s1 = inlined_call_operand.vmem [shape: f32[8,8], index: 1, kind: output, shape index: {}]
  $region1: #{squeeze.6} parent=0
    #allocation0 [shape = 'u8[4096]{0}', space=vmem, size = 0x1000, scoped, tag = 'scoped mem for input reshape']
    %s3 = sshllo.u32 0, 1
    %v4 = vld [vmem:[%s0] sm:%s3]
    %5 = vst [vmem:[#allocation0] sm:%s3] %v4
    %v6 = vld [vmem:[#allocation0] sm:$0x1]
    %vm7 = vcmask 64512
    %8 = vst.msk [vmem:[%s1] sm:$0x1] %vm7, %v6
    %v9 = vld [vmem:[#allocation0] sm:$0x1]
    %10 = vrot.lane.b32.xlu0 %v9, 120
    %v11 = vpop.permute.xlu0 %10
    %vm12 = vcmask 64512
    %s13 = scalar_lea.vmem %s1, 1
    %14 = vst.msk [vmem:[%s13] sm:$0x1] %vm12, %v11
    %v15 = vld [vmem:[#allocation0] sm:$0x1]
    %16 = vrot.lane.b32.xlu0 %v15, 112
    %v17 = vpop.permute.xlu0 %16
    %vm18 = vcmask 64512
    %s19 = scalar_lea.vmem %s1, 2
    %20 = vst.msk [vmem:[%s19] sm:$0x1] %vm18, %v17
    %v21 = vld [vmem:[#allocation0] sm:$0x1]
    %22 = vrot.lane.b32.xlu0 %v21, 104
    %v23 = vpop.permute.xlu0 %22
    %vm24 = vcmask 64512
    %s25 = scalar_lea.vmem %s1, 3
    %26 = vst.msk [vmem:[%s25] sm:$0x1] %vm24, %v23
    %v27 = vld [vmem:[#allocation0] sm:$0x1]
    %28 = vrot.lane.b32.xlu0 %v27, 96
    %v29 = vpop.permute.xlu0 %28
    %vm30 = vcmask 64512
    %s31 = scalar_lea.vmem %s1, 4
    %32 = vst.msk [vmem:[%s31] sm:$0x1] %vm30, %v29
    %v33 = vld [vmem:[#allocation0] sm:$0x1]
    %34 = vrot.lane.b32.xlu0 %v33, 88
    %v35 = vpop.permute.xlu0 %34
    %vm36 = vcmask 64512
    %s37 = scalar_lea.vmem %s1, 5
    %38 = vst.msk [vmem:[%s37] sm:$0x1] %vm36, %v35
    %v39 = vld [vmem:[#allocation0] sm:$0x1]
    %40 = vrot.lane.b32.xlu0 %v39, 80
    %v41 = vpop.permute.xlu0 %40
    %vm42 = vcmask 64512
    %s43 = scalar_lea.vmem %s1, 6
    %44 = vst.msk [vmem:[%s43] sm:$0x1] %vm42, %v41
    %v45 = vld [vmem:[#allocation0] sm:$0x1]
    %46 = vrot.lane.b32.xlu0 %v45, 72
    %v47 = vpop.permute.xlu0 %46
    %vm48 = vcmask 64512
    %s49 = scalar_lea.vmem %s1, 7
    %50 = vst.msk [vmem:[%s49] sm:$0x1] %vm48, %v47

// kernel: relative_mha_forward.1
$region0: #{relative_mha_forward.1}
  #allocation0 [shape = 'u32[]', space=smem, size = 0x4, offset = 0x4, fixed_abs, tag = 'smem constant byte address 0x4 - core index']
  #allocation1 [shape = 'u32[144,128]{1,0:T(1,128)}', space=vmem, size = 0x12000, scoped, tag = 'internal scratch']
  %s0 = inlined_call_operand.vmem [shape: f32[4,64,16], index: 0, kind: input, shape index: {}]
  %s1 = inlined_call_operand.vmem [shape: f32[5,64,64], index: 1, kind: input, shape index: {}]
  %s2 = inlined_call_operand.vmem [shape: f32[4,64,16], index: 2, kind: input, shape index: {}]
  %s3 = inlined_call_operand.vmem [shape: f32[16,64], index: 3, kind: input, shape index: {}]
  %s4 = inlined_call_operand.hbm [shape: f32[16,64], index: 4, kind: output, shape index: {}]
  %s5 = sld [smem:[#allocation0]]
  $region26: #{relative_mha_forward.1} parent=0
    _
  %s7 = ssub.s32 1, %s5
  %s8 = scalar_select 0, %s7, %s5
  $region1: #{relative_mha_forward.1} parent=0
    #allocation2 [shape = 'u8[8192]{0}', space=vmem, size = 0x2000, scoped, tag = 'output window, operand 0, single buffered']
    #allocation3 [shape = 's32[1]{0}', space=sflag, size = 0x4, scoped, tag = 'scoped memory for relative_mha_forward.1']
    %9 = vsyncpa [#allocation3], 0
    // Predicated region
    $region2: #{relative_mha_forward.1} parent=1 // pred_check
      _
    $region3: #{relative_mha_forward.1} parent=1 // pred_check_branch
      %11 = sbr.rel (0) target = $region5
    $region4: #{relative_mha_forward.1} parent=1 // pred_region
      _
    $region5: #{relative_mha_forward.1} parent=1 // pred_fallthru
      _
    // Predicated region
    $region6: #{relative_mha_forward.1} parent=1 // pred_check
      _
    $region7: #{relative_mha_forward.1} parent=1 // pred_check_branch
      %13 = sbr.rel (0) target = $region9
    $region8: #{relative_mha_forward.1} parent=1 // pred_region
      _
    $region9: #{relative_mha_forward.1} parent=1 // pred_fallthru
      _
    // Predicated region
    $region10: #{relative_mha_forward.1} parent=1 // pred_check
      _
    $region11: #{relative_mha_forward.1} parent=1 // pred_check_branch
      %15 = sbr.rel (0) target = $region13
    $region12: #{relative_mha_forward.1} parent=1 // pred_region
      _
    $region13: #{relative_mha_forward.1} parent=1 // pred_fallthru
      _
    // Predicated region
    $region14: #{relative_mha_forward.1} parent=1 // pred_check
      _
    $region15: #{relative_mha_forward.1} parent=1 // pred_check_branch
      %17 = sbr.rel (0) target = $region17
    $region16: #{relative_mha_forward.1} parent=1 // pred_region
      _
    $region17: #{relative_mha_forward.1} parent=1 // pred_fallthru
      _
    %v18 = vld [vmem:[%s1] sm:$0xff]
    %v19 = vld [vmem:[%s1 + $0x8] sm:$0xff]
    %v20 = vld [vmem:[%s1 + $0x10] sm:$0xff]
    %v21 = vld [vmem:[%s1 + $0x18] sm:$0xff]
    %v22 = vld [vmem:[%s1 + $0x20] sm:$0xff]
    %v23 = vld [vmem:[%s1 + $0x28] sm:$0xff]
    %v24 = vld [vmem:[%s1 + $0x30] sm:$0xff]
    %v25 = vld [vmem:[%s1 + $0x38] sm:$0xff]
    %v26 = vld [vmem:[%s1 + $0x40] sm:$0xff]
    %v27 = vld [vmem:[%s1 + $0x48] sm:$0xff]
    %v28 = vld [vmem:[%s1 + $0x50] sm:$0xff]
    %v29 = vld [vmem:[%s1 + $0x58] sm:$0xff]
    %v30 = vld [vmem:[%s1 + $0x60] sm:$0xff]
    %v31 = vld [vmem:[%s1 + $0x68] sm:$0xff]
    %v32 = vld [vmem:[%s1 + $0x70] sm:$0xff]
    %v33 = vld [vmem:[%s1 + $0x78] sm:$0xff]
    %v34 = vld [vmem:[%s1 + $0x80] sm:$0xff]
    %v35 = vld [vmem:[%s1 + $0x88] sm:$0xff]
    %v36 = vld [vmem:[%s1 + $0x90] sm:$0xff]
    %v37 = vld [vmem:[%s1 + $0x98] sm:$0xff]
    %v38 = vld [vmem:[%s1 + $0xa0] sm:$0xff]
    %v39 = vld [vmem:[%s1 + $0xa8] sm:$0xff]
    %v40 = vld [vmem:[%s1 + $0xb0] sm:$0xff]
    %v41 = vld [vmem:[%s1 + $0xb8] sm:$0xff]
    %v42 = vld [vmem:[%s1 + $0xc0] sm:$0xff]
    %v43 = vld [vmem:[%s1 + $0xc8] sm:$0xff]
    %v44 = vld [vmem:[%s1 + $0xd0] sm:$0xff]
    %v45 = vld [vmem:[%s1 + $0xd8] sm:$0xff]
    %v46 = vld [vmem:[%s1 + $0xe0] sm:$0xff]
    %v47 = vld [vmem:[%s1 + $0xe8] sm:$0xff]
    %v48 = vld [vmem:[%s1 + $0xf0] sm:$0xff]
    %v49 = vld [vmem:[%s1 + $0xf8] sm:$0xff]
    %v50 = vld [vmem:[%s0] sm:$0xff]
    %v51 = vld [vmem:[%s0 + $0x8] sm:$0xff]
    %v52 = vld [vmem:[%s0 + $0x10] sm:$0xff]
    %v53 = vld [vmem:[%s0 + $0x18] sm:$0xff]
    %v54 = vld [vmem:[%s0 + $0x20] sm:$0xff]
    %v55 = vld [vmem:[%s0 + $0x28] sm:$0xff]
    %v56 = vld [vmem:[%s0 + $0x30] sm:$0xff]
    %v57 = vld [vmem:[%s0 + $0x38] sm:$0xff]
    %v58 = vld [vmem:[%s0 + $0x40] sm:$0xff]
    %v59 = vld [vmem:[%s0 + $0x48] sm:$0xff]
    %v60 = vld [vmem:[%s0 + $0x50] sm:$0xff]
    %v61 = vld [vmem:[%s0 + $0x58] sm:$0xff]
    %v62 = vld [vmem:[%s0 + $0x60] sm:$0xff]
    %v63 = vld [vmem:[%s0 + $0x68] sm:$0xff]
    %v64 = vld [vmem:[%s0 + $0x70] sm:$0xff]
    %v65 = vld [vmem:[%s0 + $0x78] sm:$0xff]
    %v66 = vld [vmem:[%s0 + $0x80] sm:$0xff]
    %v67 = vld [vmem:[%s0 + $0x88] sm:$0xff]
    %v68 = vld [vmem:[%s0 + $0x90] sm:$0xff]
    %v69 = vld [vmem:[%s0 + $0x98] sm:$0xff]
    %v70 = vld [vmem:[%s0 + $0xa0] sm:$0xff]
    %v71 = vld [vmem:[%s0 + $0xa8] sm:$0xff]
    %v72 = vld [vmem:[%s0 + $0xb0] sm:$0xff]
    %v73 = vld [vmem:[%s0 + $0xb8] sm:$0xff]
    %v74 = vld [vmem:[%s0 + $0xc0] sm:$0xff]
    %v75 = vld [vmem:[%s0 + $0xc8] sm:$0xff]
    %v76 = vld [vmem:[%s0 + $0xd0] sm:$0xff]
    %v77 = vld [vmem:[%s0 + $0xd8] sm:$0xff]
    %v78 = vld [vmem:[%s0 + $0xe0] sm:$0xff]
    %v79 = vld [vmem:[%s0 + $0xe8] sm:$0xff]
    %v80 = vld [vmem:[%s0 + $0xf0] sm:$0xff]
    %v81 = vld [vmem:[%s0 + $0xf8] sm:$0xff]
    %vm82 = vcmask 523264
    %v84 = vsel %vm82, %v18, 0
    %v87 = vsel %vm82, %v19, 0
    %v90 = vsel %vm82, %v20, 0
    %v93 = vsel %vm82, %v21, 0
    %v96 = vsel %vm82, %v22, 0
    %v99 = vsel %vm82, %v23, 0
    %v102 = vsel %vm82, %v24, 0
    %v105 = vsel %vm82, %v25, 0
    %107 = vmatprep.subr.mxu0 0.0
    %108 = vmatpush1.msra.mxu0 %v50
    %109 = vmatprep.subr.mxu0 0.0
    %110 = vmatpush1.msra.mxu0 %v51
    %111 = vmatprep.subr.mxu0 0.0
    %112 = vmatpush1.msra.mxu0 %v52
    %113 = vmatprep.subr.mxu0 0.0
    %114 = vmatpush1.msra.mxu0 %v53
    %115 = vmatprep.subr.mxu0 0.0
    %116 = vmatpush1.msra.mxu0 %v54
    %117 = vmatprep.subr.mxu0 0.0
    %118 = vmatpush1.msra.mxu0 %v55
    %119 = vmatprep.subr.mxu0 0.0
    %120 = vmatpush1.msra.mxu0 %v56
    %121 = vmatprep.subr.mxu0 0.0
    %122 = vmatpush1.msra.mxu0 %v57
    %123 = vmatprep.subr.mxu0 0.0
    %124 = vmatpush1.msra.mxu0 0.0
    %125 = vmatprep.subr.mxu0 0.0
    %126 = vmatpush1.msra.mxu0 0.0
    %127 = vmatprep.subr.mxu0 0.0
    %128 = vmatpush1.msra.mxu0 0.0
    %129 = vmatprep.subr.mxu0 0.0
    %130 = vmatpush1.msra.mxu0 0.0
    %131 = vmatprep.subr.mxu0 0.0
    %132 = vmatpush1.msra.mxu0 0.0
    %133 = vmatprep.subr.mxu0 0.0
    %134 = vmatpush1.msra.mxu0 0.0
    %135 = vmatprep.subr.mxu0 0.0
    %136 = vmatpush1.msra.mxu0 0.0
    %137 = vmatprep.subr.mxu0 0.0
    %138 = vmatpush1.msra.mxu0 0.0
    %139 = vmatprep.subr.mxu0 0.0
    %140 = vmatpush1.msra.mxu0 0.0
    %141 = vmatprep.subr.mxu0 0.0
    %142 = vmatpush1.msra.mxu0 0.0
    %143 = vmatprep.subr.mxu0 0.0
    %144 = vmatpush1.msra.mxu0 0.0
    %145 = vmatprep.subr.mxu0 0.0
    %146 = vmatpush1.msra.mxu0 0.0
    %147 = vmatprep.subr.mxu0 0.0
    %148 = vmatpush1.msra.mxu0 0.0
    %149 = vmatprep.subr.mxu0 0.0
    %150 = vmatpush1.msra.mxu0 0.0
    %151 = vmatprep.subr.mxu0 0.0
    %152 = vmatpush1.msra.mxu0 0.0
    %153 = vmatprep.subr.mxu0 0.0
    %154 = vmatpush1.msra.mxu0 0.0
    %155 = vmatprep.subr.mxu0 0.0
    %156 = vmatpush1.msra.mxu0 0.0
    %157 = vmatprep.subr.mxu0 0.0
    %158 = vmatpush1.msra.mxu0 0.0
    %159 = vmatprep.subr.mxu0 0.0
    %160 = vmatpush1.msra.mxu0 0.0
    %161 = vmatprep.subr.mxu0 0.0
    %162 = vmatpush1.msra.mxu0 0.0
    %163 = vmatprep.subr.mxu0 0.0
    %164 = vmatpush1.msra.mxu0 0.0
    %165 = vmatprep.subr.mxu0 0.0
    %166 = vmatpush1.msra.mxu0 0.0
    %167 = vmatprep.subr.mxu0 0.0
    %168 = vmatpush1.msra.mxu0 0.0
    %169 = vmatprep.subr.mxu0 0.0
    %170 = vmatpush1.msra.mxu0 0.0
    %171 = vmatprep.mubr.f32.mxu0 0.0
    %172 = vmatmul.mubr.f32.gmra.mrb[0].mxu0 %v84
    %v173 = vpop.f32.mrb[0].mxu0
    %v174 = vadd.f32 0.0, %v173
    %v175 = vpop.f32.mrb[0].mxu0
    %176 = vmatprep.mubr.f32.mxu0 0.0
    %177 = vmatmul.mubr.f32.gmra.mrb[0].mxu0 %v87
    %v178 = vpop.f32.mrb[0].mxu0
    %v179 = vadd.f32 0.0, %v178
    %v180 = vpop.f32.mrb[0].mxu0
    %181 = vmatprep.mubr.f32.mxu0 0.0
    %182 = vmatmul.mubr.f32.gmra.mrb[0].mxu0 %v90
    %v183 = vpop.f32.mrb[0].mxu0
    %v184 = vadd.f32 0.0, %v183
    %v185 = vpop.f32.mrb[0].mxu0
    %186 = vmatprep.mubr.f32.mxu0 0.0
    %187 = vmatmul.mubr.f32.gmra.mrb[0].mxu0 %v93
    %v188 = vpop.f32.mrb[0].mxu0
    %v189 = vadd.f32 0.0, %v188
    %v190 = vpop.f32.mrb[0].mxu0
    %191 = vmatprep.mubr.f32.mxu0 0.0
    %192 = vmatmul.mubr.f32.gmra.mrb[0].mxu0 %v96
    %v193 = vpop.f32.mrb[0].mxu0
    %v194 = vadd.f32 0.0, %v193
    %v195 = vpop.f32.mrb[0].mxu0
    %196 = vmatprep.mubr.f32.mxu0 0.0
    %197 = vmatmul.mubr.f32.gmra.mrb[0].mxu0 %v99
    %v198 = vpop.f32.mrb[0].mxu0
    %v199 = vadd.f32 0.0, %v198
    %v200 = vpop.f32.mrb[0].mxu0
    %201 = vmatprep.mubr.f32.mxu0 0.0
    %202 = vmatmul.mubr.f32.gmra.mrb[0].mxu0 %v102
    %v203 = vpop.f32.mrb[0].mxu0
    %v204 = vadd.f32 0.0, %v203
    %v205 = vpop.f32.mrb[0].mxu0
    %206 = vmatprep.mubr.f32.mxu0 0.0
    %207 = vmatmul.mubr.f32.gmra.mrb[0].mxu0 %v105
    %v208 = vpop.f32.mrb[0].mxu0
    %v209 = vadd.f32 0.0, %v208
    %v210 = vpop.f32.mrb[0].mxu0
    %211 = vdwg.mxu0
    %v213 = vsel %vm82, %v26, 0
    %v216 = vsel %vm82, %v27, 0
    %v219 = vsel %vm82, %v28, 0
    %v222 = vsel %vm82, %v29, 0
    %v225 = vsel %vm82, %v30, 0
    %v228 = vsel %vm82, %v31, 0
    %v231 = vsel %vm82, %v32, 0
    %v234 = vsel %vm82, %v33, 0
    %236 = vmatprep.subr.mxu0 0.0
    %237 = vmatpush1.msra.mxu0 %v58
    %238 = vmatprep.subr.mxu0 0.0
    %239 = vmatpush1.msra.mxu0 %v59
    %240 = vmatprep.subr.mxu0 0.0
    %241 = vmatpush1.msra.mxu0 %v60
    %242 = vmatprep.subr.mxu0 0.0
    %243 = vmatpush1.msra.mxu0 %v61
    %244 = vmatprep.subr.mxu0 0.0
    %245 = vmatpush1.msra.mxu0 %v62
    %246 = vmatprep.subr.mxu0 0.0
    %247 = vmatpush1.msra.mxu0 %v63
    %248 = vmatprep.subr.mxu0 0.0
    %249 = vmatpush1.msra.mxu0 %v64
    %250 = vmatprep.subr.mxu0 0.0
    %251 = vmatpush1.msra.mxu0 %v65
    %252 = vmatprep.subr.mxu0 0.0
    %253 = vmatpush1.msra.mxu0 0.0
    %254 = vmatprep.subr.mxu0 0.0
    %255 = vmatpush1.msra.mxu0 0.0
    %256 = vmatprep.subr.mxu0 0.0
    %257 = vmatpush1.msra.mxu0 0.0
    %258 = vmatprep.subr.mxu0 0.0
    %259 = vmatpush1.msra.mxu0 0.0
    %260 = vmatprep.subr.mxu0 0.0
    %261 = vmatpush1.msra.mxu0 0.0
    %262 = vmatprep.subr.mxu0 0.0
    %263 = vmatpush1.msra.mxu0 0.0
    %264 = vmatprep.subr.mxu0 0.0
    %265 = vmatpush1.msra.mxu0 0.0
    %266 = vmatprep.subr.mxu0 0.0
    %267 = vmatpush1.msra.mxu0 0.0
    %268 = vmatprep.subr.mxu0 0.0
    %269 = vmatpush1.msra.mxu0 0.0
    %270 = vmatprep.subr.mxu0 0.0
    %271 = vmatpush1.msra.mxu0 0.0
    %272 = vmatprep.subr.mxu0 0.0
    %273 = vmatpush1.msra.mxu0 0.0
    %274 = vmatprep.subr.mxu0 0.0
    %275 = vmatpush1.msra.mxu0 0.0
    %276 = vmatprep.subr.mxu0 0.0
    %277 = vmatpush1.msra.mxu0 0.0
    %278 = vmatprep.subr.mxu0 0.0
    %279 = vmatpush1.msra.mxu0 0.0
    %280 = vmatprep.subr.mxu0 0.0
    %281 = vmatpush1.msra.mxu0 0.0
    %282 = vmatprep.subr.mxu0 0.0
    %283 = vmatpush1.msra.mxu0 0.0
    %284 = vmatprep.subr.mxu0 0.0
    %285 = vmatpush1.msra.mxu0 0.0
    %286 = vmatprep.subr.mxu0 0.0
    %287 = vmatpush1.msra.mxu0 0.0
    %288 = vmatprep.subr.mxu0 0.0
    %289 = vmatpush1.msra.mxu0 0.0
    %290 = vmatprep.subr.mxu0 0.0
    %291 = vmatpush1.msra.mxu0 0.0
    %292 = vmatprep.subr.mxu0 0.0
    %293 = vmatpush1.msra.mxu0 0.0
    %294 = vmatprep.subr.mxu0 0.0
    %295 = vmatpush1.msra.mxu0 0.0
    %296 = vmatprep.subr.mxu0 0.0
    %297 = vmatpush1.msra.mxu0 0.0
    %298 = vmatprep.subr.mxu0 0.0
    %299 = vmatpush1.msra.mxu0 0.0
    %300 = vmatprep.mubr.f32.mxu0 0.0
    %301 = vmatmul.mubr.f32.gmra.mrb[0].mxu0 %v213
    %v302 = vpop.f32.mrb[0].mxu0
    %v303 = vadd.f32 0.0, %v302
    %v304 = vpop.f32.mrb[0].mxu0
    %305 = vmatprep.mubr.f32.mxu0 0.0
    %306 = vmatmul.mubr.f32.gmra.mrb[0].mxu0 %v216
    %v307 = vpop.f32.mrb[0].mxu0
    %v308 = vadd.f32 0.0, %v307
    %v309 = vpop.f32.mrb[0].mxu0
    %310 = vmatprep.mubr.f32.mxu0 0.0
    %311 = vmatmul.mubr.f32.gmra.mrb[0].mxu0 %v219
    %v312 = vpop.f32.mrb[0].mxu0
    %v313 = vadd.f32 0.0, %v312
    %v314 = vpop.f32.mrb[0].mxu0
    %315 = vmatprep.mubr.f32.mxu0 0.0
    %316 = vmatmul.mubr.f32.gmra.mrb[0].mxu0 %v222
    %v317 = vpop.f32.mrb[0].mxu0
    %v318 = vadd.f32 0.0, %v317
    %v319 = vpop.f32.mrb[0].mxu0
    %320 = vmatprep.mubr.f32.mxu0 0.0
    %321 = vmatmul.mubr.f32.gmra.mrb[0].mxu0 %v225
    %v322 = vpop.f32.mrb[0].mxu0
    %v323 = vadd.f32 0.0, %v322
    %v324 = vpop.f32.mrb[0].mxu0
    %325 = vmatprep.mubr.f32.mxu0 0.0
    %326 = vmatmul.mubr.f32.gmra.mrb[0].mxu0 %v228
    %v327 = vpop.f32.mrb[0].mxu0
    %v328 = vadd.f32 0.0, %v327
    %v329 = vpop.f32.mrb[0].mxu0
    %330 = vmatprep.mubr.f32.mxu0 0.0
    %331 = vmatmul.mubr.f32.gmra.mrb[0].mxu0 %v231
    %v332 = vpop.f32.mrb[0].mxu0
    %v333 = vadd.f32 0.0, %v332
    %v334 = vpop.f32.mrb[0].mxu0
    %335 = vmatprep.mubr.f32.mxu0 0.0
    %336 = vmatmul.mubr.f32.gmra.mrb[0].mxu0 %v234
    %v337 = vpop.f32.mrb[0].mxu0
    %v338 = vadd.f32 0.0, %v337
    %v339 = vpop.f32.mrb[0].mxu0
    %340 = vdwg.mxu0
    %v342 = vsel %vm82, %v34, 0
    %v345 = vsel %vm82, %v35, 0
    %v348 = vsel %vm82, %v36, 0
    %v351 = vsel %vm82, %v37, 0
    %v354 = vsel %vm82, %v38, 0
    %v357 = vsel %vm82, %v39, 0
    %v360 = vsel %vm82, %v40, 0
    %v363 = vsel %vm82, %v41, 0
    %365 = vmatprep.subr.mxu0 0.0
    %366 = vmatpush1.msra.mxu0 %v66
    %367 = vmatprep.subr.mxu0 0.0
    %368 = vmatpush1.msra.mxu0 %v67
    %369 = vmatprep.subr.mxu0 0.0
    %370 = vmatpush1.msra.mxu0 %v68
    %371 = vmatprep.subr.mxu0 0.0
    %372 = vmatpush1.msra.mxu0 %v69
    %373 = vmatprep.subr.mxu0 0.0
    %374 = vmatpush1.msra.mxu0 %v70
    %375 = vmatprep.subr.mxu0 0.0
    %376 = vmatpush1.msra.mxu0 %v71
    %377 = vmatprep.subr.mxu0 0.0
    %378 = vmatpush1.msra.mxu0 %v72
    %379 = vmatprep.subr.mxu0 0.0
    %380 = vmatpush1.msra.mxu0 %v73
    %381 = vmatprep.subr.mxu0 0.0
    %382 = vmatpush1.msra.mxu0 0.0
    %383 = vmatprep.subr.mxu0 0.0
    %384 = vmatpush1.msra.mxu0 0.0
    %385 = vmatprep.subr.mxu0 0.0
    %386 = vmatpush1.msra.mxu0 0.0
    %387 = vmatprep.subr.mxu0 0.0
    %388 = vmatpush1.msra.mxu0 0.0
    %389 = vmatprep.subr.mxu0 0.0
    %390 = vmatpush1.msra.mxu0 0.0
    %391 = vmatprep.subr.mxu0 0.0
    %392 = vmatpush1.msra.mxu0 0.0
    %393 = vmatprep.subr.mxu0 0.0
    %394 = vmatpush1.msra.mxu0 0.0
    %395 = vmatprep.subr.mxu0 0.0
    %396 = vmatpush1.msra.mxu0 0.0
    %397 = vmatprep.subr.mxu0 0.0
    %398 = vmatpush1.msra.mxu0 0.0
    %399 = vmatprep.subr.mxu0 0.0
    %400 = vmatpush1.msra.mxu0 0.0
    %401 = vmatprep.subr.mxu0 0.0
    %402 = vmatpush1.msra.mxu0 0.0
    %403 = vmatprep.subr.mxu0 0.0
    %404 = vmatpush1.msra.mxu0 0.0
    %405 = vmatprep.subr.mxu0 0.0
    %406 = vmatpush1.msra.mxu0 0.0
    %407 = vmatprep.subr.mxu0 0.0
    %408 = vmatpush1.msra.mxu0 0.0
    %409 = vmatprep.subr.mxu0 0.0
    %410 = vmatpush1.msra.mxu0 0.0
    %411 = vmatprep.subr.mxu0 0.0
    %412 = vmatpush1.msra.mxu0 0.0
    %413 = vmatprep.subr.mxu0 0.0
    %414 = vmatpush1.msra.mxu0 0.0
    %415 = vmatprep.subr.mxu0 0.0
    %416 = vmatpush1.msra.mxu0 0.0
    %417 = vmatprep.subr.mxu0 0.0
    %418 = vmatpush1.msra.mxu0 0.0
    %419 = vmatprep.subr.mxu0 0.0
    %420 = vmatpush1.msra.mxu0 0.0
    %421 = vmatprep.subr.mxu0 0.0
    %422 = vmatpush1.msra.mxu0 0.0
    %423 = vmatprep.subr.mxu0 0.0
    %424 = vmatpush1.msra.mxu0 0.0
    %425 = vmatprep.subr.mxu0 0.0
    %426 = vmatpush1.msra.mxu0 0.0
    %427 = vmatprep.subr.mxu0 0.0
    %428 = vmatpush1.msra.mxu0 0.0
    %429 = vmatprep.mubr.f32.mxu0 0.0
    %430 = vmatmul.mubr.f32.gmra.mrb[0].mxu0 %v342
    %v431 = vpop.f32.mrb[0].mxu0
    %v432 = vadd.f32 0.0, %v431
    %v433 = vpop.f32.mrb[0].mxu0
    %434 = vmatprep.mubr.f32.mxu0 0.0
    %435 = vmatmul.mubr.f32.gmra.mrb[0].mxu0 %v345
    %v436 = vpop.f32.mrb[0].mxu0
    %v437 = vadd.f32 0.0, %v436
    %v438 = vpop.f32.mrb[0].mxu0
    %439 = vmatprep.mubr.f32.mxu0 0.0
    %440 = vmatmul.mubr.f32.gmra.mrb[0].mxu0 %v348
    %v441 = vpop.f32.mrb[0].mxu0
    %v442 = vadd.f32 0.0, %v441
    %v443 = vpop.f32.mrb[0].mxu0
    %444 = vmatprep.mubr.f32.mxu0 0.0
    %445 = vmatmul.mubr.f32.gmra.mrb[0].mxu0 %v351
    %v446 = vpop.f32.mrb[0].mxu0
    %v447 = vadd.f32 0.0, %v446
    %v448 = vpop.f32.mrb[0].mxu0
    %449 = vmatprep.mubr.f32.mxu0 0.0
    %450 = vmatmul.mubr.f32.gmra.mrb[0].mxu0 %v354
    %v451 = vpop.f32.mrb[0].mxu0
    %v452 = vadd.f32 0.0, %v451
    %v453 = vpop.f32.mrb[0].mxu0
    %454 = vmatprep.mubr.f32.mxu0 0.0
    %455 = vmatmul.mubr.f32.gmra.mrb[0].mxu0 %v357
    %v456 = vpop.f32.mrb[0].mxu0
    %v457 = vadd.f32 0.0, %v456
    %v458 = vpop.f32.mrb[0].mxu0
    %459 = vmatprep.mubr.f32.mxu0 0.0
    %460 = vmatmul.mubr.f32.gmra.mrb[0].mxu0 %v360
    %v461 = vpop.f32.mrb[0].mxu0
    %v462 = vadd.f32 0.0, %v461
    %v463 = vpop.f32.mrb[0].mxu0
    %464 = vmatprep.mubr.f32.mxu0 0.0
    %465 = vmatmul.mubr.f32.gmra.mrb[0].mxu0 %v363
    %v466 = vpop.f32.mrb[0].mxu0
    %v467 = vadd.f32 0.0, %v466
    %v468 = vpop.f32.mrb[0].mxu0
    %469 = vdwg.mxu0
    %v471 = vsel %vm82, %v42, 0
    %v474 = vsel %vm82, %v43, 0
    %v477 = vsel %vm82, %v44, 0
    %v480 = vsel %vm82, %v45, 0
    %v483 = vsel %vm82, %v46, 0
    %v486 = vsel %vm82, %v47, 0
    %v489 = vsel %vm82, %v48, 0
    %v492 = vsel %vm82, %v49, 0
    %494 = vmatprep.subr.mxu0 0.0
    %495 = vmatpush1.msra.mxu0 %v74
    %496 = vmatprep.subr.mxu0 0.0
    %497 = vmatpush1.msra.mxu0 %v75
    %498 = vmatprep.subr.mxu0 0.0
    %499 = vmatpush1.msra.mxu0 %v76
    %500 = vmatprep.subr.mxu0 0.0
    %501 = vmatpush1.msra.mxu0 %v77
    %502 = vmatprep.subr.mxu0 0.0
    %503 = vmatpush1.msra.mxu0 %v78
    %504 = vmatprep.subr.mxu0 0.0
    %505 = vmatpush1.msra.mxu0 %v79
    %506 = vmatprep.subr.mxu0 0.0
    %507 = vmatpush1.msra.mxu0 %v80
    %508 = vmatprep.subr.mxu0 0.0
    %509 = vmatpush1.msra.mxu0 %v81
    %510 = vmatprep.subr.mxu0 0.0
    %511 = vmatpush1.msra.mxu0 0.0
    %512 = vmatprep.subr.mxu0 0.0
    %513 = vmatpush1.msra.mxu0 0.0
    %514 = vmatprep.subr.mxu0 0.0
    %515 = vmatpush1.msra.mxu0 0.0
    %516 = vmatprep.subr.mxu0 0.0
    %517 = vmatpush1.msra.mxu0 0.0
    %518 = vmatprep.subr.mxu0 0.0
    %519 = vmatpush1.msra.mxu0 0.0
    %520 = vmatprep.subr.mxu0 0.0
    %521 = vmatpush1.msra.mxu0 0.0
    %522 = vmatprep.subr.mxu0 0.0
    %523 = vmatpush1.msra.mxu0 0.0
    %524 = vmatprep.subr.mxu0 0.0
    %525 = vmatpush1.msra.mxu0 0.0
    %526 = vmatprep.subr.mxu0 0.0
    %527 = vmatpush1.msra.mxu0 0.0
    %528 = vmatprep.subr.mxu0 0.0
    %529 = vmatpush1.msra.mxu0 0.0
    %530 = vmatprep.subr.mxu0 0.0
    %531 = vmatpush1.msra.mxu0 0.0
    %532 = vmatprep.subr.mxu0 0.0
    %533 = vmatpush1.msra.mxu0 0.0
    %534 = vmatprep.subr.mxu0 0.0
    %535 = vmatpush1.msra.mxu0 0.0
    %536 = vmatprep.subr.mxu0 0.0
    %537 = vmatpush1.msra.mxu0 0.0
    %538 = vmatprep.subr.mxu0 0.0
    %539 = vmatpush1.msra.mxu0 0.0
    %540 = vmatprep.subr.mxu0 0.0
    %541 = vmatpush1.msra.mxu0 0.0
    %542 = vmatprep.subr.mxu0 0.0
    %543 = vmatpush1.msra.mxu0 0.0
    %544 = vmatprep.subr.mxu0 0.0
    %545 = vmatpush1.msra.mxu0 0.0
    %546 = vmatprep.subr.mxu0 0.0
    %547 = vmatpush1.msra.mxu0 0.0
    %548 = vmatprep.subr.mxu0 0.0
    %549 = vmatpush1.msra.mxu0 0.0
    %550 = vmatprep.subr.mxu0 0.0
    %551 = vmatpush1.msra.mxu0 0.0
    %552 = vmatprep.subr.mxu0 0.0
    %553 = vmatpush1.msra.mxu0 0.0
    %554 = vmatprep.subr.mxu0 0.0
    %555 = vmatpush1.msra.mxu0 0.0
    %556 = vmatprep.subr.mxu0 0.0
    %557 = vmatpush1.msra.mxu0 0.0
    %558 = vmatprep.mubr.f32.mxu0 0.0
    %559 = vmatmul.mubr.f32.gmra.mrb[0].mxu0 %v471
    %v560 = vpop.f32.mrb[0].mxu0
    %v561 = vadd.f32 0.0, %v560
    %v562 = vpop.f32.mrb[0].mxu0
    %563 = vmatprep.mubr.f32.mxu0 0.0
    %564 = vmatmul.mubr.f32.gmra.mrb[0].mxu0 %v474
    %v565 = vpop.f32.mrb[0].mxu0
    %v566 = vadd.f32 0.0, %v565
    %v567 = vpop.f32.mrb[0].mxu0
    %568 = vmatprep.mubr.f32.mxu0 0.0
    %569 = vmatmul.mubr.f32.gmra.mrb[0].mxu0 %v477
    %v570 = vpop.f32.mrb[0].mxu0
    %v571 = vadd.f32 0.0, %v570
    %v572 = vpop.f32.mrb[0].mxu0
    %573 = vmatprep.mubr.f32.mxu0 0.0
    %574 = vmatmul.mubr.f32.gmra.mrb[0].mxu0 %v480
    %v575 = vpop.f32.mrb[0].mxu0
    %v576 = vadd.f32 0.0, %v575
    %v577 = vpop.f32.mrb[0].mxu0
    %578 = vmatprep.mubr.f32.mxu0 0.0
    %579 = vmatmul.mubr.f32.gmra.mrb[0].mxu0 %v483
    %v580 = vpop.f32.mrb[0].mxu0
    %v581 = vadd.f32 0.0, %v580
    %v582 = vpop.f32.mrb[0].mxu0
    %583 = vmatprep.mubr.f32.mxu0 0.0
    %584 = vmatmul.mubr.f32.gmra.mrb[0].mxu0 %v486
    %v585 = vpop.f32.mrb[0].mxu0
    %v586 = vadd.f32 0.0, %v585
    %v587 = vpop.f32.mrb[0].mxu0
    %588 = vmatprep.mubr.f32.mxu0 0.0
    %589 = vmatmul.mubr.f32.gmra.mrb[0].mxu0 %v489
    %v590 = vpop.f32.mrb[0].mxu0
    %v591 = vadd.f32 0.0, %v590
    %v592 = vpop.f32.mrb[0].mxu0
    %593 = vmatprep.mubr.f32.mxu0 0.0
    %594 = vmatmul.mubr.f32.gmra.mrb[0].mxu0 %v492
    %v595 = vpop.f32.mrb[0].mxu0
    %v596 = vadd.f32 0.0, %v595
    %v597 = vpop.f32.mrb[0].mxu0
    %598 = vdwg.mxu0
    %v599 = vld [vmem:[%s2] sm:$0xff]
    %v600 = vld [vmem:[%s2 + $0x8] sm:$0xff]
    %v601 = vld [vmem:[%s2 + $0x10] sm:$0xff]
    %v602 = vld [vmem:[%s2 + $0x18] sm:$0xff]
    %v603 = vld [vmem:[%s2 + $0x20] sm:$0xff]
    %v604 = vld [vmem:[%s2 + $0x28] sm:$0xff]
    %v605 = vld [vmem:[%s2 + $0x30] sm:$0xff]
    %v606 = vld [vmem:[%s2 + $0x38] sm:$0xff]
    %v607 = vadd.f32 %v174, %v599
    %v608 = vadd.f32 %v179, %v600
    %v609 = vadd.f32 %v184, %v601
    %v610 = vadd.f32 %v189, %v602
    %v611 = vadd.f32 %v194, %v603
    %v612 = vadd.f32 %v199, %v604
    %v613 = vadd.f32 %v204, %v605
    %v614 = vadd.f32 %v209, %v606
    %s615 = scalar_lea.vmem %s2, 64
    %v616 = vld [vmem:[%s615] sm:$0xff]
    %v617 = vld [vmem:[%s615 + $0x8] sm:$0xff]
    %v618 = vld [vmem:[%s615 + $0x10] sm:$0xff]
    %v619 = vld [vmem:[%s615 + $0x18] sm:$0xff]
    %v620 = vld [vmem:[%s615 + $0x20] sm:$0xff]
    %v621 = vld [vmem:[%s615 + $0x28] sm:$0xff]
    %v622 = vld [vmem:[%s615 + $0x30] sm:$0xff]
    %v623 = vld [vmem:[%s615 + $0x38] sm:$0xff]
    %v624 = vadd.f32 %v174, %v616
    %v625 = vadd.f32 %v179, %v617
    %v626 = vadd.f32 %v184, %v618
    %v627 = vadd.f32 %v189, %v619
    %v628 = vadd.f32 %v194, %v620
    %v629 = vadd.f32 %v199, %v621
    %v630 = vadd.f32 %v204, %v622
    %v631 = vadd.f32 %v209, %v623
    %s632 = scalar_lea.vmem %s2, 128
    %v633 = vld [vmem:[%s632] sm:$0xff]
    %v634 = vld [vmem:[%s632 + $0x8] sm:$0xff]
    %v635 = vld [vmem:[%s632 + $0x10] sm:$0xff]
    %v636 = vld [vmem:[%s632 + $0x18] sm:$0xff]
    %v637 = vld [vmem:[%s632 + $0x20] sm:$0xff]
    %v638 = vld [vmem:[%s632 + $0x28] sm:$0xff]
    %v639 = vld [vmem:[%s632 + $0x30] sm:$0xff]
    %v640 = vld [vmem:[%s632 + $0x38] sm:$0xff]
    %v641 = vadd.f32 %v303, %v633
    %v642 = vadd.f32 %v308, %v634
    %v643 = vadd.f32 %v313, %v635
    %v644 = vadd.f32 %v318, %v636
    %v645 = vadd.f32 %v323, %v637
    %v646 = vadd.f32 %v328, %v638
    %v647 = vadd.f32 %v333, %v639
    %v648 = vadd.f32 %v338, %v640
    %s649 = scalar_lea.vmem %s2, 192
    %v650 = vld [vmem:[%s649] sm:$0xff]
    %v651 = vld [vmem:[%s649 + $0x8] sm:$0xff]
    %v652 = vld [vmem:[%s649 + $0x10] sm:$0xff]
    %v653 = vld [vmem:[%s649 + $0x18] sm:$0xff]
    %v654 = vld [vmem:[%s649 + $0x20] sm:$0xff]
    %v655 = vld [vmem:[%s649 + $0x28] sm:$0xff]
    %v656 = vld [vmem:[%s649 + $0x30] sm:$0xff]
    %v657 = vld [vmem:[%s649 + $0x38] sm:$0xff]
    %v658 = vadd.f32 %v432, %v650
    %v659 = vadd.f32 %v437, %v651
    %v660 = vadd.f32 %v442, %v652
    %v661 = vadd.f32 %v447, %v653
    %v662 = vadd.f32 %v452, %v654
    %v663 = vadd.f32 %v457, %v655
    %v664 = vadd.f32 %v462, %v656
    %v665 = vadd.f32 %v467, %v657
    %674 = vrot.lane.b32.xlu0 %v607, 120
    %v675 = vpop.permute.xlu0 %674
    %676 = vrot.lane.b32.xlu0 %v608, 120
    %v677 = vpop.permute.xlu0 %676
    %678 = vrot.lane.b32.xlu0 %v609, 120
    %v679 = vpop.permute.xlu0 %678
    %680 = vrot.lane.b32.xlu0 %v610, 120
    %v681 = vpop.permute.xlu0 %680
    %682 = vrot.lane.b32.xlu0 %v611, 120
    %v683 = vpop.permute.xlu0 %682
    %684 = vrot.lane.b32.xlu0 %v612, 120
    %v685 = vpop.permute.xlu0 %684
    %686 = vrot.lane.b32.xlu0 %v613, 120
    %v687 = vpop.permute.xlu0 %686
    %688 = vrot.lane.b32.xlu0 %v614, 120
    %v689 = vpop.permute.xlu0 %688
    %698 = vrot.lane.b32.xlu0 %v624, 120
    %v699 = vpop.permute.xlu0 %698
    %700 = vrot.lane.b32.xlu0 %v625, 120
    %v701 = vpop.permute.xlu0 %700
    %702 = vrot.lane.b32.xlu0 %v626, 120
    %v703 = vpop.permute.xlu0 %702
    %704 = vrot.lane.b32.xlu0 %v627, 120
    %v705 = vpop.permute.xlu0 %704
    %706 = vrot.lane.b32.xlu0 %v628, 120
    %v707 = vpop.permute.xlu0 %706
    %708 = vrot.lane.b32.xlu0 %v629, 120
    %v709 = vpop.permute.xlu0 %708
    %710 = vrot.lane.b32.xlu0 %v630, 120
    %v711 = vpop.permute.xlu0 %710
    %712 = vrot.lane.b32.xlu0 %v631, 120
    %v713 = vpop.permute.xlu0 %712
    %722 = vrot.lane.b32.xlu0 %v641, 120
    %v723 = vpop.permute.xlu0 %722
    %724 = vrot.lane.b32.xlu0 %v642, 120
    %v725 = vpop.permute.xlu0 %724
    %726 = vrot.lane.b32.xlu0 %v643, 120
    %v727 = vpop.permute.xlu0 %726
    %728 = vrot.lane.b32.xlu0 %v644, 120
    %v729 = vpop.permute.xlu0 %728
    %730 = vrot.lane.b32.xlu0 %v645, 120
    %v731 = vpop.permute.xlu0 %730
    %732 = vrot.lane.b32.xlu0 %v646, 120
    %v733 = vpop.permute.xlu0 %732
    %734 = vrot.lane.b32.xlu0 %v647, 120
    %v735 = vpop.permute.xlu0 %734
    %736 = vrot.lane.b32.xlu0 %v648, 120
    %v737 = vpop.permute.xlu0 %736
    %746 = vrot.lane.b32.xlu0 %v658, 120
    %v747 = vpop.permute.xlu0 %746
    %748 = vrot.lane.b32.xlu0 %v659, 120
    %v749 = vpop.permute.xlu0 %748
    %750 = vrot.lane.b32.xlu0 %v660, 120
    %v751 = vpop.permute.xlu0 %750
    %752 = vrot.lane.b32.xlu0 %v661, 120
    %v753 = vpop.permute.xlu0 %752
    %754 = vrot.lane.b32.xlu0 %v662, 120
    %v755 = vpop.permute.xlu0 %754
    %756 = vrot.lane.b32.xlu0 %v663, 120
    %v757 = vpop.permute.xlu0 %756
    %758 = vrot.lane.b32.xlu0 %v664, 120
    %v759 = vpop.permute.xlu0 %758
    %760 = vrot.lane.b32.xlu0 %v665, 120
    %v761 = vpop.permute.xlu0 %760
    %770 = vrot.lane.b32.xlu0 %v561, 120
    %v771 = vpop.permute.xlu0 %770
    %772 = vrot.lane.b32.xlu0 %v566, 120
    %v773 = vpop.permute.xlu0 %772
    %774 = vrot.lane.b32.xlu0 %v571, 120
    %v775 = vpop.permute.xlu0 %774
    %776 = vrot.lane.b32.xlu0 %v576, 120
    %v777 = vpop.permute.xlu0 %776
    %778 = vrot.lane.b32.xlu0 %v581, 120
    %v779 = vpop.permute.xlu0 %778
    %780 = vrot.lane.b32.xlu0 %v586, 120
    %v781 = vpop.permute.xlu0 %780
    %782 = vrot.lane.b32.xlu0 %v591, 120
    %v783 = vpop.permute.xlu0 %782
    %784 = vrot.lane.b32.xlu0 %v596, 120
    %v785 = vpop.permute.xlu0 %784
    %vm786 = vcmask 64512
    %v787 = vsel %vm786, %v607, 0
    %v789 = vsel %vm786, %v641, 0
    %791 = vmatprep.subr.mxu0 0.0
    %792 = vmatpush1.xpose.msra.mxu0 %v789
    %793 = vmatprep.subr.mxu0 0.0
    %794 = vmatpush1.xpose.msra.mxu0 0.0
    %795 = vmatprep.subr.mxu0 0.0
    %796 = vmatpush1.xpose.msra.mxu0 0.0
    %797 = vmatprep.subr.mxu0 0.0
    %798 = vmatpush1.xpose.msra.mxu0 0.0
    %799 = vmatprep.subr.mxu0 0.0
    %800 = vmatpush1.xpose.msra.mxu0 0.0
    %801 = vmatprep.subr.mxu0 0.0
    %802 = vmatpush1.xpose.msra.mxu0 0.0
    %803 = vmatprep.subr.mxu0 0.0
    %804 = vmatpush1.xpose.msra.mxu0 0.0
    %805 = vmatprep.subr.mxu0 0.0
    %806 = vmatpush1.xpose.msra.mxu0 0.0
    %807 = vmatprep.subr.mxu0 0.0
    %808 = vmatpush1.xpose.msra.mxu0 0.0
    %809 = vmatprep.subr.mxu0 0.0
    %810 = vmatpush1.xpose.msra.mxu0 0.0
    %811 = vmatprep.subr.mxu0 0.0
    %812 = vmatpush1.xpose.msra.mxu0 0.0
    %813 = vmatprep.subr.mxu0 0.0
    %814 = vmatpush1.xpose.msra.mxu0 0.0
    %815 = vmatprep.subr.mxu0 0.0
    %816 = vmatpush1.xpose.msra.mxu0 0.0
    %817 = vmatprep.subr.mxu0 0.0
    %818 = vmatpush1.xpose.msra.mxu0 0.0
    %819 = vmatprep.subr.mxu0 0.0
    %820 = vmatpush1.xpose.msra.mxu0 0.0
    %821 = vmatprep.subr.mxu0 0.0
    %822 = vmatpush1.xpose.msra.mxu0 0.0
    %823 = vmatprep.subr.mxu0 0.0
    %824 = vmatpush1.xpose.msra.mxu0 0.0
    %825 = vmatprep.subr.mxu0 0.0
    %826 = vmatpush1.xpose.msra.mxu0 0.0
    %827 = vmatprep.subr.mxu0 0.0
    %828 = vmatpush1.xpose.msra.mxu0 0.0
    %829 = vmatprep.subr.mxu0 0.0
    %830 = vmatpush1.xpose.msra.mxu0 0.0
    %831 = vmatprep.subr.mxu0 0.0
    %832 = vmatpush1.xpose.msra.mxu0 0.0
    %833 = vmatprep.subr.mxu0 0.0
    %834 = vmatpush1.xpose.msra.mxu0 0.0
    %835 = vmatprep.subr.mxu0 0.0
    %836 = vmatpush1.xpose.msra.mxu0 0.0
    %837 = vmatprep.subr.mxu0 0.0
    %838 = vmatpush1.xpose.msra.mxu0 0.0
    %839 = vmatprep.subr.mxu0 0.0
    %840 = vmatpush1.xpose.msra.mxu0 0.0
    %841 = vmatprep.subr.mxu0 0.0
    %842 = vmatpush1.xpose.msra.mxu0 0.0
    %843 = vmatprep.subr.mxu0 0.0
    %844 = vmatpush1.xpose.msra.mxu0 0.0
    %845 = vmatprep.subr.mxu0 0.0
    %846 = vmatpush1.xpose.msra.mxu0 0.0
    %847 = vmatprep.subr.mxu0 0.0
    %848 = vmatpush1.xpose.msra.mxu0 0.0
    %849 = vmatprep.subr.mxu0 0.0
    %850 = vmatpush1.xpose.msra.mxu0 0.0
    %851 = vmatprep.subr.mxu0 0.0
    %852 = vmatpush1.xpose.msra.mxu0 0.0
    %853 = vmatprep.subr.mxu0 0.0
    %854 = vmatpush1.xpose.msra.mxu0 0.0
    %855 = vmatprep.mubr.f32.mxu0 0.0
    %856 = vmatmul.mubr.f32.gmra.mrb[0].mxu0 %v787
    %v857 = vpop.f32.mrb[0].mxu0
    %v858 = vadd.f32 0.0, %v857
    %v859 = vpop.f32.mrb[0].mxu0
    %860 = vdwg.mxu0
    %v861 = vsel %vm786, %v608, 0
    %v863 = vsel %vm786, %v642, 0
    %865 = vmatprep.subr.mxu0 0.0
    %866 = vmatpush1.xpose.msra.mxu0 %v863
    %867 = vmatprep.subr.mxu0 0.0
    %868 = vmatpush1.xpose.msra.mxu0 0.0
    %869 = vmatprep.subr.mxu0 0.0
    %870 = vmatpush1.xpose.msra.mxu0 0.0
    %871 = vmatprep.subr.mxu0 0.0
    %872 = vmatpush1.xpose.msra.mxu0 0.0
    %873 = vmatprep.subr.mxu0 0.0
    %874 = vmatpush1.xpose.msra.mxu0 0.0
    %875 = vmatprep.subr.mxu0 0.0
    %876 = vmatpush1.xpose.msra.mxu0 0.0
    %877 = vmatprep.subr.mxu0 0.0
    %878 = vmatpush1.xpose.msra.mxu0 0.0
    %879 = vmatprep.subr.mxu0 0.0
    %880 = vmatpush1.xpose.msra.mxu0 0.0
    %881 = vmatprep.subr.mxu0 0.0
    %882 = vmatpush1.xpose.msra.mxu0 0.0
    %883 = vmatprep.subr.mxu0 0.0
    %884 = vmatpush1.xpose.msra.mxu0 0.0
    %885 = vmatprep.subr.mxu0 0.0
    %886 = vmatpush1.xpose.msra.mxu0 0.0
    %887 = vmatprep.subr.mxu0 0.0
    %888 = vmatpush1.xpose.msra.mxu0 0.0
    %889 = vmatprep.subr.mxu0 0.0
    %890 = vmatpush1.xpose.msra.mxu0 0.0
    %891 = vmatprep.subr.mxu0 0.0
    %892 = vmatpush1.xpose.msra.mxu0 0.0
    %893 = vmatprep.subr.mxu0 0.0
    %894 = vmatpush1.xpose.msra.mxu0 0.0
    %895 = vmatprep.subr.mxu0 0.0
    %896 = vmatpush1.xpose.msra.mxu0 0.0
    %897 = vmatprep.subr.mxu0 0.0
    %898 = vmatpush1.xpose.msra.mxu0 0.0
    %899 = vmatprep.subr.mxu0 0.0
    %900 = vmatpush1.xpose.msra.mxu0 0.0
    %901 = vmatprep.subr.mxu0 0.0
    %902 = vmatpush1.xpose.msra.mxu0 0.0
    %903 = vmatprep.subr.mxu0 0.0
    %904 = vmatpush1.xpose.msra.mxu0 0.0
    %905 = vmatprep.subr.mxu0 0.0
    %906 = vmatpush1.xpose.msra.mxu0 0.0
    %907 = vmatprep.subr.mxu0 0.0
    %908 = vmatpush1.xpose.msra.mxu0 0.0
    %909 = vmatprep.subr.mxu0 0.0
    %910 = vmatpush1.xpose.msra.mxu0 0.0
    %911 = vmatprep.subr.mxu0 0.0
    %912 = vmatpush1.xpose.msra.mxu0 0.0
    %913 = vmatprep.subr.mxu0 0.0
    %914 = vmatpush1.xpose.msra.mxu0 0.0
    %915 = vmatprep.subr.mxu0 0.0
    %916 = vmatpush1.xpose.msra.mxu0 0.0
    %917 = vmatprep.subr.mxu0 0.0
    %918 = vmatpush1.xpose.msra.mxu0 0.0
    %919 = vmatprep.subr.mxu0 0.0
    %920 = vmatpush1.xpose.msra.mxu0 0.0
    %921 = vmatprep.subr.mxu0 0.0
    %922 = vmatpush1.xpose.msra.mxu0 0.0
    %923 = vmatprep.subr.mxu0 0.0
    %924 = vmatpush1.xpose.msra.mxu0 0.0
    %925 = vmatprep.subr.mxu0 0.0
    %926 = vmatpush1.xpose.msra.mxu0 0.0
    %927 = vmatprep.subr.mxu0 0.0
    %928 = vmatpush1.xpose.msra.mxu0 0.0
    %929 = vmatprep.mubr.f32.mxu0 0.0
    %930 = vmatmul.mubr.f32.gmra.mrb[0].mxu0 %v861
    %v931 = vpop.f32.mrb[0].mxu0
    %v932 = vadd.f32 0.0, %v931
    %v933 = vpop.f32.mrb[0].mxu0
    %934 = vdwg.mxu0
    %v935 = vsel %vm786, %v609, 0
    %v937 = vsel %vm786, %v643, 0
    %939 = vmatprep.subr.mxu0 0.0
    %940 = vmatpush1.xpose.msra.mxu0 %v937
    %941 = vmatprep.subr.mxu0 0.0
    %942 = vmatpush1.xpose.msra.mxu0 0.0
    %943 = vmatprep.subr.mxu0 0.0
    %944 = vmatpush1.xpose.msra.mxu0 0.0
    %945 = vmatprep.subr.mxu0 0.0
    %946 = vmatpush1.xpose.msra.mxu0 0.0
    %947 = vmatprep.subr.mxu0 0.0
    %948 = vmatpush1.xpose.msra.mxu0 0.0
    %949 = vmatprep.subr.mxu0 0.0
    %950 = vmatpush1.xpose.msra.mxu0 0.0
    %951 = vmatprep.subr.mxu0 0.0
    %952 = vmatpush1.xpose.msra.mxu0 0.0
    %953 = vmatprep.subr.mxu0 0.0
    %954 = vmatpush1.xpose.msra.mxu0 0.0
    %955 = vmatprep.subr.mxu0 0.0
    %956 = vmatpush1.xpose.msra.mxu0 0.0
    %957 = vmatprep.subr.mxu0 0.0
    %958 = vmatpush1.xpose.msra.mxu0 0.0
    %959 = vmatprep.subr.mxu0 0.0
    %960 = vmatpush1.xpose.msra.mxu0 0.0
    %961 = vmatprep.subr.mxu0 0.0
    %962 = vmatpush1.xpose.msra.mxu0 0.0
    %963 = vmatprep.subr.mxu0 0.0
    %964 = vmatpush1.xpose.msra.mxu0 0.0
    %965 = vmatprep.subr.mxu0 0.0
    %966 = vmatpush1.xpose.msra.mxu0 0.0
    %967 = vmatprep.subr.mxu0 0.0
    %968 = vmatpush1.xpose.msra.mxu0 0.0
    %969 = vmatprep.subr.mxu0 0.0
    %970 = vmatpush1.xpose.msra.mxu0 0.0
    %971 = vmatprep.subr.mxu0 0.0
    %972 = vmatpush1.xpose.msra.mxu0 0.0
    %973 = vmatprep.subr.mxu0 0.0
    %974 = vmatpush1.xpose.msra.mxu0 0.0
    %975 = vmatprep.subr.mxu0 0.0
    %976 = vmatpush1.xpose.msra.mxu0 0.0
    %977 = vmatprep.subr.mxu0 0.0
    %978 = vmatpush1.xpose.msra.mxu0 0.0
    %979 = vmatprep.subr.mxu0 0.0
    %980 = vmatpush1.xpose.msra.mxu0 0.0
    %981 = vmatprep.subr.mxu0 0.0
    %982 = vmatpush1.xpose.msra.mxu0 0.0
    %983 = vmatprep.subr.mxu0 0.0
    %984 = vmatpush1.xpose.msra.mxu0 0.0
    %985 = vmatprep.subr.mxu0 0.0
    %986 = vmatpush1.xpose.msra.mxu0 0.0
    %987 = vmatprep.subr.mxu0 0.0
    %988 = vmatpush1.xpose.msra.mxu0 0.0
    %989 = vmatprep.subr.mxu0 0.0
    %990 = vmatpush1.xpose.msra.mxu0 0.0
    %991 = vmatprep.subr.mxu0 0.0
    %992 = vmatpush1.xpose.msra.mxu0 0.0
    %993 = vmatprep.subr.mxu0 0.0
    %994 = vmatpush1.xpose.msra.mxu0 0.0
    %995 = vmatprep.subr.mxu0 0.0
    %996 = vmatpush1.xpose.msra.mxu0 0.0
    %997 = vmatprep.subr.mxu0 0.0
    %998 = vmatpush1.xpose.msra.mxu0 0.0
    %999 = vmatprep.subr.mxu0 0.0
    %1000 = vmatpush1.xpose.msra.mxu0 0.0
    %1001 = vmatprep.subr.mxu0 0.0
    %1002 = vmatpush1.xpose.msra.mxu0 0.0
    %1003 = vmatprep.mubr.f32.mxu0 0.0
    %1004 = vmatmul.mubr.f32.gmra.mrb[0].mxu0 %v935
    %v1005 = vpop.f32.mrb[0].mxu0
    %v1006 = vadd.f32 0.0, %v1005
    %v1007 = vpop.f32.mrb[0].mxu0
    %1008 = vdwg.mxu0
    %v1009 = vsel %vm786, %v610, 0
    %v1011 = vsel %vm786, %v644, 0
    %1013 = vmatprep.subr.mxu0 0.0
    %1014 = vmatpush1.xpose.msra.mxu0 %v1011
    %1015 = vmatprep.subr.mxu0 0.0
    %1016 = vmatpush1.xpose.msra.mxu0 0.0
    %1017 = vmatprep.subr.mxu0 0.0
    %1018 = vmatpush1.xpose.msra.mxu0 0.0
    %1019 = vmatprep.subr.mxu0 0.0
    %1020 = vmatpush1.xpose.msra.mxu0 0.0
    %1021 = vmatprep.subr.mxu0 0.0
    %1022 = vmatpush1.xpose.msra.mxu0 0.0
    %1023 = vmatprep.subr.mxu0 0.0
    %1024 = vmatpush1.xpose.msra.mxu0 0.0
    %1025 = vmatprep.subr.mxu0 0.0
    %1026 = vmatpush1.xpose.msra.mxu0 0.0
    %1027 = vmatprep.subr.mxu0 0.0
    %1028 = vmatpush1.xpose.msra.mxu0 0.0
    %1029 = vmatprep.subr.mxu0 0.0
    %1030 = vmatpush1.xpose.msra.mxu0 0.0
    %1031 = vmatprep.subr.mxu0 0.0
    %1032 = vmatpush1.xpose.msra.mxu0 0.0
    %1033 = vmatprep.subr.mxu0 0.0
    %1034 = vmatpush1.xpose.msra.mxu0 0.0
    %1035 = vmatprep.subr.mxu0 0.0
    %1036 = vmatpush1.xpose.msra.mxu0 0.0
    %1037 = vmatprep.subr.mxu0 0.0
    %1038 = vmatpush1.xpose.msra.mxu0 0.0
    %1039 = vmatprep.subr.mxu0 0.0
    %1040 = vmatpush1.xpose.msra.mxu0 0.0
    %1041 = vmatprep.subr.mxu0 0.0
    %1042 = vmatpush1.xpose.msra.mxu0 0.0
    %1043 = vmatprep.subr.mxu0 0.0
    %1044 = vmatpush1.xpose.msra.mxu0 0.0
    %1045 = vmatprep.subr.mxu0 0.0
    %1046 = vmatpush1.xpose.msra.mxu0 0.0
    %1047 = vmatprep.subr.mxu0 0.0
    %1048 = vmatpush1.xpose.msra.mxu0 0.0
    %1049 = vmatprep.subr.mxu0 0.0
    %1050 = vmatpush1.xpose.msra.mxu0 0.0
    %1051 = vmatprep.subr.mxu0 0.0
    %1052 = vmatpush1.xpose.msra.mxu0 0.0
    %1053 = vmatprep.subr.mxu0 0.0
    %1054 = vmatpush1.xpose.msra.mxu0 0.0
    %1055 = vmatprep.subr.mxu0 0.0
    %1056 = vmatpush1.xpose.msra.mxu0 0.0
    %1057 = vmatprep.subr.mxu0 0.0
    %1058 = vmatpush1.xpose.msra.mxu0 0.0
    %1059 = vmatprep.subr.mxu0 0.0
    %1060 = vmatpush1.xpose.msra.mxu0 0.0
    %1061 = vmatprep.subr.mxu0 0.0
    %1062 = vmatpush1.xpose.msra.mxu0 0.0
    %1063 = vmatprep.subr.mxu0 0.0
    %1064 = vmatpush1.xpose.msra.mxu0 0.0
    %1065 = vmatprep.subr.mxu0 0.0
    %1066 = vmatpush1.xpose.msra.mxu0 0.0
    %1067 = vmatprep.subr.mxu0 0.0
    %1068 = vmatpush1.xpose.msra.mxu0 0.0
    %1069 = vmatprep.subr.mxu0 0.0
    %1070 = vmatpush1.xpose.msra.mxu0 0.0
    %1071 = vmatprep.subr.mxu0 0.0
    %1072 = vmatpush1.xpose.msra.mxu0 0.0
    %1073 = vmatprep.subr.mxu0 0.0
    %1074 = vmatpush1.xpose.msra.mxu0 0.0
    %1075 = vmatprep.subr.mxu0 0.0
    %1076 = vmatpush1.xpose.msra.mxu0 0.0
    %1077 = vmatprep.mubr.f32.mxu0 0.0
    %1078 = vmatmul.mubr.f32.gmra.mrb[0].mxu0 %v1009
    %v1079 = vpop.f32.mrb[0].mxu0
    %v1080 = vadd.f32 0.0, %v1079
    %v1081 = vpop.f32.mrb[0].mxu0
    %1082 = vdwg.mxu0
    %v1083 = vsel %vm786, %v611, 0
    %v1085 = vsel %vm786, %v645, 0
    %1087 = vmatprep.subr.mxu0 0.0
    %1088 = vmatpush1.xpose.msra.mxu0 %v1085
    %1089 = vmatprep.subr.mxu0 0.0
    %1090 = vmatpush1.xpose.msra.mxu0 0.0
    %1091 = vmatprep.subr.mxu0 0.0
    %1092 = vmatpush1.xpose.msra.mxu0 0.0
    %1093 = vmatprep.subr.mxu0 0.0
    %1094 = vmatpush1.xpose.msra.mxu0 0.0
    %1095 = vmatprep.subr.mxu0 0.0
    %1096 = vmatpush1.xpose.msra.mxu0 0.0
    %1097 = vmatprep.subr.mxu0 0.0
    %1098 = vmatpush1.xpose.msra.mxu0 0.0
    %1099 = vmatprep.subr.mxu0 0.0
    %1100 = vmatpush1.xpose.msra.mxu0 0.0
    %1101 = vmatprep.subr.mxu0 0.0
    %1102 = vmatpush1.xpose.msra.mxu0 0.0
    %1103 = vmatprep.subr.mxu0 0.0
    %1104 = vmatpush1.xpose.msra.mxu0 0.0
    %1105 = vmatprep.subr.mxu0 0.0
    %1106 = vmatpush1.xpose.msra.mxu0 0.0
    %1107 = vmatprep.subr.mxu0 0.0
    %1108 = vmatpush1.xpose.msra.mxu0 0.0
    %1109 = vmatprep.subr.mxu0 0.0
    %1110 = vmatpush1.xpose.msra.mxu0 0.0
    %1111 = vmatprep.subr.mxu0 0.0
    %1112 = vmatpush1.xpose.msra.mxu0 0.0
    %1113 = vmatprep.subr.mxu0 0.0
    %1114 = vmatpush1.xpose.msra.mxu0 0.0
    %1115 = vmatprep.subr.mxu0 0.0
    %1116 = vmatpush1.xpose.msra.mxu0 0.0
    %1117 = vmatprep.subr.mxu0 0.0
    %1118 = vmatpush1.xpose.msra.mxu0 0.0
    %1119 = vmatprep.subr.mxu0 0.0
    %1120 = vmatpush1.xpose.msra.mxu0 0.0
    %1121 = vmatprep.subr.mxu0 0.0
    %1122 = vmatpush1.xpose.msra.mxu0 0.0
    %1123 = vmatprep.subr.mxu0 0.0
    %1124 = vmatpush1.xpose.msra.mxu0 0.0
    %1125 = vmatprep.subr.mxu0 0.0
    %1126 = vmatpush1.xpose.msra.mxu0 0.0
    %1127 = vmatprep.subr.mxu0 0.0
    %1128 = vmatpush1.xpose.msra.mxu0 0.0
    %1129 = vmatprep.subr.mxu0 0.0
    %1130 = vmatpush1.xpose.msra.mxu0 0.0
    %1131 = vmatprep.subr.mxu0 0.0
    %1132 = vmatpush1.xpose.msra.mxu0 0.0
    %1133 = vmatprep.subr.mxu0 0.0
    %1134 = vmatpush1.xpose.msra.mxu0 0.0
    %1135 = vmatprep.subr.mxu0 0.0
    %1136 = vmatpush1.xpose.msra.mxu0 0.0
    %1137 = vmatprep.subr.mxu0 0.0
    %1138 = vmatpush1.xpose.msra.mxu0 0.0
    %1139 = vmatprep.subr.mxu0 0.0
    %1140 = vmatpush1.xpose.msra.mxu0 0.0
    %1141 = vmatprep.subr.mxu0 0.0
    %1142 = vmatpush1.xpose.msra.mxu0 0.0
    %1143 = vmatprep.subr.mxu0 0.0
    %1144 = vmatpush1.xpose.msra.mxu0 0.0
    %1145 = vmatprep.subr.mxu0 0.0
    %1146 = vmatpush1.xpose.msra.mxu0 0.0
    %1147 = vmatprep.subr.mxu0 0.0
    %1148 = vmatpush1.xpose.msra.mxu0 0.0
    %1149 = vmatprep.subr.mxu0 0.0
    %1150 = vmatpush1.xpose.msra.mxu0 0.0
    %1151 = vmatprep.mubr.f32.mxu0 0.0
    %1152 = vmatmul.mubr.f32.gmra.mrb[0].mxu0 %v1083
    %v1153 = vpop.f32.mrb[0].mxu0
    %v1154 = vadd.f32 0.0, %v1153
    %v1155 = vpop.f32.mrb[0].mxu0
    %1156 = vdwg.mxu0
    %v1157 = vsel %vm786, %v612, 0
    %v1159 = vsel %vm786, %v646, 0
    %1161 = vmatprep.subr.mxu0 0.0
    %1162 = vmatpush1.xpose.msra.mxu0 %v1159
    %1163 = vmatprep.subr.mxu0 0.0
    %1164 = vmatpush1.xpose.msra.mxu0 0.0
    %1165 = vmatprep.subr.mxu0 0.0
    %1166 = vmatpush1.xpose.msra.mxu0 0.0
    %1167 = vmatprep.subr.mxu0 0.0
    %1168 = vmatpush1.xpose.msra.mxu0 0.0
    %1169 = vmatprep.subr.mxu0 0.0
    %1170 = vmatpush1.xpose.msra.mxu0 0.0
    %1171 = vmatprep.subr.mxu0 0.0
    %1172 = vmatpush1.xpose.msra.mxu0 0.0
    %1173 = vmatprep.subr.mxu0 0.0
    %1174 = vmatpush1.xpose.msra.mxu0 0.0
    %1175 = vmatprep.subr.mxu0 0.0
    %1176 = vmatpush1.xpose.msra.mxu0 0.0
    %1177 = vmatprep.subr.mxu0 0.0
    %1178 = vmatpush1.xpose.msra.mxu0 0.0
    %1179 = vmatprep.subr.mxu0 0.0
    %1180 = vmatpush1.xpose.msra.mxu0 0.0
    %1181 = vmatprep.subr.mxu0 0.0
    %1182 = vmatpush1.xpose.msra.mxu0 0.0
    %1183 = vmatprep.subr.mxu0 0.0
    %1184 = vmatpush1.xpose.msra.mxu0 0.0
    %1185 = vmatprep.subr.mxu0 0.0
    %1186 = vmatpush1.xpose.msra.mxu0 0.0
    %1187 = vmatprep.subr.mxu0 0.0
    %1188 = vmatpush1.xpose.msra.mxu0 0.0
    %1189 = vmatprep.subr.mxu0 0.0
    %1190 = vmatpush1.xpose.msra.mxu0 0.0
    %1191 = vmatprep.subr.mxu0 0.0
    %1192 = vmatpush1.xpose.msra.mxu0 0.0
    %1193 = vmatprep.subr.mxu0 0.0
    %1194 = vmatpush1.xpose.msra.mxu0 0.0
    %1195 = vmatprep.subr.mxu0 0.0
    %1196 = vmatpush1.xpose.msra.mxu0 0.0
    %1197 = vmatprep.subr.mxu0 0.0
    %1198 = vmatpush1.xpose.msra.mxu0 0.0
    %1199 = vmatprep.subr.mxu0 0.0
    %1200 = vmatpush1.xpose.msra.mxu0 0.0
    %1201 = vmatprep.subr.mxu0 0.0
    %1202 = vmatpush1.xpose.msra.mxu0 0.0
    %1203 = vmatprep.subr.mxu0 0.0
    %1204 = vmatpush1.xpose.msra.mxu0 0.0
    %1205 = vmatprep.subr.mxu0 0.0
    %1206 = vmatpush1.xpose.msra.mxu0 0.0
    %1207 = vmatprep.subr.mxu0 0.0
    %1208 = vmatpush1.xpose.msra.mxu0 0.0
    %1209 = vmatprep.subr.mxu0 0.0
    %1210 = vmatpush1.xpose.msra.mxu0 0.0
    %1211 = vmatprep.subr.mxu0 0.0
    %1212 = vmatpush1.xpose.msra.mxu0 0.0
    %1213 = vmatprep.subr.mxu0 0.0
    %1214 = vmatpush1.xpose.msra.mxu0 0.0
    %1215 = vmatprep.subr.mxu0 0.0
    %1216 = vmatpush1.xpose.msra.mxu0 0.0
    %1217 = vmatprep.subr.mxu0 0.0
    %1218 = vmatpush1.xpose.msra.mxu0 0.0
    %1219 = vmatprep.subr.mxu0 0.0
    %1220 = vmatpush1.xpose.msra.mxu0 0.0
    %1221 = vmatprep.subr.mxu0 0.0
    %1222 = vmatpush1.xpose.msra.mxu0 0.0
    %1223 = vmatprep.subr.mxu0 0.0
    %1224 = vmatpush1.xpose.msra.mxu0 0.0
    %1225 = vmatprep.mubr.f32.mxu0 0.0
    %1226 = vmatmul.mubr.f32.gmra.mrb[0].mxu0 %v1157
    %v1227 = vpop.f32.mrb[0].mxu0
    %v1228 = vadd.f32 0.0, %v1227
    %v1229 = vpop.f32.mrb[0].mxu0
    %1230 = vdwg.mxu0
    %v1231 = vsel %vm786, %v613, 0
    %v1233 = vsel %vm786, %v647, 0
    %1235 = vmatprep.subr.mxu0 0.0
    %1236 = vmatpush1.xpose.msra.mxu0 %v1233
    %1237 = vmatprep.subr.mxu0 0.0
    %1238 = vmatpush1.xpose.msra.mxu0 0.0
    %1239 = vmatprep.subr.mxu0 0.0
    %1240 = vmatpush1.xpose.msra.mxu0 0.0
    %1241 = vmatprep.subr.mxu0 0.0
    %1242 = vmatpush1.xpose.msra.mxu0 0.0
    %1243 = vmatprep.subr.mxu0 0.0
    %1244 = vmatpush1.xpose.msra.mxu0 0.0
    %1245 = vmatprep.subr.mxu0 0.0
    %1246 = vmatpush1.xpose.msra.mxu0 0.0
    %1247 = vmatprep.subr.mxu0 0.0
    %1248 = vmatpush1.xpose.msra.mxu0 0.0
    %1249 = vmatprep.subr.mxu0 0.0
    %1250 = vmatpush1.xpose.msra.mxu0 0.0
    %1251 = vmatprep.subr.mxu0 0.0
    %1252 = vmatpush1.xpose.msra.mxu0 0.0
    %1253 = vmatprep.subr.mxu0 0.0
    %1254 = vmatpush1.xpose.msra.mxu0 0.0
    %1255 = vmatprep.subr.mxu0 0.0
    %1256 = vmatpush1.xpose.msra.mxu0 0.0
    %1257 = vmatprep.subr.mxu0 0.0
    %1258 = vmatpush1.xpose.msra.mxu0 0.0
    %1259 = vmatprep.subr.mxu0 0.0
    %1260 = vmatpush1.xpose.msra.mxu0 0.0
    %1261 = vmatprep.subr.mxu0 0.0
    %1262 = vmatpush1.xpose.msra.mxu0 0.0
    %1263 = vmatprep.subr.mxu0 0.0
    %1264 = vmatpush1.xpose.msra.mxu0 0.0
    %1265 = vmatprep.subr.mxu0 0.0
    %1266 = vmatpush1.xpose.msra.mxu0 0.0
    %1267 = vmatprep.subr.mxu0 0.0
    %1268 = vmatpush1.xpose.msra.mxu0 0.0
    %1269 = vmatprep.subr.mxu0 0.0
    %1270 = vmatpush1.xpose.msra.mxu0 0.0
    %1271 = vmatprep.subr.mxu0 0.0
    %1272 = vmatpush1.xpose.msra.mxu0 0.0
    %1273 = vmatprep.subr.mxu0 0.0
    %1274 = vmatpush1.xpose.msra.mxu0 0.0
    %1275 = vmatprep.subr.mxu0 0.0
    %1276 = vmatpush1.xpose.msra.mxu0 0.0
    %1277 = vmatprep.subr.mxu0 0.0
    %1278 = vmatpush1.xpose.msra.mxu0 0.0
    %1279 = vmatprep.subr.mxu0 0.0
    %1280 = vmatpush1.xpose.msra.mxu0 0.0
    %1281 = vmatprep.subr.mxu0 0.0
    %1282 = vmatpush1.xpose.msra.mxu0 0.0
    %1283 = vmatprep.subr.mxu0 0.0
    %1284 = vmatpush1.xpose.msra.mxu0 0.0
    %1285 = vmatprep.subr.mxu0 0.0
    %1286 = vmatpush1.xpose.msra.mxu0 0.0
    %1287 = vmatprep.subr.mxu0 0.0
    %1288 = vmatpush1.xpose.msra.mxu0 0.0
    %1289 = vmatprep.subr.mxu0 0.0
    %1290 = vmatpush1.xpose.msra.mxu0 0.0
    %1291 = vmatprep.subr.mxu0 0.0
    %1292 = vmatpush1.xpose.msra.mxu0 0.0
    %1293 = vmatprep.subr.mxu0 0.0
    %1294 = vmatpush1.xpose.msra.mxu0 0.0
    %1295 = vmatprep.subr.mxu0 0.0
    %1296 = vmatpush1.xpose.msra.mxu0 0.0
    %1297 = vmatprep.subr.mxu0 0.0
    %1298 = vmatpush1.xpose.msra.mxu0 0.0
    %1299 = vmatprep.mubr.f32.mxu0 0.0
    %1300 = vmatmul.mubr.f32.gmra.mrb[0].mxu0 %v1231
    %v1301 = vpop.f32.mrb[0].mxu0
    %v1302 = vadd.f32 0.0, %v1301
    %v1303 = vpop.f32.mrb[0].mxu0
    %1304 = vdwg.mxu0
    %v1305 = vsel %vm786, %v614, 0
    %v1307 = vsel %vm786, %v648, 0
    %1309 = vmatprep.subr.mxu0 0.0
    %1310 = vmatpush1.xpose.msra.mxu0 %v1307
    %1311 = vmatprep.subr.mxu0 0.0
    %1312 = vmatpush1.xpose.msra.mxu0 0.0
    %1313 = vmatprep.subr.mxu0 0.0
    %1314 = vmatpush1.xpose.msra.mxu0 0.0
    %1315 = vmatprep.subr.mxu0 0.0
    %1316 = vmatpush1.xpose.msra.mxu0 0.0
    %1317 = vmatprep.subr.mxu0 0.0
    %1318 = vmatpush1.xpose.msra.mxu0 0.0
    %1319 = vmatprep.subr.mxu0 0.0
    %1320 = vmatpush1.xpose.msra.mxu0 0.0
    %1321 = vmatprep.subr.mxu0 0.0
    %1322 = vmatpush1.xpose.msra.mxu0 0.0
    %1323 = vmatprep.subr.mxu0 0.0
    %1324 = vmatpush1.xpose.msra.mxu0 0.0
    %1325 = vmatprep.subr.mxu0 0.0
    %1326 = vmatpush1.xpose.msra.mxu0 0.0
    %1327 = vmatprep.subr.mxu0 0.0
    %1328 = vmatpush1.xpose.msra.mxu0 0.0
    %1329 = vmatprep.subr.mxu0 0.0
    %1330 = vmatpush1.xpose.msra.mxu0 0.0
    %1331 = vmatprep.subr.mxu0 0.0
    %1332 = vmatpush1.xpose.msra.mxu0 0.0
    %1333 = vmatprep.subr.mxu0 0.0
    %1334 = vmatpush1.xpose.msra.mxu0 0.0
    %1335 = vmatprep.subr.mxu0 0.0
    %1336 = vmatpush1.xpose.msra.mxu0 0.0
    %1337 = vmatprep.subr.mxu0 0.0
    %1338 = vmatpush1.xpose.msra.mxu0 0.0
    %1339 = vmatprep.subr.mxu0 0.0
    %1340 = vmatpush1.xpose.msra.mxu0 0.0
    %1341 = vmatprep.subr.mxu0 0.0
    %1342 = vmatpush1.xpose.msra.mxu0 0.0
    %1343 = vmatprep.subr.mxu0 0.0
    %1344 = vmatpush1.xpose.msra.mxu0 0.0
    %1345 = vmatprep.subr.mxu0 0.0
    %1346 = vmatpush1.xpose.msra.mxu0 0.0
    %1347 = vmatprep.subr.mxu0 0.0
    %1348 = vmatpush1.xpose.msra.mxu0 0.0
    %1349 = vmatprep.subr.mxu0 0.0
    %1350 = vmatpush1.xpose.msra.mxu0 0.0
    %1351 = vmatprep.subr.mxu0 0.0
    %1352 = vmatpush1.xpose.msra.mxu0 0.0
    %1353 = vmatprep.subr.mxu0 0.0
    %1354 = vmatpush1.xpose.msra.mxu0 0.0
    %1355 = vmatprep.subr.mxu0 0.0
    %1356 = vmatpush1.xpose.msra.mxu0 0.0
    %1357 = vmatprep.subr.mxu0 0.0
    %1358 = vmatpush1.xpose.msra.mxu0 0.0
    %1359 = vmatprep.subr.mxu0 0.0
    %1360 = vmatpush1.xpose.msra.mxu0 0.0
    %1361 = vmatprep.subr.mxu0 0.0
    %1362 = vmatpush1.xpose.msra.mxu0 0.0
    %1363 = vmatprep.subr.mxu0 0.0
    %1364 = vmatpush1.xpose.msra.mxu0 0.0
    %1365 = vmatprep.subr.mxu0 0.0
    %1366 = vmatpush1.xpose.msra.mxu0 0.0
    %1367 = vmatprep.subr.mxu0 0.0
    %1368 = vmatpush1.xpose.msra.mxu0 0.0
    %1369 = vmatprep.subr.mxu0 0.0
    %1370 = vmatpush1.xpose.msra.mxu0 0.0
    %1371 = vmatprep.subr.mxu0 0.0
    %1372 = vmatpush1.xpose.msra.mxu0 0.0
    %1373 = vmatprep.mubr.f32.mxu0 0.0
    %1374 = vmatmul.mubr.f32.gmra.mrb[0].mxu0 %v1305
    %v1375 = vpop.f32.mrb[0].mxu0
    %v1376 = vadd.f32 0.0, %v1375
    %v1377 = vpop.f32.mrb[0].mxu0
    %1378 = vdwg.mxu0
    %v1379 = vsel %vm786, %v675, 0
    %v1381 = vsel %vm786, %v723, 0
    %1383 = vmatprep.subr.mxu0 0.0
    %1384 = vmatpush1.xpose.msra.mxu0 %v1381
    %1385 = vmatprep.subr.mxu0 0.0
    %1386 = vmatpush1.xpose.msra.mxu0 0.0
    %1387 = vmatprep.subr.mxu0 0.0
    %1388 = vmatpush1.xpose.msra.mxu0 0.0
    %1389 = vmatprep.subr.mxu0 0.0
    %1390 = vmatpush1.xpose.msra.mxu0 0.0
    %1391 = vmatprep.subr.mxu0 0.0
    %1392 = vmatpush1.xpose.msra.mxu0 0.0
    %1393 = vmatprep.subr.mxu0 0.0
    %1394 = vmatpush1.xpose.msra.mxu0 0.0
    %1395 = vmatprep.subr.mxu0 0.0
    %1396 = vmatpush1.xpose.msra.mxu0 0.0
    %1397 = vmatprep.subr.mxu0 0.0
    %1398 = vmatpush1.xpose.msra.mxu0 0.0
    %1399 = vmatprep.subr.mxu0 0.0
    %1400 = vmatpush1.xpose.msra.mxu0 0.0
    %1401 = vmatprep.subr.mxu0 0.0
    %1402 = vmatpush1.xpose.msra.mxu0 0.0
    %1403 = vmatprep.subr.mxu0 0.0
    %1404 = vmatpush1.xpose.msra.mxu0 0.0
    %1405 = vmatprep.subr.mxu0 0.0
    %1406 = vmatpush1.xpose.msra.mxu0 0.0
    %1407 = vmatprep.subr.mxu0 0.0
    %1408 = vmatpush1.xpose.msra.mxu0 0.0
    %1409 = vmatprep.subr.mxu0 0.0
    %1410 = vmatpush1.xpose.msra.mxu0 0.0
    %1411 = vmatprep.subr.mxu0 0.0
    %1412 = vmatpush1.xpose.msra.mxu0 0.0
    %1413 = vmatprep.subr.mxu0 0.0
    %1414 = vmatpush1.xpose.msra.mxu0 0.0
    %1415 = vmatprep.subr.mxu0 0.0
    %1416 = vmatpush1.xpose.msra.mxu0 0.0
    %1417 = vmatprep.subr.mxu0 0.0
    %1418 = vmatpush1.xpose.msra.mxu0 0.0
    %1419 = vmatprep.subr.mxu0 0.0
    %1420 = vmatpush1.xpose.msra.mxu0 0.0
    %1421 = vmatprep.subr.mxu0 0.0
    %1422 = vmatpush1.xpose.msra.mxu0 0.0
    %1423 = vmatprep.subr.mxu0 0.0
    %1424 = vmatpush1.xpose.msra.mxu0 0.0
    %1425 = vmatprep.subr.mxu0 0.0
    %1426 = vmatpush1.xpose.msra.mxu0 0.0
    %1427 = vmatprep.subr.mxu0 0.0
    %1428 = vmatpush1.xpose.msra.mxu0 0.0
    %1429 = vmatprep.subr.mxu0 0.0
    %1430 = vmatpush1.xpose.msra.mxu0 0.0
    %1431 = vmatprep.subr.mxu0 0.0
    %1432 = vmatpush1.xpose.msra.mxu0 0.0
    %1433 = vmatprep.subr.mxu0 0.0
    %1434 = vmatpush1.xpose.msra.mxu0 0.0
    %1435 = vmatprep.subr.mxu0 0.0
    %1436 = vmatpush1.xpose.msra.mxu0 0.0
    %1437 = vmatprep.subr.mxu0 0.0
    %1438 = vmatpush1.xpose.msra.mxu0 0.0
    %1439 = vmatprep.subr.mxu0 0.0
    %1440 = vmatpush1.xpose.msra.mxu0 0.0
    %1441 = vmatprep.subr.mxu0 0.0
    %1442 = vmatpush1.xpose.msra.mxu0 0.0
    %1443 = vmatprep.subr.mxu0 0.0
    %1444 = vmatpush1.xpose.msra.mxu0 0.0
    %1445 = vmatprep.subr.mxu0 0.0
    %1446 = vmatpush1.xpose.msra.mxu0 0.0
    %1447 = vmatprep.mubr.f32.mxu0 0.0
    %1448 = vmatmul.mubr.f32.gmra.mrb[0].mxu0 %v1379
    %v1449 = vpop.f32.mrb[0].mxu0
    %v1450 = vadd.f32 0.0, %v1449
    %v1451 = vpop.f32.mrb[0].mxu0
    %1452 = vdwg.mxu0
    %v1453 = vsel %vm786, %v677, 0
    %v1455 = vsel %vm786, %v725, 0
    %1457 = vmatprep.subr.mxu0 0.0
    %1458 = vmatpush1.xpose.msra.mxu0 %v1455
    %1459 = vmatprep.subr.mxu0 0.0
    %1460 = vmatpush1.xpose.msra.mxu0 0.0
    %1461 = vmatprep.subr.mxu0 0.0
    %1462 = vmatpush1.xpose.msra.mxu0 0.0
    %1463 = vmatprep.subr.mxu0 0.0
    %1464 = vmatpush1.xpose.msra.mxu0 0.0
    %1465 = vmatprep.subr.mxu0 0.0
    %1466 = vmatpush1.xpose.msra.mxu0 0.0
    %1467 = vmatprep.subr.mxu0 0.0
    %1468 = vmatpush1.xpose.msra.mxu0 0.0
    %1469 = vmatprep.subr.mxu0 0.0
    %1470 = vmatpush1.xpose.msra.mxu0 0.0
    %1471 = vmatprep.subr.mxu0 0.0
    %1472 = vmatpush1.xpose.msra.mxu0 0.0
    %1473 = vmatprep.subr.mxu0 0.0
    %1474 = vmatpush1.xpose.msra.mxu0 0.0
    %1475 = vmatprep.subr.mxu0 0.0
    %1476 = vmatpush1.xpose.msra.mxu0 0.0
    %1477 = vmatprep.subr.mxu0 0.0
    %1478 = vmatpush1.xpose.msra.mxu0 0.0
    %1479 = vmatprep.subr.mxu0 0.0
    %1480 = vmatpush1.xpose.msra.mxu0 0.0
    %1481 = vmatprep.subr.mxu0 0.0
    %1482 = vmatpush1.xpose.msra.mxu0 0.0
    %1483 = vmatprep.subr.mxu0 0.0
    %1484 = vmatpush1.xpose.msra.mxu0 0.0
    %1485 = vmatprep.subr.mxu0 0.0
    %1486 = vmatpush1.xpose.msra.mxu0 0.0
    %1487 = vmatprep.subr.mxu0 0.0
    %1488 = vmatpush1.xpose.msra.mxu0 0.0
    %1489 = vmatprep.subr.mxu0 0.0
    %1490 = vmatpush1.xpose.msra.mxu0 0.0
    %1491 = vmatprep.subr.mxu0 0.0
    %1492 = vmatpush1.xpose.msra.mxu0 0.0
    %1493 = vmatprep.subr.mxu0 0.0
    %1494 = vmatpush1.xpose.msra.mxu0 0.0
    %1495 = vmatprep.subr.mxu0 0.0
    %1496 = vmatpush1.xpose.msra.mxu0 0.0
    %1497 = vmatprep.subr.mxu0 0.0
    %1498 = vmatpush1.xpose.msra.mxu0 0.0
    %1499 = vmatprep.subr.mxu0 0.0
    %1500 = vmatpush1.xpose.msra.mxu0 0.0
    %1501 = vmatprep.subr.mxu0 0.0
    %1502 = vmatpush1.xpose.msra.mxu0 0.0
    %1503 = vmatprep.subr.mxu0 0.0
    %1504 = vmatpush1.xpose.msra.mxu0 0.0
    %1505 = vmatprep.subr.mxu0 0.0
    %1506 = vmatpush1.xpose.msra.mxu0 0.0
    %1507 = vmatprep.subr.mxu0 0.0
    %1508 = vmatpush1.xpose.msra.mxu0 0.0
    %1509 = vmatprep.subr.mxu0 0.0
    %1510 = vmatpush1.xpose.msra.mxu0 0.0
    %1511 = vmatprep.subr.mxu0 0.0
    %1512 = vmatpush1.xpose.msra.mxu0 0.0
    %1513 = vmatprep.subr.mxu0 0.0
    %1514 = vmatpush1.xpose.msra.mxu0 0.0
    %1515 = vmatprep.subr.mxu0 0.0
    %1516 = vmatpush1.xpose.msra.mxu0 0.0
    %1517 = vmatprep.subr.mxu0 0.0
    %1518 = vmatpush1.xpose.msra.mxu0 0.0
    %1519 = vmatprep.subr.mxu0 0.0
    %1520 = vmatpush1.xpose.msra.mxu0 0.0
    %1521 = vmatprep.mubr.f32.mxu0 0.0
    %1522 = vmatmul.mubr.f32.gmra.mrb[0].mxu0 %v1453
    %v1523 = vpop.f32.mrb[0].mxu0
    %v1524 = vadd.f32 0.0, %v1523
    %v1525 = vpop.f32.mrb[0].mxu0
    %1526 = vdwg.mxu0
    %v1527 = vsel %vm786, %v679, 0
    %v1529 = vsel %vm786, %v727, 0
    %1531 = vmatprep.subr.mxu0 0.0
    %1532 = vmatpush1.xpose.msra.mxu0 %v1529
    %1533 = vmatprep.subr.mxu0 0.0
    %1534 = vmatpush1.xpose.msra.mxu0 0.0
    %1535 = vmatprep.subr.mxu0 0.0
    %1536 = vmatpush1.xpose.msra.mxu0 0.0
    %1537 = vmatprep.subr.mxu0 0.0
    %1538 = vmatpush1.xpose.msra.mxu0 0.0
    %1539 = vmatprep.subr.mxu0 0.0
    %1540 = vmatpush1.xpose.msra.mxu0 0.0
    %1541 = vmatprep.subr.mxu0 0.0
    %1542 = vmatpush1.xpose.msra.mxu0 0.0
    %1543 = vmatprep.subr.mxu0 0.0
    %1544 = vmatpush1.xpose.msra.mxu0 0.0
    %1545 = vmatprep.subr.mxu0 0.0
    %1546 = vmatpush1.xpose.msra.mxu0 0.0
    %1547 = vmatprep.subr.mxu0 0.0
    %1548 = vmatpush1.xpose.msra.mxu0 0.0
    %1549 = vmatprep.subr.mxu0 0.0
    %1550 = vmatpush1.xpose.msra.mxu0 0.0
    %1551 = vmatprep.subr.mxu0 0.0
    %1552 = vmatpush1.xpose.msra.mxu0 0.0
    %1553 = vmatprep.subr.mxu0 0.0
    %1554 = vmatpush1.xpose.msra.mxu0 0.0
    %1555 = vmatprep.subr.mxu0 0.0
    %1556 = vmatpush1.xpose.msra.mxu0 0.0
    %1557 = vmatprep.subr.mxu0 0.0
    %1558 = vmatpush1.xpose.msra.mxu0 0.0
    %1559 = vmatprep.subr.mxu0 0.0
    %1560 = vmatpush1.xpose.msra.mxu0 0.0
    %1561 = vmatprep.subr.mxu0 0.0
    %1562 = vmatpush1.xpose.msra.mxu0 0.0
    %1563 = vmatprep.subr.mxu0 0.0
    %1564 = vmatpush1.xpose.msra.mxu0 0.0
    %1565 = vmatprep.subr.mxu0 0.0
    %1566 = vmatpush1.xpose.msra.mxu0 0.0
    %1567 = vmatprep.subr.mxu0 0.0
    %1568 = vmatpush1.xpose.msra.mxu0 0.0
    %1569 = vmatprep.subr.mxu0 0.0
    %1570 = vmatpush1.xpose.msra.mxu0 0.0
    %1571 = vmatprep.subr.mxu0 0.0
    %1572 = vmatpush1.xpose.msra.mxu0 0.0
    %1573 = vmatprep.subr.mxu0 0.0
    %1574 = vmatpush1.xpose.msra.mxu0 0.0
    %1575 = vmatprep.subr.mxu0 0.0
    %1576 = vmatpush1.xpose.msra.mxu0 0.0
    %1577 = vmatprep.subr.mxu0 0.0
    %1578 = vmatpush1.xpose.msra.mxu0 0.0
    %1579 = vmatprep.subr.mxu0 0.0
    %1580 = vmatpush1.xpose.msra.mxu0 0.0
    %1581 = vmatprep.subr.mxu0 0.0
    %1582 = vmatpush1.xpose.msra.mxu0 0.0
    %1583 = vmatprep.subr.mxu0 0.0
    %1584 = vmatpush1.xpose.msra.mxu0 0.0
    %1585 = vmatprep.subr.mxu0 0.0
    %1586 = vmatpush1.xpose.msra.mxu0 0.0
    %1587 = vmatprep.subr.mxu0 0.0
    %1588 = vmatpush1.xpose.msra.mxu0 0.0
    %1589 = vmatprep.subr.mxu0 0.0
    %1590 = vmatpush1.xpose.msra.mxu0 0.0
    %1591 = vmatprep.subr.mxu0 0.0
    %1592 = vmatpush1.xpose.msra.mxu0 0.0
    %1593 = vmatprep.subr.mxu0 0.0
    %1594 = vmatpush1.xpose.msra.mxu0 0.0
    %1595 = vmatprep.mubr.f32.mxu0 0.0
    %1596 = vmatmul.mubr.f32.gmra.mrb[0].mxu0 %v1527
    %v1597 = vpop.f32.mrb[0].mxu0
    %v1598 = vadd.f32 0.0, %v1597
    %v1599 = vpop.f32.mrb[0].mxu0
    %1600 = vdwg.mxu0
    %v1601 = vsel %vm786, %v681, 0
    %v1603 = vsel %vm786, %v729, 0
    %1605 = vmatprep.subr.mxu0 0.0
    %1606 = vmatpush1.xpose.msra.mxu0 %v1603
    %1607 = vmatprep.subr.mxu0 0.0
    %1608 = vmatpush1.xpose.msra.mxu0 0.0
    %1609 = vmatprep.subr.mxu0 0.0
    %1610 = vmatpush1.xpose.msra.mxu0 0.0
    %1611 = vmatprep.subr.mxu0 0.0
    %1612 = vmatpush1.xpose.msra.mxu0 0.0
    %1613 = vmatprep.subr.mxu0 0.0
    %1614 = vmatpush1.xpose.msra.mxu0 0.0
    %1615 = vmatprep.subr.mxu0 0.0
    %1616 = vmatpush1.xpose.msra.mxu0 0.0
    %1617 = vmatprep.subr.mxu0 0.0
    %1618 = vmatpush1.xpose.msra.mxu0 0.0
    %1619 = vmatprep.subr.mxu0 0.0
    %1620 = vmatpush1.xpose.msra.mxu0 0.0
    %1621 = vmatprep.subr.mxu0 0.0
    %1622 = vmatpush1.xpose.msra.mxu0 0.0
    %1623 = vmatprep.subr.mxu0 0.0
    %1624 = vmatpush1.xpose.msra.mxu0 0.0
    %1625 = vmatprep.subr.mxu0 0.0
    %1626 = vmatpush1.xpose.msra.mxu0 0.0
    %1627 = vmatprep.subr.mxu0 0.0
    %1628 = vmatpush1.xpose.msra.mxu0 0.0
    %1629 = vmatprep.subr.mxu0 0.0
    %1630 = vmatpush1.xpose.msra.mxu0 0.0
    %1631 = vmatprep.subr.mxu0 0.0
    %1632 = vmatpush1.xpose.msra.mxu0 0.0
    %1633 = vmatprep.subr.mxu0 0.0
    %1634 = vmatpush1.xpose.msra.mxu0 0.0
    %1635 = vmatprep.subr.mxu0 0.0
    %1636 = vmatpush1.xpose.msra.mxu0 0.0
    %1637 = vmatprep.subr.mxu0 0.0
    %1638 = vmatpush1.xpose.msra.mxu0 0.0
    %1639 = vmatprep.subr.mxu0 0.0
    %1640 = vmatpush1.xpose.msra.mxu0 0.0
    %1641 = vmatprep.subr.mxu0 0.0
    %1642 = vmatpush1.xpose.msra.mxu0 0.0
    %1643 = vmatprep.subr.mxu0 0.0
    %1644 = vmatpush1.xpose.msra.mxu0 0.0
    %1645 = vmatprep.subr.mxu0 0.0
    %1646 = vmatpush1.xpose.msra.mxu0 0.0
    %1647 = vmatprep.subr.mxu0 0.0
    %1648 = vmatpush1.xpose.msra.mxu0 0.0
    %1649 = vmatprep.subr.mxu0 0.0
    %1650 = vmatpush1.xpose.msra.mxu0 0.0
    %1651 = vmatprep.subr.mxu0 0.0
    %1652 = vmatpush1.xpose.msra.mxu0 0.0
    %1653 = vmatprep.subr.mxu0 0.0
    %1654 = vmatpush1.xpose.msra.mxu0 0.0
    %1655 = vmatprep.subr.mxu0 0.0
    %1656 = vmatpush1.xpose.msra.mxu0 0.0
    %1657 = vmatprep.subr.mxu0 0.0
    %1658 = vmatpush1.xpose.msra.mxu0 0.0
    %1659 = vmatprep.subr.mxu0 0.0
    %1660 = vmatpush1.xpose.msra.mxu0 0.0
    %1661 = vmatprep.subr.mxu0 0.0
    %1662 = vmatpush1.xpose.msra.mxu0 0.0
    %1663 = vmatprep.subr.mxu0 0.0
    %1664 = vmatpush1.xpose.msra.mxu0 0.0
    %1665 = vmatprep.subr.mxu0 0.0
    %1666 = vmatpush1.xpose.msra.mxu0 0.0
    %1667 = vmatprep.subr.mxu0 0.0
    %1668 = vmatpush1.xpose.msra.mxu0 0.0
    %1669 = vmatprep.mubr.f32.mxu0 0.0
    %1670 = vmatmul.mubr.f32.gmra.mrb[0].mxu0 %v1601
    %v1671 = vpop.f32.mrb[0].mxu0
    %v1672 = vadd.f32 0.0, %v1671
    %v1673 = vpop.f32.mrb[0].mxu0
    %1674 = vdwg.mxu0
    %v1675 = vsel %vm786, %v683, 0
    %v1677 = vsel %vm786, %v731, 0
    %1679 = vmatprep.subr.mxu0 0.0
    %1680 = vmatpush1.xpose.msra.mxu0 %v1677
    %1681 = vmatprep.subr.mxu0 0.0
    %1682 = vmatpush1.xpose.msra.mxu0 0.0
    %1683 = vmatprep.subr.mxu0 0.0
    %1684 = vmatpush1.xpose.msra.mxu0 0.0
    %1685 = vmatprep.subr.mxu0 0.0
    %1686 = vmatpush1.xpose.msra.mxu0 0.0
    %1687 = vmatprep.subr.mxu0 0.0
    %1688 = vmatpush1.xpose.msra.mxu0 0.0
    %1689 = vmatprep.subr.mxu0 0.0
    %1690 = vmatpush1.xpose.msra.mxu0 0.0
    %1691 = vmatprep.subr.mxu0 0.0
    %1692 = vmatpush1.xpose.msra.mxu0 0.0
    %1693 = vmatprep.subr.mxu0 0.0
    %1694 = vmatpush1.xpose.msra.mxu0 0.0
    %1695 = vmatprep.subr.mxu0 0.0
    %1696 = vmatpush1.xpose.msra.mxu0 0.0
    %1697 = vmatprep.subr.mxu0 0.0
    %1698 = vmatpush1.xpose.msra.mxu0 0.0
    %1699 = vmatprep.subr.mxu0 0.0
    %1700 = vmatpush1.xpose.msra.mxu0 0.0
    %1701 = vmatprep.subr.mxu0 0.0
    %1702 = vmatpush1.xpose.msra.mxu0 0.0
    %1703 = vmatprep.subr.mxu0 0.0
    %1704 = vmatpush1.xpose.msra.mxu0 0.0
    %1705 = vmatprep.subr.mxu0 0.0
    %1706 = vmatpush1.xpose.msra.mxu0 0.0
    %1707 = vmatprep.subr.mxu0 0.0
    %1708 = vmatpush1.xpose.msra.mxu0 0.0
    %1709 = vmatprep.subr.mxu0 0.0
    %1710 = vmatpush1.xpose.msra.mxu0 0.0
    %1711 = vmatprep.subr.mxu0 0.0
    %1712 = vmatpush1.xpose.msra.mxu0 0.0
    %1713 = vmatprep.subr.mxu0 0.0
    %1714 = vmatpush1.xpose.msra.mxu0 0.0
    %1715 = vmatprep.subr.mxu0 0.0
    %1716 = vmatpush1.xpose.msra.mxu0 0.0
    %1717 = vmatprep.subr.mxu0 0.0
    %1718 = vmatpush1.xpose.msra.mxu0 0.0
    %1719 = vmatprep.subr.mxu0 0.0
    %1720 = vmatpush1.xpose.msra.mxu0 0.0
    %1721 = vmatprep.subr.mxu0 0.0
    %1722 = vmatpush1.xpose.msra.mxu0 0.0
    %1723 = vmatprep.subr.mxu0 0.0
    %1724 = vmatpush1.xpose.msra.mxu0 0.0
    %1725 = vmatprep.subr.mxu0 0.0
    %1726 = vmatpush1.xpose.msra.mxu0 0.0
    %1727 = vmatprep.subr.mxu0 0.0
    %1728 = vmatpush1.xpose.msra.mxu0 0.0
    %1729 = vmatprep.subr.mxu0 0.0
    %1730 = vmatpush1.xpose.msra.mxu0 0.0
    %1731 = vmatprep.subr.mxu0 0.0
    %1732 = vmatpush1.xpose.msra.mxu0 0.0
    %1733 = vmatprep.subr.mxu0 0.0
    %1734 = vmatpush1.xpose.msra.mxu0 0.0
    %1735 = vmatprep.subr.mxu0 0.0
    %1736 = vmatpush1.xpose.msra.mxu0 0.0
    %1737 = vmatprep.subr.mxu0 0.0
    %1738 = vmatpush1.xpose.msra.mxu0 0.0
    %1739 = vmatprep.subr.mxu0 0.0
    %1740 = vmatpush1.xpose.msra.mxu0 0.0
    %1741 = vmatprep.subr.mxu0 0.0
    %1742 = vmatpush1.xpose.msra.mxu0 0.0
    %1743 = vmatprep.mubr.f32.mxu0 0.0
    %1744 = vmatmul.mubr.f32.gmra.mrb[0].mxu0 %v1675
    %v1745 = vpop.f32.mrb[0].mxu0
    %v1746 = vadd.f32 0.0, %v1745
    %v1747 = vpop.f32.mrb[0].mxu0
    %1748 = vdwg.mxu0
    %v1749 = vsel %vm786, %v685, 0
    %v1751 = vsel %vm786, %v733, 0
    %1753 = vmatprep.subr.mxu0 0.0
    %1754 = vmatpush1.xpose.msra.mxu0 %v1751
    %1755 = vmatprep.subr.mxu0 0.0
    %1756 = vmatpush1.xpose.msra.mxu0 0.0
    %1757 = vmatprep.subr.mxu0 0.0
    %1758 = vmatpush1.xpose.msra.mxu0 0.0
    %1759 = vmatprep.subr.mxu0 0.0
    %1760 = vmatpush1.xpose.msra.mxu0 0.0
    %1761 = vmatprep.subr.mxu0 0.0
    %1762 = vmatpush1.xpose.msra.mxu0 0.0
    %1763 = vmatprep.subr.mxu0 0.0
    %1764 = vmatpush1.xpose.msra.mxu0 0.0
    %1765 = vmatprep.subr.mxu0 0.0
    %1766 = vmatpush1.xpose.msra.mxu0 0.0
    %1767 = vmatprep.subr.mxu0 0.0
    %1768 = vmatpush1.xpose.msra.mxu0 0.0
    %1769 = vmatprep.subr.mxu0 0.0
    %1770 = vmatpush1.xpose.msra.mxu0 0.0
    %1771 = vmatprep.subr.mxu0 0.0
    %1772 = vmatpush1.xpose.msra.mxu0 0.0
    %1773 = vmatprep.subr.mxu0 0.0
    %1774 = vmatpush1.xpose.msra.mxu0 0.0
    %1775 = vmatprep.subr.mxu0 0.0
    %1776 = vmatpush1.xpose.msra.mxu0 0.0
    %1777 = vmatprep.subr.mxu0 0.0
    %1778 = vmatpush1.xpose.msra.mxu0 0.0
    %1779 = vmatprep.subr.mxu0 0.0
    %1780 = vmatpush1.xpose.msra.mxu0 0.0
    %1781 = vmatprep.subr.mxu0 0.0
    %1782 = vmatpush1.xpose.msra.mxu0 0.0
    %1783 = vmatprep.subr.mxu0 0.0
    %1784 = vmatpush1.xpose.msra.mxu0 0.0
    %1785 = vmatprep.subr.mxu0 0.0
    %1786 = vmatpush1.xpose.msra.mxu0 0.0
    %1787 = vmatprep.subr.mxu0 0.0
    %1788 = vmatpush1.xpose.msra.mxu0 0.0
    %1789 = vmatprep.subr.mxu0 0.0
    %1790 = vmatpush1.xpose.msra.mxu0 0.0
    %1791 = vmatprep.subr.mxu0 0.0
    %1792 = vmatpush1.xpose.msra.mxu0 0.0
    %1793 = vmatprep.subr.mxu0 0.0
    %1794 = vmatpush1.xpose.msra.mxu0 0.0
    %1795 = vmatprep.subr.mxu0 0.0
    %1796 = vmatpush1.xpose.msra.mxu0 0.0
    %1797 = vmatprep.subr.mxu0 0.0
    %1798 = vmatpush1.xpose.msra.mxu0 0.0
    %1799 = vmatprep.subr.mxu0 0.0
    %1800 = vmatpush1.xpose.msra.mxu0 0.0
    %1801 = vmatprep.subr.mxu0 0.0
    %1802 = vmatpush1.xpose.msra.mxu0 0.0
    %1803 = vmatprep.subr.mxu0 0.0
    %1804 = vmatpush1.xpose.msra.mxu0 0.0
    %1805 = vmatprep.subr.mxu0 0.0
    %1806 = vmatpush1.xpose.msra.mxu0 0.0
    %1807 = vmatprep.subr.mxu0 0.0
    %1808 = vmatpush1.xpose.msra.mxu0 0.0
    %1809 = vmatprep.subr.mxu0 0.0
    %1810 = vmatpush1.xpose.msra.mxu0 0.0
    %1811 = vmatprep.subr.mxu0 0.0
    %1812 = vmatpush1.xpose.msra.mxu0 0.0
    %1813 = vmatprep.subr.mxu0 0.0
    %1814 = vmatpush1.xpose.msra.mxu0 0.0
    %1815 = vmatprep.subr.mxu0 0.0
    %1816 = vmatpush1.xpose.msra.mxu0 0.0
    %1817 = vmatprep.mubr.f32.mxu0 0.0
    %1818 = vmatmul.mubr.f32.gmra.mrb[0].mxu0 %v1749
    %v1819 = vpop.f32.mrb[0].mxu0
    %v1820 = vadd.f32 0.0, %v1819
    %v1821 = vpop.f32.mrb[0].mxu0
    %1822 = vdwg.mxu0
    %v1823 = vsel %vm786, %v687, 0
    %v1825 = vsel %vm786, %v735, 0
    %1827 = vmatprep.subr.mxu0 0.0
    %1828 = vmatpush1.xpose.msra.mxu0 %v1825
    %1829 = vmatprep.subr.mxu0 0.0
    %1830 = vmatpush1.xpose.msra.mxu0 0.0
    %1831 = vmatprep.subr.mxu0 0.0
    %1832 = vmatpush1.xpose.msra.mxu0 0.0
    %1833 = vmatprep.subr.mxu0 0.0
    %1834 = vmatpush1.xpose.msra.mxu0 0.0
    %1835 = vmatprep.subr.mxu0 0.0
    %1836 = vmatpush1.xpose.msra.mxu0 0.0
    %1837 = vmatprep.subr.mxu0 0.0
    %1838 = vmatpush1.xpose.msra.mxu0 0.0
    %1839 = vmatprep.subr.mxu0 0.0
    %1840 = vmatpush1.xpose.msra.mxu0 0.0
    %1841 = vmatprep.subr.mxu0 0.0
    %1842 = vmatpush1.xpose.msra.mxu0 0.0
    %1843 = vmatprep.subr.mxu0 0.0
    %1844 = vmatpush1.xpose.msra.mxu0 0.0
    %1845 = vmatprep.subr.mxu0 0.0
    %1846 = vmatpush1.xpose.msra.mxu0 0.0
    %1847 = vmatprep.subr.mxu0 0.0
    %1848 = vmatpush1.xpose.msra.mxu0 0.0
    %1849 = vmatprep.subr.mxu0 0.0
    %1850 = vmatpush1.xpose.msra.mxu0 0.0
    %1851 = vmatprep.subr.mxu0 0.0
    %1852 = vmatpush1.xpose.msra.mxu0 0.0
    %1853 = vmatprep.subr.mxu0 0.0
    %1854 = vmatpush1.xpose.msra.mxu0 0.0
    %1855 = vmatprep.subr.mxu0 0.0
    %1856 = vmatpush1.xpose.msra.mxu0 0.0
    %1857 = vmatprep.subr.mxu0 0.0
    %1858 = vmatpush1.xpose.msra.mxu0 0.0
    %1859 = vmatprep.subr.mxu0 0.0
    %1860 = vmatpush1.xpose.msra.mxu0 0.0
    %1861 = vmatprep.subr.mxu0 0.0
    %1862 = vmatpush1.xpose.msra.mxu0 0.0
    %1863 = vmatprep.subr.mxu0 0.0
    %1864 = vmatpush1.xpose.msra.mxu0 0.0
    %1865 = vmatprep.subr.mxu0 0.0
    %1866 = vmatpush1.xpose.msra.mxu0 0.0
    %1867 = vmatprep.subr.mxu0 0.0
    %1868 = vmatpush1.xpose.msra.mxu0 0.0
    %1869 = vmatprep.subr.mxu0 0.0
    %1870 = vmatpush1.xpose.msra.mxu0 0.0
    %1871 = vmatprep.subr.mxu0 0.0
    %1872 = vmatpush1.xpose.msra.mxu0 0.0
    %1873 = vmatprep.subr.mxu0 0.0
    %1874 = vmatpush1.xpose.msra.mxu0 0.0
    %1875 = vmatprep.subr.mxu0 0.0
    %1876 = vmatpush1.xpose.msra.mxu0 0.0
    %1877 = vmatprep.subr.mxu0 0.0
    %1878 = vmatpush1.xpose.msra.mxu0 0.0
    %1879 = vmatprep.subr.mxu0 0.0
    %1880 = vmatpush1.xpose.msra.mxu0 0.0
    %1881 = vmatprep.subr.mxu0 0.0
    %1882 = vmatpush1.xpose.msra.mxu0 0.0
    %1883 = vmatprep.subr.mxu0 0.0
    %1884 = vmatpush1.xpose.msra.mxu0 0.0
    %1885 = vmatprep.subr.mxu0 0.0
    %1886 = vmatpush1.xpose.msra.mxu0 0.0
    %1887 = vmatprep.subr.mxu0 0.0
    %1888 = vmatpush1.xpose.msra.mxu0 0.0
    %1889 = vmatprep.subr.mxu0 0.0
    %1890 = vmatpush1.xpose.msra.mxu0 0.0
    %1891 = vmatprep.mubr.f32.mxu0 0.0
    %1892 = vmatmul.mubr.f32.gmra.mrb[0].mxu0 %v1823
    %v1893 = vpop.f32.mrb[0].mxu0
    %v1894 = vadd.f32 0.0, %v1893
    %v1895 = vpop.f32.mrb[0].mxu0
    %1896 = vdwg.mxu0
    %v1897 = vsel %vm786, %v689, 0
    %v1899 = vsel %vm786, %v737, 0
    %1901 = vmatprep.subr.mxu0 0.0
    %1902 = vmatpush1.xpose.msra.mxu0 %v1899
    %1903 = vmatprep.subr.mxu0 0.0
    %1904 = vmatpush1.xpose.msra.mxu0 0.0
    %1905 = vmatprep.subr.mxu0 0.0
    %1906 = vmatpush1.xpose.msra.mxu0 0.0
    %1907 = vmatprep.subr.mxu0 0.0
    %1908 = vmatpush1.xpose.msra.mxu0 0.0
    %1909 = vmatprep.subr.mxu0 0.0
    %1910 = vmatpush1.xpose.msra.mxu0 0.0
    %1911 = vmatprep.subr.mxu0 0.0
    %1912 = vmatpush1.xpose.msra.mxu0 0.0
    %1913 = vmatprep.subr.mxu0 0.0
    %1914 = vmatpush1.xpose.msra.mxu0 0.0
    %1915 = vmatprep.subr.mxu0 0.0
    %1916 = vmatpush1.xpose.msra.mxu0 0.0
    %1917 = vmatprep.subr.mxu0 0.0
    %1918 = vmatpush1.xpose.msra.mxu0 0.0
    %1919 = vmatprep.subr.mxu0 0.0
    %1920 = vmatpush1.xpose.msra.mxu0 0.0
    %1921 = vmatprep.subr.mxu0 0.0
    %1922 = vmatpush1.xpose.msra.mxu0 0.0
    %1923 = vmatprep.subr.mxu0 0.0
    %1924 = vmatpush1.xpose.msra.mxu0 0.0
    %1925 = vmatprep.subr.mxu0 0.0
    %1926 = vmatpush1.xpose.msra.mxu0 0.0
    %1927 = vmatprep.subr.mxu0 0.0
    %1928 = vmatpush1.xpose.msra.mxu0 0.0
    %1929 = vmatprep.subr.mxu0 0.0
    %1930 = vmatpush1.xpose.msra.mxu0 0.0
    %1931 = vmatprep.subr.mxu0 0.0
    %1932 = vmatpush1.xpose.msra.mxu0 0.0
    %1933 = vmatprep.subr.mxu0 0.0
    %1934 = vmatpush1.xpose.msra.mxu0 0.0
    %1935 = vmatprep.subr.mxu0 0.0
    %1936 = vmatpush1.xpose.msra.mxu0 0.0
    %1937 = vmatprep.subr.mxu0 0.0
    %1938 = vmatpush1.xpose.msra.mxu0 0.0
    %1939 = vmatprep.subr.mxu0 0.0
    %1940 = vmatpush1.xpose.msra.mxu0 0.0
    %1941 = vmatprep.subr.mxu0 0.0
    %1942 = vmatpush1.xpose.msra.mxu0 0.0
    %1943 = vmatprep.subr.mxu0 0.0
    %1944 = vmatpush1.xpose.msra.mxu0 0.0
    %1945 = vmatprep.subr.mxu0 0.0
    %1946 = vmatpush1.xpose.msra.mxu0 0.0
    %1947 = vmatprep.subr.mxu0 0.0
    %1948 = vmatpush1.xpose.msra.mxu0 0.0
    %1949 = vmatprep.subr.mxu0 0.0
    %1950 = vmatpush1.xpose.msra.mxu0 0.0
    %1951 = vmatprep.subr.mxu0 0.0
    %1952 = vmatpush1.xpose.msra.mxu0 0.0
    %1953 = vmatprep.subr.mxu0 0.0
    %1954 = vmatpush1.xpose.msra.mxu0 0.0
    %1955 = vmatprep.subr.mxu0 0.0
    %1956 = vmatpush1.xpose.msra.mxu0 0.0
    %1957 = vmatprep.subr.mxu0 0.0
    %1958 = vmatpush1.xpose.msra.mxu0 0.0
    %1959 = vmatprep.subr.mxu0 0.0
    %1960 = vmatpush1.xpose.msra.mxu0 0.0
    %1961 = vmatprep.subr.mxu0 0.0
    %1962 = vmatpush1.xpose.msra.mxu0 0.0
    %1963 = vmatprep.subr.mxu0 0.0
    %1964 = vmatpush1.xpose.msra.mxu0 0.0
    %1965 = vmatprep.mubr.f32.mxu0 0.0
    %1966 = vmatmul.mubr.f32.gmra.mrb[0].mxu0 %v1897
    %v1967 = vpop.f32.mrb[0].mxu0
    %v1968 = vadd.f32 0.0, %v1967
    %v1969 = vpop.f32.mrb[0].mxu0
    %1970 = vdwg.mxu0
    %v1971 = vsel %vm786, %v624, 0
    %v1973 = vsel %vm786, %v561, 0
    %1975 = vmatprep.subr.mxu0 0.0
    %1976 = vmatpush1.xpose.msra.mxu0 %v1973
    %1977 = vmatprep.subr.mxu0 0.0
    %1978 = vmatpush1.xpose.msra.mxu0 0.0
    %1979 = vmatprep.subr.mxu0 0.0
    %1980 = vmatpush1.xpose.msra.mxu0 0.0
    %1981 = vmatprep.subr.mxu0 0.0
    %1982 = vmatpush1.xpose.msra.mxu0 0.0
    %1983 = vmatprep.subr.mxu0 0.0
    %1984 = vmatpush1.xpose.msra.mxu0 0.0
    %1985 = vmatprep.subr.mxu0 0.0
    %1986 = vmatpush1.xpose.msra.mxu0 0.0
    %1987 = vmatprep.subr.mxu0 0.0
    %1988 = vmatpush1.xpose.msra.mxu0 0.0
    %1989 = vmatprep.subr.mxu0 0.0
    %1990 = vmatpush1.xpose.msra.mxu0 0.0
    %1991 = vmatprep.subr.mxu0 0.0
    %1992 = vmatpush1.xpose.msra.mxu0 0.0
    %1993 = vmatprep.subr.mxu0 0.0
    %1994 = vmatpush1.xpose.msra.mxu0 0.0
    %1995 = vmatprep.subr.mxu0 0.0
    %1996 = vmatpush1.xpose.msra.mxu0 0.0
    %1997 = vmatprep.subr.mxu0 0.0
    %1998 = vmatpush1.xpose.msra.mxu0 0.0
    %1999 = vmatprep.subr.mxu0 0.0
    %2000 = vmatpush1.xpose.msra.mxu0 0.0
    %2001 = vmatprep.subr.mxu0 0.0
    %2002 = vmatpush1.xpose.msra.mxu0 0.0
    %2003 = vmatprep.subr.mxu0 0.0
    %2004 = vmatpush1.xpose.msra.mxu0 0.0
    %2005 = vmatprep.subr.mxu0 0.0
    %2006 = vmatpush1.xpose.msra.mxu0 0.0
    %2007 = vmatprep.subr.mxu0 0.0
    %2008 = vmatpush1.xpose.msra.mxu0 0.0
    %2009 = vmatprep.subr.mxu0 0.0
    %2010 = vmatpush1.xpose.msra.mxu0 0.0
    %2011 = vmatprep.subr.mxu0 0.0
    %2012 = vmatpush1.xpose.msra.mxu0 0.0
    %2013 = vmatprep.subr.mxu0 0.0
    %2014 = vmatpush1.xpose.msra.mxu0 0.0
    %2015 = vmatprep.subr.mxu0 0.0
    %2016 = vmatpush1.xpose.msra.mxu0 0.0
    %2017 = vmatprep.subr.mxu0 0.0
    %2018 = vmatpush1.xpose.msra.mxu0 0.0
    %2019 = vmatprep.subr.mxu0 0.0
    %2020 = vmatpush1.xpose.msra.mxu0 0.0
    %2021 = vmatprep.subr.mxu0 0.0
    %2022 = vmatpush1.xpose.msra.mxu0 0.0
    %2023 = vmatprep.subr.mxu0 0.0
    %2024 = vmatpush1.xpose.msra.mxu0 0.0
    %2025 = vmatprep.subr.mxu0 0.0
    %2026 = vmatpush1.xpose.msra.mxu0 0.0
    %2027 = vmatprep.subr.mxu0 0.0
    %2028 = vmatpush1.xpose.msra.mxu0 0.0
    %2029 = vmatprep.subr.mxu0 0.0
    %2030 = vmatpush1.xpose.msra.mxu0 0.0
    %2031 = vmatprep.subr.mxu0 0.0
    %2032 = vmatpush1.xpose.msra.mxu0 0.0
    %2033 = vmatprep.subr.mxu0 0.0
    %2034 = vmatpush1.xpose.msra.mxu0 0.0
    %2035 = vmatprep.subr.mxu0 0.0
    %2036 = vmatpush1.xpose.msra.mxu0 0.0
    %2037 = vmatprep.subr.mxu0 0.0
    %2038 = vmatpush1.xpose.msra.mxu0 0.0
    %2039 = vmatprep.mubr.f32.mxu0 0.0
    %2040 = vmatmul.mubr.f32.gmra.mrb[0].mxu0 %v1971
    %v2041 = vpop.f32.mrb[0].mxu0
    %v2042 = vadd.f32 0.0, %v2041
    %v2043 = vpop.f32.mrb[0].mxu0
    %2044 = vdwg.mxu0
    %v2045 = vsel %vm786, %v625, 0
    %v2047 = vsel %vm786, %v566, 0
    %2049 = vmatprep.subr.mxu0 0.0
    %2050 = vmatpush1.xpose.msra.mxu0 %v2047
    %2051 = vmatprep.subr.mxu0 0.0
    %2052 = vmatpush1.xpose.msra.mxu0 0.0
    %2053 = vmatprep.subr.mxu0 0.0
    %2054 = vmatpush1.xpose.msra.mxu0 0.0
    %2055 = vmatprep.subr.mxu0 0.0
    %2056 = vmatpush1.xpose.msra.mxu0 0.0
    %2057 = vmatprep.subr.mxu0 0.0
    %2058 = vmatpush1.xpose.msra.mxu0 0.0
    %2059 = vmatprep.subr.mxu0 0.0
    %2060 = vmatpush1.xpose.msra.mxu0 0.0
    %2061 = vmatprep.subr.mxu0 0.0
    %2062 = vmatpush1.xpose.msra.mxu0 0.0
    %2063 = vmatprep.subr.mxu0 0.0
    %2064 = vmatpush1.xpose.msra.mxu0 0.0
    %2065 = vmatprep.subr.mxu0 0.0
    %2066 = vmatpush1.xpose.msra.mxu0 0.0
    %2067 = vmatprep.subr.mxu0 0.0
    %2068 = vmatpush1.xpose.msra.mxu0 0.0
    %2069 = vmatprep.subr.mxu0 0.0
    %2070 = vmatpush1.xpose.msra.mxu0 0.0
    %2071 = vmatprep.subr.mxu0 0.0
    %2072 = vmatpush1.xpose.msra.mxu0 0.0
    %2073 = vmatprep.subr.mxu0 0.0
    %2074 = vmatpush1.xpose.msra.mxu0 0.0
    %2075 = vmatprep.subr.mxu0 0.0
    %2076 = vmatpush1.xpose.msra.mxu0 0.0
    %2077 = vmatprep.subr.mxu0 0.0
    %2078 = vmatpush1.xpose.msra.mxu0 0.0
    %2079 = vmatprep.subr.mxu0 0.0
    %2080 = vmatpush1.xpose.msra.mxu0 0.0
    %2081 = vmatprep.subr.mxu0 0.0
    %2082 = vmatpush1.xpose.msra.mxu0 0.0
    %2083 = vmatprep.subr.mxu0 0.0
    %2084 = vmatpush1.xpose.msra.mxu0 0.0
    %2085 = vmatprep.subr.mxu0 0.0
    %2086 = vmatpush1.xpose.msra.mxu0 0.0
    %2087 = vmatprep.subr.mxu0 0.0
    %2088 = vmatpush1.xpose.msra.mxu0 0.0
    %2089 = vmatprep.subr.mxu0 0.0
    %2090 = vmatpush1.xpose.msra.mxu0 0.0
    %2091 = vmatprep.subr.mxu0 0.0
    %2092 = vmatpush1.xpose.msra.mxu0 0.0
    %2093 = vmatprep.subr.mxu0 0.0
    %2094 = vmatpush1.xpose.msra.mxu0 0.0
    %2095 = vmatprep.subr.mxu0 0.0
    %2096 = vmatpush1.xpose.msra.mxu0 0.0
    %2097 = vmatprep.subr.mxu0 0.0
    %2098 = vmatpush1.xpose.msra.mxu0 0.0
    %2099 = vmatprep.subr.mxu0 0.0
    %2100 = vmatpush1.xpose.msra.mxu0 0.0
    %2101 = vmatprep.subr.mxu0 0.0
    %2102 = vmatpush1.xpose.msra.mxu0 0.0
    %2103 = vmatprep.subr.mxu0 0.0
    %2104 = vmatpush1.xpose.msra.mxu0 0.0
    %2105 = vmatprep.subr.mxu0 0.0
    %2106 = vmatpush1.xpose.msra.mxu0 0.0
    %2107 = vmatprep.subr.mxu0 0.0
    %2108 = vmatpush1.xpose.msra.mxu0 0.0
    %2109 = vmatprep.subr.mxu0 0.0
    %2110 = vmatpush1.xpose.msra.mxu0 0.0
    %2111 = vmatprep.subr.mxu0 0.0
    %2112 = vmatpush1.xpose.msra.mxu0 0.0
    %2113 = vmatprep.mubr.f32.mxu0 0.0
    %2114 = vmatmul.mubr.f32.gmra.mrb[0].mxu0 %v2045
    %v2115 = vpop.f32.mrb[0].mxu0
    %v2116 = vadd.f32 0.0, %v2115
    %v2117 = vpop.f32.mrb[0].mxu0
    %2118 = vdwg.mxu0
    %v2119 = vsel %vm786, %v626, 0
    %v2121 = vsel %vm786, %v571, 0
    %2123 = vmatprep.subr.mxu0 0.0
    %2124 = vmatpush1.xpose.msra.mxu0 %v2121
    %2125 = vmatprep.subr.mxu0 0.0
    %2126 = vmatpush1.xpose.msra.mxu0 0.0
    %2127 = vmatprep.subr.mxu0 0.0
    %2128 = vmatpush1.xpose.msra.mxu0 0.0
    %2129 = vmatprep.subr.mxu0 0.0
    %2130 = vmatpush1.xpose.msra.mxu0 0.0
    %2131 = vmatprep.subr.mxu0 0.0
    %2132 = vmatpush1.xpose.msra.mxu0 0.0
    %2133 = vmatprep.subr.mxu0 0.0
    %2134 = vmatpush1.xpose.msra.mxu0 0.0
    %2135 = vmatprep.subr.mxu0 0.0
    %2136 = vmatpush1.xpose.msra.mxu0 0.0
    %2137 = vmatprep.subr.mxu0 0.0
    %2138 = vmatpush1.xpose.msra.mxu0 0.0
    %2139 = vmatprep.subr.mxu0 0.0
    %2140 = vmatpush1.xpose.msra.mxu0 0.0
    %2141 = vmatprep.subr.mxu0 0.0
    %2142 = vmatpush1.xpose.msra.mxu0 0.0
    %2143 = vmatprep.subr.mxu0 0.0
    %2144 = vmatpush1.xpose.msra.mxu0 0.0
    %2145 = vmatprep.subr.mxu0 0.0
    %2146 = vmatpush1.xpose.msra.mxu0 0.0
    %2147 = vmatprep.subr.mxu0 0.0
    %2148 = vmatpush1.xpose.msra.mxu0 0.0
    %2149 = vmatprep.subr.mxu0 0.0
    %2150 = vmatpush1.xpose.msra.mxu0 0.0
    %2151 = vmatprep.subr.mxu0 0.0
    %2152 = vmatpush1.xpose.msra.mxu0 0.0
    %2153 = vmatprep.subr.mxu0 0.0
    %2154 = vmatpush1.xpose.msra.mxu0 0.0
    %2155 = vmatprep.subr.mxu0 0.0
    %2156 = vmatpush1.xpose.msra.mxu0 0.0
    %2157 = vmatprep.subr.mxu0 0.0
    %2158 = vmatpush1.xpose.msra.mxu0 0.0
    %2159 = vmatprep.subr.mxu0 0.0
    %2160 = vmatpush1.xpose.msra.mxu0 0.0
    %2161 = vmatprep.subr.mxu0 0.0
    %2162 = vmatpush1.xpose.msra.mxu0 0.0
    %2163 = vmatprep.subr.mxu0 0.0
    %2164 = vmatpush1.xpose.msra.mxu0 0.0
    %2165 = vmatprep.subr.mxu0 0.0
    %2166 = vmatpush1.xpose.msra.mxu0 0.0
    %2167 = vmatprep.subr.mxu0 0.0
    %2168 = vmatpush1.xpose.msra.mxu0 0.0
    %2169 = vmatprep.subr.mxu0 0.0
    %2170 = vmatpush1.xpose.msra.mxu0 0.0
    %2171 = vmatprep.subr.mxu0 0.0
    %2172 = vmatpush1.xpose.msra.mxu0 0.0
    %2173 = vmatprep.subr.mxu0 0.0
    %2174 = vmatpush1.xpose.msra.mxu0 0.0
    %2175 = vmatprep.subr.mxu0 0.0
    %2176 = vmatpush1.xpose.msra.mxu0 0.0
    %2177 = vmatprep.subr.mxu0 0.0
    %2178 = vmatpush1.xpose.msra.mxu0 0.0
    %2179 = vmatprep.subr.mxu0 0.0
    %2180 = vmatpush1.xpose.msra.mxu0 0.0
    %2181 = vmatprep.subr.mxu0 0.0
    %2182 = vmatpush1.xpose.msra.mxu0 0.0
    %2183 = vmatprep.subr.mxu0 0.0
    %2184 = vmatpush1.xpose.msra.mxu0 0.0
    %2185 = vmatprep.subr.mxu0 0.0
    %2186 = vmatpush1.xpose.msra.mxu0 0.0
    %2187 = vmatprep.mubr.f32.mxu0 0.0
    %2188 = vmatmul.mubr.f32.gmra.mrb[0].mxu0 %v2119
    %v2189 = vpop.f32.mrb[0].mxu0
    %v2190 = vadd.f32 0.0, %v2189
    %v2191 = vpop.f32.mrb[0].mxu0
    %2192 = vdwg.mxu0
    %v2193 = vsel %vm786, %v627, 0
    %v2195 = vsel %vm786, %v576, 0
    %2197 = vmatprep.subr.mxu0 0.0
    %2198 = vmatpush1.xpose.msra.mxu0 %v2195
    %2199 = vmatprep.subr.mxu0 0.0
    %2200 = vmatpush1.xpose.msra.mxu0 0.0
    %2201 = vmatprep.subr.mxu0 0.0
    %2202 = vmatpush1.xpose.msra.mxu0 0.0
    %2203 = vmatprep.subr.mxu0 0.0
    %2204 = vmatpush1.xpose.msra.mxu0 0.0
    %2205 = vmatprep.subr.mxu0 0.0
    %2206 = vmatpush1.xpose.msra.mxu0 0.0
    %2207 = vmatprep.subr.mxu0 0.0
    %2208 = vmatpush1.xpose.msra.mxu0 0.0
    %2209 = vmatprep.subr.mxu0 0.0
    %2210 = vmatpush1.xpose.msra.mxu0 0.0
    %2211 = vmatprep.subr.mxu0 0.0
    %2212 = vmatpush1.xpose.msra.mxu0 0.0
    %2213 = vmatprep.subr.mxu0 0.0
    %2214 = vmatpush1.xpose.msra.mxu0 0.0
    %2215 = vmatprep.subr.mxu0 0.0
    %2216 = vmatpush1.xpose.msra.mxu0 0.0
    %2217 = vmatprep.subr.mxu0 0.0
    %2218 = vmatpush1.xpose.msra.mxu0 0.0
    %2219 = vmatprep.subr.mxu0 0.0
    %2220 = vmatpush1.xpose.msra.mxu0 0.0
    %2221 = vmatprep.subr.mxu0 0.0
    %2222 = vmatpush1.xpose.msra.mxu0 0.0
    %2223 = vmatprep.subr.mxu0 0.0
    %2224 = vmatpush1.xpose.msra.mxu0 0.0
    %2225 = vmatprep.subr.mxu0 0.0
    %2226 = vmatpush1.xpose.msra.mxu0 0.0
    %2227 = vmatprep.subr.mxu0 0.0
    %2228 = vmatpush1.xpose.msra.mxu0 0.0
    %2229 = vmatprep.subr.mxu0 0.0
    %2230 = vmatpush1.xpose.msra.mxu0 0.0
    %2231 = vmatprep.subr.mxu0 0.0
    %2232 = vmatpush1.xpose.msra.mxu0 0.0
    %2233 = vmatprep.subr.mxu0 0.0
    %2234 = vmatpush1.xpose.msra.mxu0 0.0
    %2235 = vmatprep.subr.mxu0 0.0
    %2236 = vmatpush1.xpose.msra.mxu0 0.0
    %2237 = vmatprep.subr.mxu0 0.0
    %2238 = vmatpush1.xpose.msra.mxu0 0.0
    %2239 = vmatprep.subr.mxu0 0.0
    %2240 = vmatpush1.xpose.msra.mxu0 0.0
    %2241 = vmatprep.subr.mxu0 0.0
    %2242 = vmatpush1.xpose.msra.mxu0 0.0
    %2243 = vmatprep.subr.mxu0 0.0
    %2244 = vmatpush1.xpose.msra.mxu0 0.0
    %2245 = vmatprep.subr.mxu0 0.0
    %2246 = vmatpush1.xpose.msra.mxu0 0.0
    %2247 = vmatprep.subr.mxu0 0.0
    %2248 = vmatpush1.xpose.msra.mxu0 0.0
    %2249 = vmatprep.subr.mxu0 0.0
    %2250 = vmatpush1.xpose.msra.mxu0 0.0
    %2251 = vmatprep.subr.mxu0 0.0
    %2252 = vmatpush1.xpose.msra.mxu0 0.0
    %2253 = vmatprep.subr.mxu0 0.0
    %2254 = vmatpush1.xpose.msra.mxu0 0.0
    %2255 = vmatprep.subr.mxu0 0.0
    %2256 = vmatpush1.xpose.msra.mxu0 0.0
    %2257 = vmatprep.subr.mxu0 0.0
    %2258 = vmatpush1.xpose.msra.mxu0 0.0
    %2259 = vmatprep.subr.mxu0 0.0
    %2260 = vmatpush1.xpose.msra.mxu0 0.0
    %2261 = vmatprep.mubr.f32.mxu0 0.0
    %2262 = vmatmul.mubr.f32.gmra.mrb[0].mxu0 %v2193
    %v2263 = vpop.f32.mrb[0].mxu0
    %v2264 = vadd.f32 0.0, %v2263
    %v2265 = vpop.f32.mrb[0].mxu0
    %2266 = vdwg.mxu0
    %v2267 = vsel %vm786, %v628, 0
    %v2269 = vsel %vm786, %v581, 0
    %2271 = vmatprep.subr.mxu0 0.0
    %2272 = vmatpush1.xpose.msra.mxu0 %v2269
    %2273 = vmatprep.subr.mxu0 0.0
    %2274 = vmatpush1.xpose.msra.mxu0 0.0
    %2275 = vmatprep.subr.mxu0 0.0
    %2276 = vmatpush1.xpose.msra.mxu0 0.0
    %2277 = vmatprep.subr.mxu0 0.0
    %2278 = vmatpush1.xpose.msra.mxu0 0.0
    %2279 = vmatprep.subr.mxu0 0.0
    %2280 = vmatpush1.xpose.msra.mxu0 0.0
    %2281 = vmatprep.subr.mxu0 0.0
    %2282 = vmatpush1.xpose.msra.mxu0 0.0
    %2283 = vmatprep.subr.mxu0 0.0
    %2284 = vmatpush1.xpose.msra.mxu0 0.0
    %2285 = vmatprep.subr.mxu0 0.0
    %2286 = vmatpush1.xpose.msra.mxu0 0.0
    %2287 = vmatprep.subr.mxu0 0.0
    %2288 = vmatpush1.xpose.msra.mxu0 0.0
    %2289 = vmatprep.subr.mxu0 0.0
    %2290 = vmatpush1.xpose.msra.mxu0 0.0
    %2291 = vmatprep.subr.mxu0 0.0
    %2292 = vmatpush1.xpose.msra.mxu0 0.0
    %2293 = vmatprep.subr.mxu0 0.0
    %2294 = vmatpush1.xpose.msra.mxu0 0.0
    %2295 = vmatprep.subr.mxu0 0.0
    %2296 = vmatpush1.xpose.msra.mxu0 0.0
    %2297 = vmatprep.subr.mxu0 0.0
    %2298 = vmatpush1.xpose.msra.mxu0 0.0
    %2299 = vmatprep.subr.mxu0 0.0
    %2300 = vmatpush1.xpose.msra.mxu0 0.0
    %2301 = vmatprep.subr.mxu0 0.0
    %2302 = vmatpush1.xpose.msra.mxu0 0.0
    %2303 = vmatprep.subr.mxu0 0.0
    %2304 = vmatpush1.xpose.msra.mxu0 0.0
    %2305 = vmatprep.subr.mxu0 0.0
    %2306 = vmatpush1.xpose.msra.mxu0 0.0
    %2307 = vmatprep.subr.mxu0 0.0
    %2308 = vmatpush1.xpose.msra.mxu0 0.0
    %2309 = vmatprep.subr.mxu0 0.0
    %2310 = vmatpush1.xpose.msra.mxu0 0.0
    %2311 = vmatprep.subr.mxu0 0.0
    %2312 = vmatpush1.xpose.msra.mxu0 0.0
    %2313 = vmatprep.subr.mxu0 0.0
    %2314 = vmatpush1.xpose.msra.mxu0 0.0
    %2315 = vmatprep.subr.mxu0 0.0
    %2316 = vmatpush1.xpose.msra.mxu0 0.0
    %2317 = vmatprep.subr.mxu0 0.0
    %2318 = vmatpush1.xpose.msra.mxu0 0.0
    %2319 = vmatprep.subr.mxu0 0.0
    %2320 = vmatpush1.xpose.msra.mxu0 0.0
    %2321 = vmatprep.subr.mxu0 0.0
    %2322 = vmatpush1.xpose.msra.mxu0 0.0
    %2323 = vmatprep.subr.mxu0 0.0
    %2324 = vmatpush1.xpose.msra.mxu0 0.0
    %2325 = vmatprep.subr.mxu0 0.0
    %2326 = vmatpush1.xpose.msra.mxu0 0.0
    %2327 = vmatprep.subr.mxu0 0.0
    %2328 = vmatpush1.xpose.msra.mxu0 0.0
    %2329 = vmatprep.subr.mxu0 0.0
    %2330 = vmatpush1.xpose.msra.mxu0 0.0
    %2331 = vmatprep.subr.mxu0 0.0
    %2332 = vmatpush1.xpose.msra.mxu0 0.0
    %2333 = vmatprep.subr.mxu0 0.0
    %2334 = vmatpush1.xpose.msra.mxu0 0.0
    %2335 = vmatprep.mubr.f32.mxu0 0.0
    %2336 = vmatmul.mubr.f32.gmra.mrb[0].mxu0 %v2267
    %v2337 = vpop.f32.mrb[0].mxu0
    %v2338 = vadd.f32 0.0, %v2337
    %v2339 = vpop.f32.mrb[0].mxu0
    %2340 = vdwg.mxu0
    %v2341 = vsel %vm786, %v629, 0
    %v2343 = vsel %vm786, %v586, 0
    %2345 = vmatprep.subr.mxu0 0.0
    %2346 = vmatpush1.xpose.msra.mxu0 %v2343
    %2347 = vmatprep.subr.mxu0 0.0
    %2348 = vmatpush1.xpose.msra.mxu0 0.0
    %2349 = vmatprep.subr.mxu0 0.0
    %2350 = vmatpush1.xpose.msra.mxu0 0.0
    %2351 = vmatprep.subr.mxu0 0.0
    %2352 = vmatpush1.xpose.msra.mxu0 0.0
    %2353 = vmatprep.subr.mxu0 0.0
    %2354 = vmatpush1.xpose.msra.mxu0 0.0
    %2355 = vmatprep.subr.mxu0 0.0
    %2356 = vmatpush1.xpose.msra.mxu0 0.0
    %2357 = vmatprep.subr.mxu0 0.0
    %2358 = vmatpush1.xpose.msra.mxu0 0.0
    %2359 = vmatprep.subr.mxu0 0.0
    %2360 = vmatpush1.xpose.msra.mxu0 0.0
    %2361 = vmatprep.subr.mxu0 0.0
    %2362 = vmatpush1.xpose.msra.mxu0 0.0
    %2363 = vmatprep.subr.mxu0 0.0
    %2364 = vmatpush1.xpose.msra.mxu0 0.0
    %2365 = vmatprep.subr.mxu0 0.0
    %2366 = vmatpush1.xpose.msra.mxu0 0.0
    %2367 = vmatprep.subr.mxu0 0.0
    %2368 = vmatpush1.xpose.msra.mxu0 0.0
    %2369 = vmatprep.subr.mxu0 0.0
    %2370 = vmatpush1.xpose.msra.mxu0 0.0
    %2371 = vmatprep.subr.mxu0 0.0
    %2372 = vmatpush1.xpose.msra.mxu0 0.0
    %2373 = vmatprep.subr.mxu0 0.0
    %2374 = vmatpush1.xpose.msra.mxu0 0.0
    %2375 = vmatprep.subr.mxu0 0.0
    %2376 = vmatpush1.xpose.msra.mxu0 0.0
    %2377 = vmatprep.subr.mxu0 0.0
    %2378 = vmatpush1.xpose.msra.mxu0 0.0
    %2379 = vmatprep.subr.mxu0 0.0
    %2380 = vmatpush1.xpose.msra.mxu0 0.0
    %2381 = vmatprep.subr.mxu0 0.0
    %2382 = vmatpush1.xpose.msra.mxu0 0.0
    %2383 = vmatprep.subr.mxu0 0.0
    %2384 = vmatpush1.xpose.msra.mxu0 0.0
    %2385 = vmatprep.subr.mxu0 0.0
    %2386 = vmatpush1.xpose.msra.mxu0 0.0
    %2387 = vmatprep.subr.mxu0 0.0
    %2388 = vmatpush1.xpose.msra.mxu0 0.0
    %2389 = vmatprep.subr.mxu0 0.0
    %2390 = vmatpush1.xpose.msra.mxu0 0.0
    %2391 = vmatprep.subr.mxu0 0.0
    %2392 = vmatpush1.xpose.msra.mxu0 0.0
    %2393 = vmatprep.subr.mxu0 0.0
    %2394 = vmatpush1.xpose.msra.mxu0 0.0
    %2395 = vmatprep.subr.mxu0 0.0
    %2396 = vmatpush1.xpose.msra.mxu0 0.0
    %2397 = vmatprep.subr.mxu0 0.0
    %2398 = vmatpush1.xpose.msra.mxu0 0.0
    %2399 = vmatprep.subr.mxu0 0.0
    %2400 = vmatpush1.xpose.msra.mxu0 0.0
    %2401 = vmatprep.subr.mxu0 0.0
    %2402 = vmatpush1.xpose.msra.mxu0 0.0
    %2403 = vmatprep.subr.mxu0 0.0
    %2404 = vmatpush1.xpose.msra.mxu0 0.0
    %2405 = vmatprep.subr.mxu0 0.0
    %2406 = vmatpush1.xpose.msra.mxu0 0.0
    %2407 = vmatprep.subr.mxu0 0.0
    %2408 = vmatpush1.xpose.msra.mxu0 0.0
    %2409 = vmatprep.mubr.f32.mxu0 0.0
    %2410 = vmatmul.mubr.f32.gmra.mrb[0].mxu0 %v2341
    %v2411 = vpop.f32.mrb[0].mxu0
    %v2412 = vadd.f32 0.0, %v2411
    %v2413 = vpop.f32.mrb[0].mxu0
    %2414 = vdwg.mxu0
    %v2415 = vsel %vm786, %v630, 0
    %v2417 = vsel %vm786, %v591, 0
    %2419 = vmatprep.subr.mxu0 0.0
    %2420 = vmatpush1.xpose.msra.mxu0 %v2417
    %2421 = vmatprep.subr.mxu0 0.0
    %2422 = vmatpush1.xpose.msra.mxu0 0.0
    %2423 = vmatprep.subr.mxu0 0.0
    %2424 = vmatpush1.xpose.msra.mxu0 0.0
    %2425 = vmatprep.subr.mxu0 0.0
    %2426 = vmatpush1.xpose.msra.mxu0 0.0
    %2427 = vmatprep.subr.mxu0 0.0
    %2428 = vmatpush1.xpose.msra.mxu0 0.0
    %2429 = vmatprep.subr.mxu0 0.0
    %2430 = vmatpush1.xpose.msra.mxu0 0.0
    %2431 = vmatprep.subr.mxu0 0.0
    %2432 = vmatpush1.xpose.msra.mxu0 0.0
    %2433 = vmatprep.subr.mxu0 0.0
    %2434 = vmatpush1.xpose.msra.mxu0 0.0
    %2435 = vmatprep.subr.mxu0 0.0
    %2436 = vmatpush1.xpose.msra.mxu0 0.0
    %2437 = vmatprep.subr.mxu0 0.0
    %2438 = vmatpush1.xpose.msra.mxu0 0.0
    %2439 = vmatprep.subr.mxu0 0.0
    %2440 = vmatpush1.xpose.msra.mxu0 0.0
    %2441 = vmatprep.subr.mxu0 0.0
    %2442 = vmatpush1.xpose.msra.mxu0 0.0
    %2443 = vmatprep.subr.mxu0 0.0
    %2444 = vmatpush1.xpose.msra.mxu0 0.0
    %2445 = vmatprep.subr.mxu0 0.0
    %2446 = vmatpush1.xpose.msra.mxu0 0.0
    %2447 = vmatprep.subr.mxu0 0.0
    %2448 = vmatpush1.xpose.msra.mxu0 0.0
    %2449 = vmatprep.subr.mxu0 0.0
    %2450 = vmatpush1.xpose.msra.mxu0 0.0
    %2451 = vmatprep.subr.mxu0 0.0
    %2452 = vmatpush1.xpose.msra.mxu0 0.0
    %2453 = vmatprep.subr.mxu0 0.0
    %2454 = vmatpush1.xpose.msra.mxu0 0.0
    %2455 = vmatprep.subr.mxu0 0.0
    %2456 = vmatpush1.xpose.msra.mxu0 0.0
    %2457 = vmatprep.subr.mxu0 0.0
    %2458 = vmatpush1.xpose.msra.mxu0 0.0
    %2459 = vmatprep.subr.mxu0 0.0
    %2460 = vmatpush1.xpose.msra.mxu0 0.0
    %2461 = vmatprep.subr.mxu0 0.0
    %2462 = vmatpush1.xpose.msra.mxu0 0.0
    %2463 = vmatprep.subr.mxu0 0.0
    %2464 = vmatpush1.xpose.msra.mxu0 0.0
    %2465 = vmatprep.subr.mxu0 0.0
    %2466 = vmatpush1.xpose.msra.mxu0 0.0
    %2467 = vmatprep.subr.mxu0 0.0
    %2468 = vmatpush1.xpose.msra.mxu0 0.0
    %2469 = vmatprep.subr.mxu0 0.0
    %2470 = vmatpush1.xpose.msra.mxu0 0.0
    %2471 = vmatprep.subr.mxu0 0.0
    %2472 = vmatpush1.xpose.msra.mxu0 0.0
    %2473 = vmatprep.subr.mxu0 0.0
    %2474 = vmatpush1.xpose.msra.mxu0 0.0
    %2475 = vmatprep.subr.mxu0 0.0
    %2476 = vmatpush1.xpose.msra.mxu0 0.0
    %2477 = vmatprep.subr.mxu0 0.0
    %2478 = vmatpush1.xpose.msra.mxu0 0.0
    %2479 = vmatprep.subr.mxu0 0.0
    %2480 = vmatpush1.xpose.msra.mxu0 0.0
    %2481 = vmatprep.subr.mxu0 0.0
    %2482 = vmatpush1.xpose.msra.mxu0 0.0
    %2483 = vmatprep.mubr.f32.mxu0 0.0
    %2484 = vmatmul.mubr.f32.gmra.mrb[0].mxu0 %v2415
    %v2485 = vpop.f32.mrb[0].mxu0
    %v2486 = vadd.f32 0.0, %v2485
    %v2487 = vpop.f32.mrb[0].mxu0
    %2488 = vdwg.mxu0
    %v2489 = vsel %vm786, %v631, 0
    %v2491 = vsel %vm786, %v596, 0
    %2493 = vmatprep.subr.mxu0 0.0
    %2494 = vmatpush1.xpose.msra.mxu0 %v2491
    %2495 = vmatprep.subr.mxu0 0.0
    %2496 = vmatpush1.xpose.msra.mxu0 0.0
    %2497 = vmatprep.subr.mxu0 0.0
    %2498 = vmatpush1.xpose.msra.mxu0 0.0
    %2499 = vmatprep.subr.mxu0 0.0
    %2500 = vmatpush1.xpose.msra.mxu0 0.0
    %2501 = vmatprep.subr.mxu0 0.0
    %2502 = vmatpush1.xpose.msra.mxu0 0.0
    %2503 = vmatprep.subr.mxu0 0.0
    %2504 = vmatpush1.xpose.msra.mxu0 0.0
    %2505 = vmatprep.subr.mxu0 0.0
    %2506 = vmatpush1.xpose.msra.mxu0 0.0
    %2507 = vmatprep.subr.mxu0 0.0
    %2508 = vmatpush1.xpose.msra.mxu0 0.0
    %2509 = vmatprep.subr.mxu0 0.0
    %2510 = vmatpush1.xpose.msra.mxu0 0.0
    %2511 = vmatprep.subr.mxu0 0.0
    %2512 = vmatpush1.xpose.msra.mxu0 0.0
    %2513 = vmatprep.subr.mxu0 0.0
    %2514 = vmatpush1.xpose.msra.mxu0 0.0
    %2515 = vmatprep.subr.mxu0 0.0
    %2516 = vmatpush1.xpose.msra.mxu0 0.0
    %2517 = vmatprep.subr.mxu0 0.0
    %2518 = vmatpush1.xpose.msra.mxu0 0.0
    %2519 = vmatprep.subr.mxu0 0.0
    %2520 = vmatpush1.xpose.msra.mxu0 0.0
    %2521 = vmatprep.subr.mxu0 0.0
    %2522 = vmatpush1.xpose.msra.mxu0 0.0
    %2523 = vmatprep.subr.mxu0 0.0
    %2524 = vmatpush1.xpose.msra.mxu0 0.0
    %2525 = vmatprep.subr.mxu0 0.0
    %2526 = vmatpush1.xpose.msra.mxu0 0.0
    %2527 = vmatprep.subr.mxu0 0.0
    %2528 = vmatpush1.xpose.msra.mxu0 0.0
    %2529 = vmatprep.subr.mxu0 0.0
    %2530 = vmatpush1.xpose.msra.mxu0 0.0
    %2531 = vmatprep.subr.mxu0 0.0
    %2532 = vmatpush1.xpose.msra.mxu0 0.0
    %2533 = vmatprep.subr.mxu0 0.0
    %2534 = vmatpush1.xpose.msra.mxu0 0.0
    %2535 = vmatprep.subr.mxu0 0.0
    %2536 = vmatpush1.xpose.msra.mxu0 0.0
    %2537 = vmatprep.subr.mxu0 0.0
    %2538 = vmatpush1.xpose.msra.mxu0 0.0
    %2539 = vmatprep.subr.mxu0 0.0
    %2540 = vmatpush1.xpose.msra.mxu0 0.0
    %2541 = vmatprep.subr.mxu0 0.0
    %2542 = vmatpush1.xpose.msra.mxu0 0.0
    %2543 = vmatprep.subr.mxu0 0.0
    %2544 = vmatpush1.xpose.msra.mxu0 0.0
    %2545 = vmatprep.subr.mxu0 0.0
    %2546 = vmatpush1.xpose.msra.mxu0 0.0
    %2547 = vmatprep.subr.mxu0 0.0
    %2548 = vmatpush1.xpose.msra.mxu0 0.0
    %2549 = vmatprep.subr.mxu0 0.0
    %2550 = vmatpush1.xpose.msra.mxu0 0.0
    %2551 = vmatprep.subr.mxu0 0.0
    %2552 = vmatpush1.xpose.msra.mxu0 0.0
    %2553 = vmatprep.subr.mxu0 0.0
    %2554 = vmatpush1.xpose.msra.mxu0 0.0
    %2555 = vmatprep.subr.mxu0 0.0
    %2556 = vmatpush1.xpose.msra.mxu0 0.0
    %2557 = vmatprep.mubr.f32.mxu0 0.0
    %2558 = vmatmul.mubr.f32.gmra.mrb[0].mxu0 %v2489
    %v2559 = vpop.f32.mrb[0].mxu0
    %v2560 = vadd.f32 0.0, %v2559
    %v2561 = vpop.f32.mrb[0].mxu0
    %2562 = vdwg.mxu0
    %v2563 = vsel %vm786, %v699, 0
    %v2565 = vsel %vm786, %v771, 0
    %2567 = vmatprep.subr.mxu0 0.0
    %2568 = vmatpush1.xpose.msra.mxu0 %v2565
    %2569 = vmatprep.subr.mxu0 0.0
    %2570 = vmatpush1.xpose.msra.mxu0 0.0
    %2571 = vmatprep.subr.mxu0 0.0
    %2572 = vmatpush1.xpose.msra.mxu0 0.0
    %2573 = vmatprep.subr.mxu0 0.0
    %2574 = vmatpush1.xpose.msra.mxu0 0.0
    %2575 = vmatprep.subr.mxu0 0.0
    %2576 = vmatpush1.xpose.msra.mxu0 0.0
    %2577 = vmatprep.subr.mxu0 0.0
    %2578 = vmatpush1.xpose.msra.mxu0 0.0
    %2579 = vmatprep.subr.mxu0 0.0
    %2580 = vmatpush1.xpose.msra.mxu0 0.0
    %2581 = vmatprep.subr.mxu0 0.0
    %2582 = vmatpush1.xpose.msra.mxu0 0.0
    %2583 = vmatprep.subr.mxu0 0.0
    %2584 = vmatpush1.xpose.msra.mxu0 0.0
    %2585 = vmatprep.subr.mxu0 0.0
    %2586 = vmatpush1.xpose.msra.mxu0 0.0
    %2587 = vmatprep.subr.mxu0 0.0
    %2588 = vmatpush1.xpose.msra.mxu0 0.0
    %2589 = vmatprep.subr.mxu0 0.0
    %2590 = vmatpush1.xpose.msra.mxu0 0.0
    %2591 = vmatprep.subr.mxu0 0.0
    %2592 = vmatpush1.xpose.msra.mxu0 0.0
    %2593 = vmatprep.subr.mxu0 0.0
    %2594 = vmatpush1.xpose.msra.mxu0 0.0
    %2595 = vmatprep.subr.mxu0 0.0
    %2596 = vmatpush1.xpose.msra.mxu0 0.0
    %2597 = vmatprep.subr.mxu0 0.0
    %2598 = vmatpush1.xpose.msra.mxu0 0.0
    %2599 = vmatprep.subr.mxu0 0.0
    %2600 = vmatpush1.xpose.msra.mxu0 0.0
    %2601 = vmatprep.subr.mxu0 0.0
    %2602 = vmatpush1.xpose.msra.mxu0 0.0
    %2603 = vmatprep.subr.mxu0 0.0
    %2604 = vmatpush1.xpose.msra.mxu0 0.0
    %2605 = vmatprep.subr.mxu0 0.0
    %2606 = vmatpush1.xpose.msra.mxu0 0.0
    %2607 = vmatprep.subr.mxu0 0.0
    %2608 = vmatpush1.xpose.msra.mxu0 0.0
    %2609 = vmatprep.subr.mxu0 0.0
    %2610 = vmatpush1.xpose.msra.mxu0 0.0
    %2611 = vmatprep.subr.mxu0 0.0
    %2612 = vmatpush1.xpose.msra.mxu0 0.0
    %2613 = vmatprep.subr.mxu0 0.0
    %2614 = vmatpush1.xpose.msra.mxu0 0.0
    %2615 = vmatprep.subr.mxu0 0.0
    %2616 = vmatpush1.xpose.msra.mxu0 0.0
    %2617 = vmatprep.subr.mxu0 0.0
    %2618 = vmatpush1.xpose.msra.mxu0 0.0
    %2619 = vmatprep.subr.mxu0 0.0
    %2620 = vmatpush1.xpose.msra.mxu0 0.0
    %2621 = vmatprep.subr.mxu0 0.0
    %2622 = vmatpush1.xpose.msra.mxu0 0.0
    %2623 = vmatprep.subr.mxu0 0.0
    %2624 = vmatpush1.xpose.msra.mxu0 0.0
    %2625 = vmatprep.subr.mxu0 0.0
    %2626 = vmatpush1.xpose.msra.mxu0 0.0
    %2627 = vmatprep.subr.mxu0 0.0
    %2628 = vmatpush1.xpose.msra.mxu0 0.0
    %2629 = vmatprep.subr.mxu0 0.0
    %2630 = vmatpush1.xpose.msra.mxu0 0.0
    %2631 = vmatprep.mubr.f32.mxu0 0.0
    %2632 = vmatmul.mubr.f32.gmra.mrb[0].mxu0 %v2563
    %v2633 = vpop.f32.mrb[0].mxu0
    %v2634 = vadd.f32 0.0, %v2633
    %v2635 = vpop.f32.mrb[0].mxu0
    %2636 = vdwg.mxu0
    %v2637 = vsel %vm786, %v701, 0
    %v2639 = vsel %vm786, %v773, 0
    %2641 = vmatprep.subr.mxu0 0.0
    %2642 = vmatpush1.xpose.msra.mxu0 %v2639
    %2643 = vmatprep.subr.mxu0 0.0
    %2644 = vmatpush1.xpose.msra.mxu0 0.0
    %2645 = vmatprep.subr.mxu0 0.0
    %2646 = vmatpush1.xpose.msra.mxu0 0.0
    %2647 = vmatprep.subr.mxu0 0.0
    %2648 = vmatpush1.xpose.msra.mxu0 0.0
    %2649 = vmatprep.subr.mxu0 0.0
    %2650 = vmatpush1.xpose.msra.mxu0 0.0
    %2651 = vmatprep.subr.mxu0 0.0
    %2652 = vmatpush1.xpose.msra.mxu0 0.0
    %2653 = vmatprep.subr.mxu0 0.0
    %2654 = vmatpush1.xpose.msra.mxu0 0.0
    %2655 = vmatprep.subr.mxu0 0.0
    %2656 = vmatpush1.xpose.msra.mxu0 0.0
    %2657 = vmatprep.subr.mxu0 0.0
    %2658 = vmatpush1.xpose.msra.mxu0 0.0
    %2659 = vmatprep.subr.mxu0 0.0
    %2660 = vmatpush1.xpose.msra.mxu0 0.0
    %2661 = vmatprep.subr.mxu0 0.0
    %2662 = vmatpush1.xpose.msra.mxu0 0.0
    %2663 = vmatprep.subr.mxu0 0.0
    %2664 = vmatpush1.xpose.msra.mxu0 0.0
    %2665 = vmatprep.subr.mxu0 0.0
    %2666 = vmatpush1.xpose.msra.mxu0 0.0
    %2667 = vmatprep.subr.mxu0 0.0
    %2668 = vmatpush1.xpose.msra.mxu0 0.0
    %2669 = vmatprep.subr.mxu0 0.0
    %2670 = vmatpush1.xpose.msra.mxu0 0.0
    %2671 = vmatprep.subr.mxu0 0.0
    %2672 = vmatpush1.xpose.msra.mxu0 0.0
    %2673 = vmatprep.subr.mxu0 0.0
    %2674 = vmatpush1.xpose.msra.mxu0 0.0
    %2675 = vmatprep.subr.mxu0 0.0
    %2676 = vmatpush1.xpose.msra.mxu0 0.0
    %2677 = vmatprep.subr.mxu0 0.0
    %2678 = vmatpush1.xpose.msra.mxu0 0.0
    %2679 = vmatprep.subr.mxu0 0.0
    %2680 = vmatpush1.xpose.msra.mxu0 0.0
    %2681 = vmatprep.subr.mxu0 0.0
    %2682 = vmatpush1.xpose.msra.mxu0 0.0
    %2683 = vmatprep.subr.mxu0 0.0
    %2684 = vmatpush1.xpose.msra.mxu0 0.0
    %2685 = vmatprep.subr.mxu0 0.0
    %2686 = vmatpush1.xpose.msra.mxu0 0.0
    %2687 = vmatprep.subr.mxu0 0.0
    %2688 = vmatpush1.xpose.msra.mxu0 0.0
    %2689 = vmatprep.subr.mxu0 0.0
    %2690 = vmatpush1.xpose.msra.mxu0 0.0
    %2691 = vmatprep.subr.mxu0 0.0
    %2692 = vmatpush1.xpose.msra.mxu0 0.0
    %2693 = vmatprep.subr.mxu0 0.0
    %2694 = vmatpush1.xpose.msra.mxu0 0.0
    %2695 = vmatprep.subr.mxu0 0.0
    %2696 = vmatpush1.xpose.msra.mxu0 0.0
    %2697 = vmatprep.subr.mxu0 0.0
    %2698 = vmatpush1.xpose.msra.mxu0 0.0
    %2699 = vmatprep.subr.mxu0 0.0
    %2700 = vmatpush1.xpose.msra.mxu0 0.0
    %2701 = vmatprep.subr.mxu0 0.0
    %2702 = vmatpush1.xpose.msra.mxu0 0.0
    %2703 = vmatprep.subr.mxu0 0.0
    %2704 = vmatpush1.xpose.msra.mxu0 0.0
    %2705 = vmatprep.mubr.f32.mxu0 0.0
    %2706 = vmatmul.mubr.f32.gmra.mrb[0].mxu0 %v2637
    %v2707 = vpop.f32.mrb[0].mxu0
    %v2708 = vadd.f32 0.0, %v2707
    %v2709 = vpop.f32.mrb[0].mxu0
    %2710 = vdwg.mxu0
    %v2711 = vsel %vm786, %v703, 0
    %v2713 = vsel %vm786, %v775, 0
    %2715 = vmatprep.subr.mxu0 0.0
    %2716 = vmatpush1.xpose.msra.mxu0 %v2713
    %2717 = vmatprep.subr.mxu0 0.0
    %2718 = vmatpush1.xpose.msra.mxu0 0.0
    %2719 = vmatprep.subr.mxu0 0.0
    %2720 = vmatpush1.xpose.msra.mxu0 0.0
    %2721 = vmatprep.subr.mxu0 0.0
    %2722 = vmatpush1.xpose.msra.mxu0 0.0
    %2723 = vmatprep.subr.mxu0 0.0
    %2724 = vmatpush1.xpose.msra.mxu0 0.0
    %2725 = vmatprep.subr.mxu0 0.0
    %2726 = vmatpush1.xpose.msra.mxu0 0.0
    %2727 = vmatprep.subr.mxu0 0.0
    %2728 = vmatpush1.xpose.msra.mxu0 0.0
    %2729 = vmatprep.subr.mxu0 0.0
    %2730 = vmatpush1.xpose.msra.mxu0 0.0
    %2731 = vmatprep.subr.mxu0 0.0
    %2732 = vmatpush1.xpose.msra.mxu0 0.0
    %2733 = vmatprep.subr.mxu0 0.0
    %2734 = vmatpush1.xpose.msra.mxu0 0.0
    %2735 = vmatprep.subr.mxu0 0.0
    %2736 = vmatpush1.xpose.msra.mxu0 0.0
    %2737 = vmatprep.subr.mxu0 0.0
    %2738 = vmatpush1.xpose.msra.mxu0 0.0
    %2739 = vmatprep.subr.mxu0 0.0
    %2740 = vmatpush1.xpose.msra.mxu0 0.0
    %2741 = vmatprep.subr.mxu0 0.0
    %2742 = vmatpush1.xpose.msra.mxu0 0.0
    %2743 = vmatprep.subr.mxu0 0.0
    %2744 = vmatpush1.xpose.msra.mxu0 0.0
    %2745 = vmatprep.subr.mxu0 0.0
    %2746 = vmatpush1.xpose.msra.mxu0 0.0
    %2747 = vmatprep.subr.mxu0 0.0
    %2748 = vmatpush1.xpose.msra.mxu0 0.0
    %2749 = vmatprep.subr.mxu0 0.0
    %2750 = vmatpush1.xpose.msra.mxu0 0.0
    %2751 = vmatprep.subr.mxu0 0.0
    %2752 = vmatpush1.xpose.msra.mxu0 0.0
    %2753 = vmatprep.subr.mxu0 0.0
    %2754 = vmatpush1.xpose.msra.mxu0 0.0
    %2755 = vmatprep.subr.mxu0 0.0
    %2756 = vmatpush1.xpose.msra.mxu0 0.0
    %2757 = vmatprep.subr.mxu0 0.0
    %2758 = vmatpush1.xpose.msra.mxu0 0.0
    %2759 = vmatprep.subr.mxu0 0.0
    %2760 = vmatpush1.xpose.msra.mxu0 0.0
    %2761 = vmatprep.subr.mxu0 0.0
    %2762 = vmatpush1.xpose.msra.mxu0 0.0
    %2763 = vmatprep.subr.mxu0 0.0
    %2764 = vmatpush1.xpose.msra.mxu0 0.0
    %2765 = vmatprep.subr.mxu0 0.0
    %2766 = vmatpush1.xpose.msra.mxu0 0.0
    %2767 = vmatprep.subr.mxu0 0.0
    %2768 = vmatpush1.xpose.msra.mxu0 0.0
    %2769 = vmatprep.subr.mxu0 0.0
    %2770 = vmatpush1.xpose.msra.mxu0 0.0
    %2771 = vmatprep.subr.mxu0 0.0
    %2772 = vmatpush1.xpose.msra.mxu0 0.0
    %2773 = vmatprep.subr.mxu0 0.0
    %2774 = vmatpush1.xpose.msra.mxu0 0.0
    %2775 = vmatprep.subr.mxu0 0.0
    %2776 = vmatpush1.xpose.msra.mxu0 0.0
    %2777 = vmatprep.subr.mxu0 0.0
    %2778 = vmatpush1.xpose.msra.mxu0 0.0
    %2779 = vmatprep.mubr.f32.mxu0 0.0
    %2780 = vmatmul.mubr.f32.gmra.mrb[0].mxu0 %v2711
    %v2781 = vpop.f32.mrb[0].mxu0
    %v2782 = vadd.f32 0.0, %v2781
    %v2783 = vpop.f32.mrb[0].mxu0
    %2784 = vdwg.mxu0
    %v2785 = vsel %vm786, %v705, 0
    %v2787 = vsel %vm786, %v777, 0
    %2789 = vmatprep.subr.mxu0 0.0
    %2790 = vmatpush1.xpose.msra.mxu0 %v2787
    %2791 = vmatprep.subr.mxu0 0.0
    %2792 = vmatpush1.xpose.msra.mxu0 0.0
    %2793 = vmatprep.subr.mxu0 0.0
    %2794 = vmatpush1.xpose.msra.mxu0 0.0
    %2795 = vmatprep.subr.mxu0 0.0
    %2796 = vmatpush1.xpose.msra.mxu0 0.0
    %2797 = vmatprep.subr.mxu0 0.0
    %2798 = vmatpush1.xpose.msra.mxu0 0.0
    %2799 = vmatprep.subr.mxu0 0.0
    %2800 = vmatpush1.xpose.msra.mxu0 0.0
    %2801 = vmatprep.subr.mxu0 0.0
    %2802 = vmatpush1.xpose.msra.mxu0 0.0
    %2803 = vmatprep.subr.mxu0 0.0
    %2804 = vmatpush1.xpose.msra.mxu0 0.0
    %2805 = vmatprep.subr.mxu0 0.0
    %2806 = vmatpush1.xpose.msra.mxu0 0.0
    %2807 = vmatprep.subr.mxu0 0.0
    %2808 = vmatpush1.xpose.msra.mxu0 0.0
    %2809 = vmatprep.subr.mxu0 0.0
    %2810 = vmatpush1.xpose.msra.mxu0 0.0
    %2811 = vmatprep.subr.mxu0 0.0
    %2812 = vmatpush1.xpose.msra.mxu0 0.0
    %2813 = vmatprep.subr.mxu0 0.0
    %2814 = vmatpush1.xpose.msra.mxu0 0.0
    %2815 = vmatprep.subr.mxu0 0.0
    %2816 = vmatpush1.xpose.msra.mxu0 0.0
    %2817 = vmatprep.subr.mxu0 0.0
    %2818 = vmatpush1.xpose.msra.mxu0 0.0
    %2819 = vmatprep.subr.mxu0 0.0
    %2820 = vmatpush1.xpose.msra.mxu0 0.0
    %2821 = vmatprep.subr.mxu0 0.0
    %2822 = vmatpush1.xpose.msra.mxu0 0.0
    %2823 = vmatprep.subr.mxu0 0.0
    %2824 = vmatpush1.xpose.msra.mxu0 0.0
    %2825 = vmatprep.subr.mxu0 0.0
    %2826 = vmatpush1.xpose.msra.mxu0 0.0
    %2827 = vmatprep.subr.mxu0 0.0
    %2828 = vmatpush1.xpose.msra.mxu0 0.0
    %2829 = vmatprep.subr.mxu0 0.0
    %2830 = vmatpush1.xpose.msra.mxu0 0.0
    %2831 = vmatprep.subr.mxu0 0.0
    %2832 = vmatpush1.xpose.msra.mxu0 0.0
    %2833 = vmatprep.subr.mxu0 0.0
    %2834 = vmatpush1.xpose.msra.mxu0 0.0
    %2835 = vmatprep.subr.mxu0 0.0
    %2836 = vmatpush1.xpose.msra.mxu0 0.0
    %2837 = vmatprep.subr.mxu0 0.0
    %2838 = vmatpush1.xpose.msra.mxu0 0.0
    %2839 = vmatprep.subr.mxu0 0.0
    %2840 = vmatpush1.xpose.msra.mxu0 0.0
    %2841 = vmatprep.subr.mxu0 0.0
    %2842 = vmatpush1.xpose.msra.mxu0 0.0
    %2843 = vmatprep.subr.mxu0 0.0
    %2844 = vmatpush1.xpose.msra.mxu0 0.0
    %2845 = vmatprep.subr.mxu0 0.0
    %2846 = vmatpush1.xpose.msra.mxu0 0.0
    %2847 = vmatprep.subr.mxu0 0.0
    %2848 = vmatpush1.xpose.msra.mxu0 0.0
    %2849 = vmatprep.subr.mxu0 0.0
    %2850 = vmatpush1.xpose.msra.mxu0 0.0
    %2851 = vmatprep.subr.mxu0 0.0
    %2852 = vmatpush1.xpose.msra.mxu0 0.0
    %2853 = vmatprep.mubr.f32.mxu0 0.0
    %2854 = vmatmul.mubr.f32.gmra.mrb[0].mxu0 %v2785
    %v2855 = vpop.f32.mrb[0].mxu0
    %v2856 = vadd.f32 0.0, %v2855
    %v2857 = vpop.f32.mrb[0].mxu0
    %2858 = vdwg.mxu0
    %v2859 = vsel %vm786, %v707, 0
    %v2861 = vsel %vm786, %v779, 0
    %2863 = vmatprep.subr.mxu0 0.0
    %2864 = vmatpush1.xpose.msra.mxu0 %v2861
    %2865 = vmatprep.subr.mxu0 0.0
    %2866 = vmatpush1.xpose.msra.mxu0 0.0
    %2867 = vmatprep.subr.mxu0 0.0
    %2868 = vmatpush1.xpose.msra.mxu0 0.0
    %2869 = vmatprep.subr.mxu0 0.0
    %2870 = vmatpush1.xpose.msra.mxu0 0.0
    %2871 = vmatprep.subr.mxu0 0.0
    %2872 = vmatpush1.xpose.msra.mxu0 0.0
    %2873 = vmatprep.subr.mxu0 0.0
    %2874 = vmatpush1.xpose.msra.mxu0 0.0
    %2875 = vmatprep.subr.mxu0 0.0
    %2876 = vmatpush1.xpose.msra.mxu0 0.0
    %2877 = vmatprep.subr.mxu0 0.0
    %2878 = vmatpush1.xpose.msra.mxu0 0.0
    %2879 = vmatprep.subr.mxu0 0.0
    %2880 = vmatpush1.xpose.msra.mxu0 0.0
    %2881 = vmatprep.subr.mxu0 0.0
    %2882 = vmatpush1.xpose.msra.mxu0 0.0
    %2883 = vmatprep.subr.mxu0 0.0
    %2884 = vmatpush1.xpose.msra.mxu0 0.0
    %2885 = vmatprep.subr.mxu0 0.0
    %2886 = vmatpush1.xpose.msra.mxu0 0.0
    %2887 = vmatprep.subr.mxu0 0.0
    %2888 = vmatpush1.xpose.msra.mxu0 0.0
    %2889 = vmatprep.subr.mxu0 0.0
    %2890 = vmatpush1.xpose.msra.mxu0 0.0
    %2891 = vmatprep.subr.mxu0 0.0
    %2892 = vmatpush1.xpose.msra.mxu0 0.0
    %2893 = vmatprep.subr.mxu0 0.0
    %2894 = vmatpush1.xpose.msra.mxu0 0.0
    %2895 = vmatprep.subr.mxu0 0.0
    %2896 = vmatpush1.xpose.msra.mxu0 0.0
    %2897 = vmatprep.subr.mxu0 0.0
    %2898 = vmatpush1.xpose.msra.mxu0 0.0
    %2899 = vmatprep.subr.mxu0 0.0
    %2900 = vmatpush1.xpose.msra.mxu0 0.0
    %2901 = vmatprep.subr.mxu0 0.0
    %2902 = vmatpush1.xpose.msra.mxu0 0.0
    %2903 = vmatprep.subr.mxu0 0.0
    %2904 = vmatpush1.xpose.msra.mxu0 0.0
    %2905 = vmatprep.subr.mxu0 0.0
    %2906 = vmatpush1.xpose.msra.mxu0 0.0
    %2907 = vmatprep.subr.mxu0 0.0
    %2908 = vmatpush1.xpose.msra.mxu0 0.0
    %2909 = vmatprep.subr.mxu0 0.0
    %2910 = vmatpush1.xpose.msra.mxu0 0.0
    %2911 = vmatprep.subr.mxu0 0.0
    %2912 = vmatpush1.xpose.msra.mxu0 0.0
    %2913 = vmatprep.subr.mxu0 0.0
    %2914 = vmatpush1.xpose.msra.mxu0 0.0
    %2915 = vmatprep.subr.mxu0 0.0
    %2916 = vmatpush1.xpose.msra.mxu0 0.0
    %2917 = vmatprep.subr.mxu0 0.0
    %2918 = vmatpush1.xpose.msra.mxu0 0.0
    %2919 = vmatprep.subr.mxu0 0.0
    %2920 = vmatpush1.xpose.msra.mxu0 0.0
    %2921 = vmatprep.subr.mxu0 0.0
    %2922 = vmatpush1.xpose.msra.mxu0 0.0
    %2923 = vmatprep.subr.mxu0 0.0
    %2924 = vmatpush1.xpose.msra.mxu0 0.0
    %2925 = vmatprep.subr.mxu0 0.0
    %2926 = vmatpush1.xpose.msra.mxu0 0.0
    %2927 = vmatprep.mubr.f32.mxu0 0.0
    %2928 = vmatmul.mubr.f32.gmra.mrb[0].mxu0 %v2859
    %v2929 = vpop.f32.mrb[0].mxu0
    %v2930 = vadd.f32 0.0, %v2929
    %v2931 = vpop.f32.mrb[0].mxu0
    %2932 = vdwg.mxu0
    %v2933 = vsel %vm786, %v709, 0
    %v2935 = vsel %vm786, %v781, 0
    %2937 = vmatprep.subr.mxu0 0.0
    %2938 = vmatpush1.xpose.msra.mxu0 %v2935
    %2939 = vmatprep.subr.mxu0 0.0
    %2940 = vmatpush1.xpose.msra.mxu0 0.0
    %2941 = vmatprep.subr.mxu0 0.0
    %2942 = vmatpush1.xpose.msra.mxu0 0.0
    %2943 = vmatprep.subr.mxu0 0.0
    %2944 = vmatpush1.xpose.msra.mxu0 0.0
    %2945 = vmatprep.subr.mxu0 0.0
    %2946 = vmatpush1.xpose.msra.mxu0 0.0
    %2947 = vmatprep.subr.mxu0 0.0
    %2948 = vmatpush1.xpose.msra.mxu0 0.0
    %2949 = vmatprep.subr.mxu0 0.0
    %2950 = vmatpush1.xpose.msra.mxu0 0.0
    %2951 = vmatprep.subr.mxu0 0.0
    %2952 = vmatpush1.xpose.msra.mxu0 0.0
    %2953 = vmatprep.subr.mxu0 0.0
    %2954 = vmatpush1.xpose.msra.mxu0 0.0
    %2955 = vmatprep.subr.mxu0 0.0
    %2956 = vmatpush1.xpose.msra.mxu0 0.0
    %2957 = vmatprep.subr.mxu0 0.0
    %2958 = vmatpush1.xpose.msra.mxu0 0.0
    %2959 = vmatprep.subr.mxu0 0.0
    %2960 = vmatpush1.xpose.msra.mxu0 0.0
    %2961 = vmatprep.subr.mxu0 0.0
    %2962 = vmatpush1.xpose.msra.mxu0 0.0
    %2963 = vmatprep.subr.mxu0 0.0
    %2964 = vmatpush1.xpose.msra.mxu0 0.0
    %2965 = vmatprep.subr.mxu0 0.0
    %2966 = vmatpush1.xpose.msra.mxu0 0.0
    %2967 = vmatprep.subr.mxu0 0.0
    %2968 = vmatpush1.xpose.msra.mxu0 0.0
    %2969 = vmatprep.subr.mxu0 0.0
    %2970 = vmatpush1.xpose.msra.mxu0 0.0
    %2971 = vmatprep.subr.mxu0 0.0
    %2972 = vmatpush1.xpose.msra.mxu0 0.0
    %2973 = vmatprep.subr.mxu0 0.0
    %2974 = vmatpush1.xpose.msra.mxu0 0.0
    %2975 = vmatprep.subr.mxu0 0.0
    %2976 = vmatpush1.xpose.msra.mxu0 0.0
    %2977 = vmatprep.subr.mxu0 0.0
    %2978 = vmatpush1.xpose.msra.mxu0 0.0
    %2979 = vmatprep.subr.mxu0 0.0
    %2980 = vmatpush1.xpose.msra.mxu0 0.0
    %2981 = vmatprep.subr.mxu0 0.0
    %2982 = vmatpush1.xpose.msra.mxu0 0.0
    %2983 = vmatprep.subr.mxu0 0.0
    %2984 = vmatpush1.xpose.msra.mxu0 0.0
    %2985 = vmatprep.subr.mxu0 0.0
    %2986 = vmatpush1.xpose.msra.mxu0 0.0
    %2987 = vmatprep.subr.mxu0 0.0
    %2988 = vmatpush1.xpose.msra.mxu0 0.0
    %2989 = vmatprep.subr.mxu0 0.0
    %2990 = vmatpush1.xpose.msra.mxu0 0.0
    %2991 = vmatprep.subr.mxu0 0.0
    %2992 = vmatpush1.xpose.msra.mxu0 0.0
    %2993 = vmatprep.subr.mxu0 0.0
    %2994 = vmatpush1.xpose.msra.mxu0 0.0
    %2995 = vmatprep.subr.mxu0 0.0
    %2996 = vmatpush1.xpose.msra.mxu0 0.0
    %2997 = vmatprep.subr.mxu0 0.0
    %2998 = vmatpush1.xpose.msra.mxu0 0.0
    %2999 = vmatprep.subr.mxu0 0.0
    %3000 = vmatpush1.xpose.msra.mxu0 0.0
    %3001 = vmatprep.mubr.f32.mxu0 0.0
    %3002 = vmatmul.mubr.f32.gmra.mrb[0].mxu0 %v2933
    %v3003 = vpop.f32.mrb[0].mxu0
    %v3004 = vadd.f32 0.0, %v3003
    %v3005 = vpop.f32.mrb[0].mxu0
    %3006 = vdwg.mxu0
    %v3007 = vsel %vm786, %v711, 0
    %v3009 = vsel %vm786, %v783, 0
    %3011 = vmatprep.subr.mxu0 0.0
    %3012 = vmatpush1.xpose.msra.mxu0 %v3009
    %3013 = vmatprep.subr.mxu0 0.0
    %3014 = vmatpush1.xpose.msra.mxu0 0.0
    %3015 = vmatprep.subr.mxu0 0.0
    %3016 = vmatpush1.xpose.msra.mxu0 0.0
    %3017 = vmatprep.subr.mxu0 0.0
    %3018 = vmatpush1.xpose.msra.mxu0 0.0
    %3019 = vmatprep.subr.mxu0 0.0
    %3020 = vmatpush1.xpose.msra.mxu0 0.0
    %3021 = vmatprep.subr.mxu0 0.0
    %3022 = vmatpush1.xpose.msra.mxu0 0.0
    %3023 = vmatprep.subr.mxu0 0.0
    %3024 = vmatpush1.xpose.msra.mxu0 0.0
    %3025 = vmatprep.subr.mxu0 0.0
    %3026 = vmatpush1.xpose.msra.mxu0 0.0
    %3027 = vmatprep.subr.mxu0 0.0
    %3028 = vmatpush1.xpose.msra.mxu0 0.0
    %3029 = vmatprep.subr.mxu0 0.0
    %3030 = vmatpush1.xpose.msra.mxu0 0.0
    %3031 = vmatprep.subr.mxu0 0.0
    %3032 = vmatpush1.xpose.msra.mxu0 0.0
    %3033 = vmatprep.subr.mxu0 0.0
    %3034 = vmatpush1.xpose.msra.mxu0 0.0
    %3035 = vmatprep.subr.mxu0 0.0
    %3036 = vmatpush1.xpose.msra.mxu0 0.0
    %3037 = vmatprep.subr.mxu0 0.0
    %3038 = vmatpush1.xpose.msra.mxu0 0.0
    %3039 = vmatprep.subr.mxu0 0.0
    %3040 = vmatpush1.xpose.msra.mxu0 0.0
    %3041 = vmatprep.subr.mxu0 0.0
    %3042 = vmatpush1.xpose.msra.mxu0 0.0
    %3043 = vmatprep.subr.mxu0 0.0
    %3044 = vmatpush1.xpose.msra.mxu0 0.0
    %3045 = vmatprep.subr.mxu0 0.0
    %3046 = vmatpush1.xpose.msra.mxu0 0.0
    %3047 = vmatprep.subr.mxu0 0.0
    %3048 = vmatpush1.xpose.msra.mxu0 0.0
    %3049 = vmatprep.subr.mxu0 0.0
    %3050 = vmatpush1.xpose.msra.mxu0 0.0
    %3051 = vmatprep.subr.mxu0 0.0
    %3052 = vmatpush1.xpose.msra.mxu0 0.0
    %3053 = vmatprep.subr.mxu0 0.0
    %3054 = vmatpush1.xpose.msra.mxu0 0.0
    %3055 = vmatprep.subr.mxu0 0.0
    %3056 = vmatpush1.xpose.msra.mxu0 0.0
    %3057 = vmatprep.subr.mxu0 0.0
    %3058 = vmatpush1.xpose.msra.mxu0 0.0
    %3059 = vmatprep.subr.mxu0 0.0
    %3060 = vmatpush1.xpose.msra.mxu0 0.0
    %3061 = vmatprep.subr.mxu0 0.0
    %3062 = vmatpush1.xpose.msra.mxu0 0.0
    %3063 = vmatprep.subr.mxu0 0.0
    %3064 = vmatpush1.xpose.msra.mxu0 0.0
    %3065 = vmatprep.subr.mxu0 0.0
    %3066 = vmatpush1.xpose.msra.mxu0 0.0
    %3067 = vmatprep.subr.mxu0 0.0
    %3068 = vmatpush1.xpose.msra.mxu0 0.0
    %3069 = vmatprep.subr.mxu0 0.0
    %3070 = vmatpush1.xpose.msra.mxu0 0.0
    %3071 = vmatprep.subr.mxu0 0.0
    %3072 = vmatpush1.xpose.msra.mxu0 0.0
    %3073 = vmatprep.subr.mxu0 0.0
    %3074 = vmatpush1.xpose.msra.mxu0 0.0
    %3075 = vmatprep.mubr.f32.mxu0 0.0
    %3076 = vmatmul.mubr.f32.gmra.mrb[0].mxu0 %v3007
    %v3077 = vpop.f32.mrb[0].mxu0
    %v3078 = vadd.f32 0.0, %v3077
    %v3079 = vpop.f32.mrb[0].mxu0
    %3080 = vdwg.mxu0
    %v3081 = vsel %vm786, %v713, 0
    %v3083 = vsel %vm786, %v785, 0
    %3085 = vmatprep.subr.mxu0 0.0
    %3086 = vmatpush1.xpose.msra.mxu0 %v3083
    %3087 = vmatprep.subr.mxu0 0.0
    %3088 = vmatpush1.xpose.msra.mxu0 0.0
    %3089 = vmatprep.subr.mxu0 0.0
    %3090 = vmatpush1.xpose.msra.mxu0 0.0
    %3091 = vmatprep.subr.mxu0 0.0
    %3092 = vmatpush1.xpose.msra.mxu0 0.0
    %3093 = vmatprep.subr.mxu0 0.0
    %3094 = vmatpush1.xpose.msra.mxu0 0.0
    %3095 = vmatprep.subr.mxu0 0.0
    %3096 = vmatpush1.xpose.msra.mxu0 0.0
    %3097 = vmatprep.subr.mxu0 0.0
    %3098 = vmatpush1.xpose.msra.mxu0 0.0
    %3099 = vmatprep.subr.mxu0 0.0
    %3100 = vmatpush1.xpose.msra.mxu0 0.0
    %3101 = vmatprep.subr.mxu0 0.0
    %3102 = vmatpush1.xpose.msra.mxu0 0.0
    %3103 = vmatprep.subr.mxu0 0.0
    %3104 = vmatpush1.xpose.msra.mxu0 0.0
    %3105 = vmatprep.subr.mxu0 0.0
    %3106 = vmatpush1.xpose.msra.mxu0 0.0
    %3107 = vmatprep.subr.mxu0 0.0
    %3108 = vmatpush1.xpose.msra.mxu0 0.0
    %3109 = vmatprep.subr.mxu0 0.0
    %3110 = vmatpush1.xpose.msra.mxu0 0.0
    %3111 = vmatprep.subr.mxu0 0.0
    %3112 = vmatpush1.xpose.msra.mxu0 0.0
    %3113 = vmatprep.subr.mxu0 0.0
    %3114 = vmatpush1.xpose.msra.mxu0 0.0
    %3115 = vmatprep.subr.mxu0 0.0
    %3116 = vmatpush1.xpose.msra.mxu0 0.0
    %3117 = vmatprep.subr.mxu0 0.0
    %3118 = vmatpush1.xpose.msra.mxu0 0.0
    %3119 = vmatprep.subr.mxu0 0.0
    %3120 = vmatpush1.xpose.msra.mxu0 0.0
    %3121 = vmatprep.subr.mxu0 0.0
    %3122 = vmatpush1.xpose.msra.mxu0 0.0
    %3123 = vmatprep.subr.mxu0 0.0
    %3124 = vmatpush1.xpose.msra.mxu0 0.0
    %3125 = vmatprep.subr.mxu0 0.0
    %3126 = vmatpush1.xpose.msra.mxu0 0.0
    %3127 = vmatprep.subr.mxu0 0.0
    %3128 = vmatpush1.xpose.msra.mxu0 0.0
    %3129 = vmatprep.subr.mxu0 0.0
    %3130 = vmatpush1.xpose.msra.mxu0 0.0
    %3131 = vmatprep.subr.mxu0 0.0
    %3132 = vmatpush1.xpose.msra.mxu0 0.0
    %3133 = vmatprep.subr.mxu0 0.0
    %3134 = vmatpush1.xpose.msra.mxu0 0.0
    %3135 = vmatprep.subr.mxu0 0.0
    %3136 = vmatpush1.xpose.msra.mxu0 0.0
    %3137 = vmatprep.subr.mxu0 0.0
    %3138 = vmatpush1.xpose.msra.mxu0 0.0
    %3139 = vmatprep.subr.mxu0 0.0
    %3140 = vmatpush1.xpose.msra.mxu0 0.0
    %3141 = vmatprep.subr.mxu0 0.0
    %3142 = vmatpush1.xpose.msra.mxu0 0.0
    %3143 = vmatprep.subr.mxu0 0.0
    %3144 = vmatpush1.xpose.msra.mxu0 0.0
    %3145 = vmatprep.subr.mxu0 0.0
    %3146 = vmatpush1.xpose.msra.mxu0 0.0
    %3147 = vmatprep.subr.mxu0 0.0
    %3148 = vmatpush1.xpose.msra.mxu0 0.0
    %3149 = vmatprep.mubr.f32.mxu0 0.0
    %3150 = vmatmul.mubr.f32.gmra.mrb[0].mxu0 %v3081
    %v3151 = vpop.f32.mrb[0].mxu0
    %v3152 = vadd.f32 0.0, %v3151
    %v3153 = vpop.f32.mrb[0].mxu0
    %3154 = vdwg.mxu0
    %3171 = vrot.lane.b32.xlu0 %v2042, 121
    %v3172 = vpop.permute.xlu0 %3171
    %3173 = vrot.lane.b32.xlu0 %v2116, 121
    %v3174 = vpop.permute.xlu0 %3173
    %3175 = vrot.lane.b32.xlu0 %v2190, 121
    %v3176 = vpop.permute.xlu0 %3175
    %3177 = vrot.lane.b32.xlu0 %v2264, 121
    %v3178 = vpop.permute.xlu0 %3177
    %3179 = vrot.lane.b32.xlu0 %v2338, 121
    %v3180 = vpop.permute.xlu0 %3179
    %3181 = vrot.lane.b32.xlu0 %v2412, 121
    %v3182 = vpop.permute.xlu0 %3181
    %3183 = vrot.lane.b32.xlu0 %v2486, 121
    %v3184 = vpop.permute.xlu0 %3183
    %3185 = vrot.lane.b32.xlu0 %v2560, 121
    %v3186 = vpop.permute.xlu0 %3185
    %3187 = vrot.lane.b32.xlu0 %v2634, 121
    %v3188 = vpop.permute.xlu0 %3187
    %3189 = vrot.lane.b32.xlu0 %v2708, 121
    %v3190 = vpop.permute.xlu0 %3189
    %3191 = vrot.lane.b32.xlu0 %v2782, 121
    %v3192 = vpop.permute.xlu0 %3191
    %3193 = vrot.lane.b32.xlu0 %v2856, 121
    %v3194 = vpop.permute.xlu0 %3193
    %3195 = vrot.lane.b32.xlu0 %v2930, 121
    %v3196 = vpop.permute.xlu0 %3195
    %3197 = vrot.lane.b32.xlu0 %v3004, 121
    %v3198 = vpop.permute.xlu0 %3197
    %3199 = vrot.lane.b32.xlu0 %v3078, 121
    %v3200 = vpop.permute.xlu0 %3199
    %3201 = vrot.lane.b32.xlu0 %v3152, 121
    %v3202 = vpop.permute.xlu0 %3201
    %v3219 = vrot.slane %v2042, 1
    %v3220 = vrot.slane %v2116, 1
    %v3221 = vrot.slane %v2190, 1
    %v3222 = vrot.slane %v2264, 1
    %v3223 = vrot.slane %v2338, 1
    %v3224 = vrot.slane %v2412, 1
    %v3225 = vrot.slane %v2486, 1
    %v3226 = vrot.slane %v2560, 1
    %v3227 = vrot.slane %v2634, 1
    %v3228 = vrot.slane %v2708, 1
    %v3229 = vrot.slane %v2782, 1
    %v3230 = vrot.slane %v2856, 1
    %v3231 = vrot.slane %v2930, 1
    %v3232 = vrot.slane %v3004, 1
    %v3233 = vrot.slane %v3078, 1
    %v3234 = vrot.slane %v3152, 1
    %3235 = vrot.lane.b32.xlu0 %v3219, 2
    %v3236 = vpop.permute.xlu0 %3235
    %3237 = vrot.lane.b32.xlu0 %v3220, 2
    %v3238 = vpop.permute.xlu0 %3237
    %3239 = vrot.lane.b32.xlu0 %v3221, 2
    %v3240 = vpop.permute.xlu0 %3239
    %3241 = vrot.lane.b32.xlu0 %v3222, 2
    %v3242 = vpop.permute.xlu0 %3241
    %3243 = vrot.lane.b32.xlu0 %v3223, 2
    %v3244 = vpop.permute.xlu0 %3243
    %3245 = vrot.lane.b32.xlu0 %v3224, 2
    %v3246 = vpop.permute.xlu0 %3245
    %3247 = vrot.lane.b32.xlu0 %v3225, 2
    %v3248 = vpop.permute.xlu0 %3247
    %3249 = vrot.lane.b32.xlu0 %v3226, 2
    %v3250 = vpop.permute.xlu0 %3249
    %3251 = vrot.lane.b32.xlu0 %v3227, 2
    %v3252 = vpop.permute.xlu0 %3251
    %3253 = vrot.lane.b32.xlu0 %v3228, 2
    %v3254 = vpop.permute.xlu0 %3253
    %3255 = vrot.lane.b32.xlu0 %v3229, 2
    %v3256 = vpop.permute.xlu0 %3255
    %3257 = vrot.lane.b32.xlu0 %v3230, 2
    %v3258 = vpop.permute.xlu0 %3257
    %3259 = vrot.lane.b32.xlu0 %v3231, 2
    %v3260 = vpop.permute.xlu0 %3259
    %3261 = vrot.lane.b32.xlu0 %v3232, 2
    %v3262 = vpop.permute.xlu0 %3261
    %3263 = vrot.lane.b32.xlu0 %v3233, 2
    %v3264 = vpop.permute.xlu0 %3263
    %3265 = vrot.lane.b32.xlu0 %v3234, 2
    %v3266 = vpop.permute.xlu0 %3265
    %vm3283 = vcmask 7168
    %v3284 = vsel %vm3283, %v3172, 0.0
    %v3285 = vsel %vm3283, %v3174, 0.0
    %v3286 = vsel %vm3283, %v3176, 0.0
    %v3287 = vsel %vm3283, %v3178, 0.0
    %v3288 = vsel %vm3283, %v3180, 0.0
    %v3289 = vsel %vm3283, %v3182, 0.0
    %v3290 = vsel %vm3283, %v3184, 0.0
    %v3291 = vsel %vm3283, %v3186, 0.0
    %v3292 = vsel %vm3283, %v3188, 0.0
    %v3293 = vsel %vm3283, %v3190, 0.0
    %v3294 = vsel %vm3283, %v3192, 0.0
    %v3295 = vsel %vm3283, %v3194, 0.0
    %v3296 = vsel %vm3283, %v3196, 0.0
    %v3297 = vsel %vm3283, %v3198, 0.0
    %v3298 = vsel %vm3283, %v3200, 0.0
    %v3299 = vsel %vm3283, %v3202, 0.0
    %vm3300 = vcmask 15360
    %v3301 = vsel %vm3300, %v3284, %v3236
    %v3302 = vsel %vm3300, %v3285, %v3238
    %v3303 = vsel %vm3300, %v3286, %v3240
    %v3304 = vsel %vm3300, %v3287, %v3242
    %v3305 = vsel %vm3300, %v3288, %v3244
    %v3306 = vsel %vm3300, %v3289, %v3246
    %v3307 = vsel %vm3300, %v3290, %v3248
    %v3308 = vsel %vm3300, %v3291, %v3250
    %v3309 = vsel %vm3300, %v3292, %v3252
    %v3310 = vsel %vm3300, %v3293, %v3254
    %v3311 = vsel %vm3300, %v3294, %v3256
    %v3312 = vsel %vm3300, %v3295, %v3258
    %v3313 = vsel %vm3300, %v3296, %v3260
    %v3314 = vsel %vm3300, %v3297, %v3262
    %v3315 = vsel %vm3300, %v3298, %v3264
    %v3316 = vsel %vm3300, %v3299, %v3266
    %3317 = vrot.lane.b32.xlu0 %v2042, 122
    %v3318 = vpop.permute.xlu0 %3317
    %3319 = vrot.lane.b32.xlu0 %v2116, 122
    %v3320 = vpop.permute.xlu0 %3319
    %3321 = vrot.lane.b32.xlu0 %v2190, 122
    %v3322 = vpop.permute.xlu0 %3321
    %3323 = vrot.lane.b32.xlu0 %v2264, 122
    %v3324 = vpop.permute.xlu0 %3323
    %3325 = vrot.lane.b32.xlu0 %v2338, 122
    %v3326 = vpop.permute.xlu0 %3325
    %3327 = vrot.lane.b32.xlu0 %v2412, 122
    %v3328 = vpop.permute.xlu0 %3327
    %3329 = vrot.lane.b32.xlu0 %v2486, 122
    %v3330 = vpop.permute.xlu0 %3329
    %3331 = vrot.lane.b32.xlu0 %v2560, 122
    %v3332 = vpop.permute.xlu0 %3331
    %3333 = vrot.lane.b32.xlu0 %v2634, 122
    %v3334 = vpop.permute.xlu0 %3333
    %3335 = vrot.lane.b32.xlu0 %v2708, 122
    %v3336 = vpop.permute.xlu0 %3335
    %3337 = vrot.lane.b32.xlu0 %v2782, 122
    %v3338 = vpop.permute.xlu0 %3337
    %3339 = vrot.lane.b32.xlu0 %v2856, 122
    %v3340 = vpop.permute.xlu0 %3339
    %3341 = vrot.lane.b32.xlu0 %v2930, 122
    %v3342 = vpop.permute.xlu0 %3341
    %3343 = vrot.lane.b32.xlu0 %v3004, 122
    %v3344 = vpop.permute.xlu0 %3343
    %3345 = vrot.lane.b32.xlu0 %v3078, 122
    %v3346 = vpop.permute.xlu0 %3345
    %3347 = vrot.lane.b32.xlu0 %v3152, 122
    %v3348 = vpop.permute.xlu0 %3347
    %3365 = vrot.lane.b32.xlu0 %v3219, 3
    %v3366 = vpop.permute.xlu0 %3365
    %3367 = vrot.lane.b32.xlu0 %v3220, 3
    %v3368 = vpop.permute.xlu0 %3367
    %3369 = vrot.lane.b32.xlu0 %v3221, 3
    %v3370 = vpop.permute.xlu0 %3369
    %3371 = vrot.lane.b32.xlu0 %v3222, 3
    %v3372 = vpop.permute.xlu0 %3371
    %3373 = vrot.lane.b32.xlu0 %v3223, 3
    %v3374 = vpop.permute.xlu0 %3373
    %3375 = vrot.lane.b32.xlu0 %v3224, 3
    %v3376 = vpop.permute.xlu0 %3375
    %3377 = vrot.lane.b32.xlu0 %v3225, 3
    %v3378 = vpop.permute.xlu0 %3377
    %3379 = vrot.lane.b32.xlu0 %v3226, 3
    %v3380 = vpop.permute.xlu0 %3379
    %3381 = vrot.lane.b32.xlu0 %v3227, 3
    %v3382 = vpop.permute.xlu0 %3381
    %3383 = vrot.lane.b32.xlu0 %v3228, 3
    %v3384 = vpop.permute.xlu0 %3383
    %3385 = vrot.lane.b32.xlu0 %v3229, 3
    %v3386 = vpop.permute.xlu0 %3385
    %3387 = vrot.lane.b32.xlu0 %v3230, 3
    %v3388 = vpop.permute.xlu0 %3387
    %3389 = vrot.lane.b32.xlu0 %v3231, 3
    %v3390 = vpop.permute.xlu0 %3389
    %3391 = vrot.lane.b32.xlu0 %v3232, 3
    %v3392 = vpop.permute.xlu0 %3391
    %3393 = vrot.lane.b32.xlu0 %v3233, 3
    %v3394 = vpop.permute.xlu0 %3393
    %3395 = vrot.lane.b32.xlu0 %v3234, 3
    %v3396 = vpop.permute.xlu0 %3395
    %v3413 = vsel %vm3300, %v3318, 0.0
    %v3414 = vsel %vm3300, %v3320, 0.0
    %v3415 = vsel %vm3300, %v3322, 0.0
    %v3416 = vsel %vm3300, %v3324, 0.0
    %v3417 = vsel %vm3300, %v3326, 0.0
    %v3418 = vsel %vm3300, %v3328, 0.0
    %v3419 = vsel %vm3300, %v3330, 0.0
    %v3420 = vsel %vm3300, %v3332, 0.0
    %v3421 = vsel %vm3300, %v3334, 0.0
    %v3422 = vsel %vm3300, %v3336, 0.0
    %v3423 = vsel %vm3300, %v3338, 0.0
    %v3424 = vsel %vm3300, %v3340, 0.0
    %v3425 = vsel %vm3300, %v3342, 0.0
    %v3426 = vsel %vm3300, %v3344, 0.0
    %v3427 = vsel %vm3300, %v3346, 0.0
    %v3428 = vsel %vm3300, %v3348, 0.0
    %vm3429 = vcmask 23552
    %v3430 = vsel %vm3429, %v3413, %v3366
    %v3431 = vsel %vm3429, %v3414, %v3368
    %v3432 = vsel %vm3429, %v3415, %v3370
    %v3433 = vsel %vm3429, %v3416, %v3372
    %v3434 = vsel %vm3429, %v3417, %v3374
    %v3435 = vsel %vm3429, %v3418, %v3376
    %v3436 = vsel %vm3429, %v3419, %v3378
    %v3437 = vsel %vm3429, %v3420, %v3380
    %v3438 = vsel %vm3429, %v3421, %v3382
    %v3439 = vsel %vm3429, %v3422, %v3384
    %v3440 = vsel %vm3429, %v3423, %v3386
    %v3441 = vsel %vm3429, %v3424, %v3388
    %v3442 = vsel %vm3429, %v3425, %v3390
    %v3443 = vsel %vm3429, %v3426, %v3392
    %v3444 = vsel %vm3429, %v3427, %v3394
    %v3445 = vsel %vm3429, %v3428, %v3396
    %3446 = vrot.lane.b32.xlu0 %v2042, 123
    %v3447 = vpop.permute.xlu0 %3446
    %3448 = vrot.lane.b32.xlu0 %v2116, 123
    %v3449 = vpop.permute.xlu0 %3448
    %3450 = vrot.lane.b32.xlu0 %v2190, 123
    %v3451 = vpop.permute.xlu0 %3450
    %3452 = vrot.lane.b32.xlu0 %v2264, 123
    %v3453 = vpop.permute.xlu0 %3452
    %3454 = vrot.lane.b32.xlu0 %v2338, 123
    %v3455 = vpop.permute.xlu0 %3454
    %3456 = vrot.lane.b32.xlu0 %v2412, 123
    %v3457 = vpop.permute.xlu0 %3456
    %3458 = vrot.lane.b32.xlu0 %v2486, 123
    %v3459 = vpop.permute.xlu0 %3458
    %3460 = vrot.lane.b32.xlu0 %v2560, 123
    %v3461 = vpop.permute.xlu0 %3460
    %3462 = vrot.lane.b32.xlu0 %v2634, 123
    %v3463 = vpop.permute.xlu0 %3462
    %3464 = vrot.lane.b32.xlu0 %v2708, 123
    %v3465 = vpop.permute.xlu0 %3464
    %3466 = vrot.lane.b32.xlu0 %v2782, 123
    %v3467 = vpop.permute.xlu0 %3466
    %3468 = vrot.lane.b32.xlu0 %v2856, 123
    %v3469 = vpop.permute.xlu0 %3468
    %3470 = vrot.lane.b32.xlu0 %v2930, 123
    %v3471 = vpop.permute.xlu0 %3470
    %3472 = vrot.lane.b32.xlu0 %v3004, 123
    %v3473 = vpop.permute.xlu0 %3472
    %3474 = vrot.lane.b32.xlu0 %v3078, 123
    %v3475 = vpop.permute.xlu0 %3474
    %3476 = vrot.lane.b32.xlu0 %v3152, 123
    %v3477 = vpop.permute.xlu0 %3476
    %3494 = vrot.lane.b32.xlu0 %v3219, 4
    %v3495 = vpop.permute.xlu0 %3494
    %3496 = vrot.lane.b32.xlu0 %v3220, 4
    %v3497 = vpop.permute.xlu0 %3496
    %3498 = vrot.lane.b32.xlu0 %v3221, 4
    %v3499 = vpop.permute.xlu0 %3498
    %3500 = vrot.lane.b32.xlu0 %v3222, 4
    %v3501 = vpop.permute.xlu0 %3500
    %3502 = vrot.lane.b32.xlu0 %v3223, 4
    %v3503 = vpop.permute.xlu0 %3502
    %3504 = vrot.lane.b32.xlu0 %v3224, 4
    %v3505 = vpop.permute.xlu0 %3504
    %3506 = vrot.lane.b32.xlu0 %v3225, 4
    %v3507 = vpop.permute.xlu0 %3506
    %3508 = vrot.lane.b32.xlu0 %v3226, 4
    %v3509 = vpop.permute.xlu0 %3508
    %3510 = vrot.lane.b32.xlu0 %v3227, 4
    %v3511 = vpop.permute.xlu0 %3510
    %3512 = vrot.lane.b32.xlu0 %v3228, 4
    %v3513 = vpop.permute.xlu0 %3512
    %3514 = vrot.lane.b32.xlu0 %v3229, 4
    %v3515 = vpop.permute.xlu0 %3514
    %3516 = vrot.lane.b32.xlu0 %v3230, 4
    %v3517 = vpop.permute.xlu0 %3516
    %3518 = vrot.lane.b32.xlu0 %v3231, 4
    %v3519 = vpop.permute.xlu0 %3518
    %3520 = vrot.lane.b32.xlu0 %v3232, 4
    %v3521 = vpop.permute.xlu0 %3520
    %3522 = vrot.lane.b32.xlu0 %v3233, 4
    %v3523 = vpop.permute.xlu0 %3522
    %3524 = vrot.lane.b32.xlu0 %v3234, 4
    %v3525 = vpop.permute.xlu0 %3524
    %v3542 = vsel %vm3429, %v3447, 0.0
    %v3543 = vsel %vm3429, %v3449, 0.0
    %v3544 = vsel %vm3429, %v3451, 0.0
    %v3545 = vsel %vm3429, %v3453, 0.0
    %v3546 = vsel %vm3429, %v3455, 0.0
    %v3547 = vsel %vm3429, %v3457, 0.0
    %v3548 = vsel %vm3429, %v3459, 0.0
    %v3549 = vsel %vm3429, %v3461, 0.0
    %v3550 = vsel %vm3429, %v3463, 0.0
    %v3551 = vsel %vm3429, %v3465, 0.0
    %v3552 = vsel %vm3429, %v3467, 0.0
    %v3553 = vsel %vm3429, %v3469, 0.0
    %v3554 = vsel %vm3429, %v3471, 0.0
    %v3555 = vsel %vm3429, %v3473, 0.0
    %v3556 = vsel %vm3429, %v3475, 0.0
    %v3557 = vsel %vm3429, %v3477, 0.0
    %vm3558 = vcmask 31744
    %v3559 = vsel %vm3558, %v3542, %v3495
    %v3560 = vsel %vm3558, %v3543, %v3497
    %v3561 = vsel %vm3558, %v3544, %v3499
    %v3562 = vsel %vm3558, %v3545, %v3501
    %v3563 = vsel %vm3558, %v3546, %v3503
    %v3564 = vsel %vm3558, %v3547, %v3505
    %v3565 = vsel %vm3558, %v3548, %v3507
    %v3566 = vsel %vm3558, %v3549, %v3509
    %v3567 = vsel %vm3558, %v3550, %v3511
    %v3568 = vsel %vm3558, %v3551, %v3513
    %v3569 = vsel %vm3558, %v3552, %v3515
    %v3570 = vsel %vm3558, %v3553, %v3517
    %v3571 = vsel %vm3558, %v3554, %v3519
    %v3572 = vsel %vm3558, %v3555, %v3521
    %v3573 = vsel %vm3558, %v3556, %v3523
    %v3574 = vsel %vm3558, %v3557, %v3525
    %3575 = vrot.lane.b32.xlu0 %v2042, 124
    %v3576 = vpop.permute.xlu0 %3575
    %3577 = vrot.lane.b32.xlu0 %v2116, 124
    %v3578 = vpop.permute.xlu0 %3577
    %3579 = vrot.lane.b32.xlu0 %v2190, 124
    %v3580 = vpop.permute.xlu0 %3579
    %3581 = vrot.lane.b32.xlu0 %v2264, 124
    %v3582 = vpop.permute.xlu0 %3581
    %3583 = vrot.lane.b32.xlu0 %v2338, 124
    %v3584 = vpop.permute.xlu0 %3583
    %3585 = vrot.lane.b32.xlu0 %v2412, 124
    %v3586 = vpop.permute.xlu0 %3585
    %3587 = vrot.lane.b32.xlu0 %v2486, 124
    %v3588 = vpop.permute.xlu0 %3587
    %3589 = vrot.lane.b32.xlu0 %v2560, 124
    %v3590 = vpop.permute.xlu0 %3589
    %3591 = vrot.lane.b32.xlu0 %v2634, 124
    %v3592 = vpop.permute.xlu0 %3591
    %3593 = vrot.lane.b32.xlu0 %v2708, 124
    %v3594 = vpop.permute.xlu0 %3593
    %3595 = vrot.lane.b32.xlu0 %v2782, 124
    %v3596 = vpop.permute.xlu0 %3595
    %3597 = vrot.lane.b32.xlu0 %v2856, 124
    %v3598 = vpop.permute.xlu0 %3597
    %3599 = vrot.lane.b32.xlu0 %v2930, 124
    %v3600 = vpop.permute.xlu0 %3599
    %3601 = vrot.lane.b32.xlu0 %v3004, 124
    %v3602 = vpop.permute.xlu0 %3601
    %3603 = vrot.lane.b32.xlu0 %v3078, 124
    %v3604 = vpop.permute.xlu0 %3603
    %3605 = vrot.lane.b32.xlu0 %v3152, 124
    %v3606 = vpop.permute.xlu0 %3605
    %3623 = vrot.lane.b32.xlu0 %v3219, 5
    %v3624 = vpop.permute.xlu0 %3623
    %3625 = vrot.lane.b32.xlu0 %v3220, 5
    %v3626 = vpop.permute.xlu0 %3625
    %3627 = vrot.lane.b32.xlu0 %v3221, 5
    %v3628 = vpop.permute.xlu0 %3627
    %3629 = vrot.lane.b32.xlu0 %v3222, 5
    %v3630 = vpop.permute.xlu0 %3629
    %3631 = vrot.lane.b32.xlu0 %v3223, 5
    %v3632 = vpop.permute.xlu0 %3631
    %3633 = vrot.lane.b32.xlu0 %v3224, 5
    %v3634 = vpop.permute.xlu0 %3633
    %3635 = vrot.lane.b32.xlu0 %v3225, 5
    %v3636 = vpop.permute.xlu0 %3635
    %3637 = vrot.lane.b32.xlu0 %v3226, 5
    %v3638 = vpop.permute.xlu0 %3637
    %3639 = vrot.lane.b32.xlu0 %v3227, 5
    %v3640 = vpop.permute.xlu0 %3639
    %3641 = vrot.lane.b32.xlu0 %v3228, 5
    %v3642 = vpop.permute.xlu0 %3641
    %3643 = vrot.lane.b32.xlu0 %v3229, 5
    %v3644 = vpop.permute.xlu0 %3643
    %3645 = vrot.lane.b32.xlu0 %v3230, 5
    %v3646 = vpop.permute.xlu0 %3645
    %3647 = vrot.lane.b32.xlu0 %v3231, 5
    %v3648 = vpop.permute.xlu0 %3647
    %3649 = vrot.lane.b32.xlu0 %v3232, 5
    %v3650 = vpop.permute.xlu0 %3649
    %3651 = vrot.lane.b32.xlu0 %v3233, 5
    %v3652 = vpop.permute.xlu0 %3651
    %3653 = vrot.lane.b32.xlu0 %v3234, 5
    %v3654 = vpop.permute.xlu0 %3653
    %v3671 = vsel %vm3558, %v3576, 0.0
    %v3672 = vsel %vm3558, %v3578, 0.0
    %v3673 = vsel %vm3558, %v3580, 0.0
    %v3674 = vsel %vm3558, %v3582, 0.0
    %v3675 = vsel %vm3558, %v3584, 0.0
    %v3676 = vsel %vm3558, %v3586, 0.0
    %v3677 = vsel %vm3558, %v3588, 0.0
    %v3678 = vsel %vm3558, %v3590, 0.0
    %v3679 = vsel %vm3558, %v3592, 0.0
    %v3680 = vsel %vm3558, %v3594, 0.0
    %v3681 = vsel %vm3558, %v3596, 0.0
    %v3682 = vsel %vm3558, %v3598, 0.0
    %v3683 = vsel %vm3558, %v3600, 0.0
    %v3684 = vsel %vm3558, %v3602, 0.0
    %v3685 = vsel %vm3558, %v3604, 0.0
    %v3686 = vsel %vm3558, %v3606, 0.0
    %vm3687 = vcmask 39936
    %v3688 = vsel %vm3687, %v3671, %v3624
    %v3689 = vsel %vm3687, %v3672, %v3626
    %v3690 = vsel %vm3687, %v3673, %v3628
    %v3691 = vsel %vm3687, %v3674, %v3630
    %v3692 = vsel %vm3687, %v3675, %v3632
    %v3693 = vsel %vm3687, %v3676, %v3634
    %v3694 = vsel %vm3687, %v3677, %v3636
    %v3695 = vsel %vm3687, %v3678, %v3638
    %v3696 = vsel %vm3687, %v3679, %v3640
    %v3697 = vsel %vm3687, %v3680, %v3642
    %v3698 = vsel %vm3687, %v3681, %v3644
    %v3699 = vsel %vm3687, %v3682, %v3646
    %v3700 = vsel %vm3687, %v3683, %v3648
    %v3701 = vsel %vm3687, %v3684, %v3650
    %v3702 = vsel %vm3687, %v3685, %v3652
    %v3703 = vsel %vm3687, %v3686, %v3654
    %3704 = vrot.lane.b32.xlu0 %v2042, 125
    %v3705 = vpop.permute.xlu0 %3704
    %3706 = vrot.lane.b32.xlu0 %v2116, 125
    %v3707 = vpop.permute.xlu0 %3706
    %3708 = vrot.lane.b32.xlu0 %v2190, 125
    %v3709 = vpop.permute.xlu0 %3708
    %3710 = vrot.lane.b32.xlu0 %v2264, 125
    %v3711 = vpop.permute.xlu0 %3710
    %3712 = vrot.lane.b32.xlu0 %v2338, 125
    %v3713 = vpop.permute.xlu0 %3712
    %3714 = vrot.lane.b32.xlu0 %v2412, 125
    %v3715 = vpop.permute.xlu0 %3714
    %3716 = vrot.lane.b32.xlu0 %v2486, 125
    %v3717 = vpop.permute.xlu0 %3716
    %3718 = vrot.lane.b32.xlu0 %v2560, 125
    %v3719 = vpop.permute.xlu0 %3718
    %3720 = vrot.lane.b32.xlu0 %v2634, 125
    %v3721 = vpop.permute.xlu0 %3720
    %3722 = vrot.lane.b32.xlu0 %v2708, 125
    %v3723 = vpop.permute.xlu0 %3722
    %3724 = vrot.lane.b32.xlu0 %v2782, 125
    %v3725 = vpop.permute.xlu0 %3724
    %3726 = vrot.lane.b32.xlu0 %v2856, 125
    %v3727 = vpop.permute.xlu0 %3726
    %3728 = vrot.lane.b32.xlu0 %v2930, 125
    %v3729 = vpop.permute.xlu0 %3728
    %3730 = vrot.lane.b32.xlu0 %v3004, 125
    %v3731 = vpop.permute.xlu0 %3730
    %3732 = vrot.lane.b32.xlu0 %v3078, 125
    %v3733 = vpop.permute.xlu0 %3732
    %3734 = vrot.lane.b32.xlu0 %v3152, 125
    %v3735 = vpop.permute.xlu0 %3734
    %3752 = vrot.lane.b32.xlu0 %v3219, 6
    %v3753 = vpop.permute.xlu0 %3752
    %3754 = vrot.lane.b32.xlu0 %v3220, 6
    %v3755 = vpop.permute.xlu0 %3754
    %3756 = vrot.lane.b32.xlu0 %v3221, 6
    %v3757 = vpop.permute.xlu0 %3756
    %3758 = vrot.lane.b32.xlu0 %v3222, 6
    %v3759 = vpop.permute.xlu0 %3758
    %3760 = vrot.lane.b32.xlu0 %v3223, 6
    %v3761 = vpop.permute.xlu0 %3760
    %3762 = vrot.lane.b32.xlu0 %v3224, 6
    %v3763 = vpop.permute.xlu0 %3762
    %3764 = vrot.lane.b32.xlu0 %v3225, 6
    %v3765 = vpop.permute.xlu0 %3764
    %3766 = vrot.lane.b32.xlu0 %v3226, 6
    %v3767 = vpop.permute.xlu0 %3766
    %3768 = vrot.lane.b32.xlu0 %v3227, 6
    %v3769 = vpop.permute.xlu0 %3768
    %3770 = vrot.lane.b32.xlu0 %v3228, 6
    %v3771 = vpop.permute.xlu0 %3770
    %3772 = vrot.lane.b32.xlu0 %v3229, 6
    %v3773 = vpop.permute.xlu0 %3772
    %3774 = vrot.lane.b32.xlu0 %v3230, 6
    %v3775 = vpop.permute.xlu0 %3774
    %3776 = vrot.lane.b32.xlu0 %v3231, 6
    %v3777 = vpop.permute.xlu0 %3776
    %3778 = vrot.lane.b32.xlu0 %v3232, 6
    %v3779 = vpop.permute.xlu0 %3778
    %3780 = vrot.lane.b32.xlu0 %v3233, 6
    %v3781 = vpop.permute.xlu0 %3780
    %3782 = vrot.lane.b32.xlu0 %v3234, 6
    %v3783 = vpop.permute.xlu0 %3782
    %v3800 = vsel %vm3687, %v3705, 0.0
    %v3801 = vsel %vm3687, %v3707, 0.0
    %v3802 = vsel %vm3687, %v3709, 0.0
    %v3803 = vsel %vm3687, %v3711, 0.0
    %v3804 = vsel %vm3687, %v3713, 0.0
    %v3805 = vsel %vm3687, %v3715, 0.0
    %v3806 = vsel %vm3687, %v3717, 0.0
    %v3807 = vsel %vm3687, %v3719, 0.0
    %v3808 = vsel %vm3687, %v3721, 0.0
    %v3809 = vsel %vm3687, %v3723, 0.0
    %v3810 = vsel %vm3687, %v3725, 0.0
    %v3811 = vsel %vm3687, %v3727, 0.0
    %v3812 = vsel %vm3687, %v3729, 0.0
    %v3813 = vsel %vm3687, %v3731, 0.0
    %v3814 = vsel %vm3687, %v3733, 0.0
    %v3815 = vsel %vm3687, %v3735, 0.0
    %vm3816 = vcmask 48128
    %v3817 = vsel %vm3816, %v3800, %v3753
    %v3818 = vsel %vm3816, %v3801, %v3755
    %v3819 = vsel %vm3816, %v3802, %v3757
    %v3820 = vsel %vm3816, %v3803, %v3759
    %v3821 = vsel %vm3816, %v3804, %v3761
    %v3822 = vsel %vm3816, %v3805, %v3763
    %v3823 = vsel %vm3816, %v3806, %v3765
    %v3824 = vsel %vm3816, %v3807, %v3767
    %v3825 = vsel %vm3816, %v3808, %v3769
    %v3826 = vsel %vm3816, %v3809, %v3771
    %v3827 = vsel %vm3816, %v3810, %v3773
    %v3828 = vsel %vm3816, %v3811, %v3775
    %v3829 = vsel %vm3816, %v3812, %v3777
    %v3830 = vsel %vm3816, %v3813, %v3779
    %v3831 = vsel %vm3816, %v3814, %v3781
    %v3832 = vsel %vm3816, %v3815, %v3783
    %3833 = vrot.lane.b32.xlu0 %v2042, 126
    %v3834 = vpop.permute.xlu0 %3833
    %3835 = vrot.lane.b32.xlu0 %v2116, 126
    %v3836 = vpop.permute.xlu0 %3835
    %3837 = vrot.lane.b32.xlu0 %v2190, 126
    %v3838 = vpop.permute.xlu0 %3837
    %3839 = vrot.lane.b32.xlu0 %v2264, 126
    %v3840 = vpop.permute.xlu0 %3839
    %3841 = vrot.lane.b32.xlu0 %v2338, 126
    %v3842 = vpop.permute.xlu0 %3841
    %3843 = vrot.lane.b32.xlu0 %v2412, 126
    %v3844 = vpop.permute.xlu0 %3843
    %3845 = vrot.lane.b32.xlu0 %v2486, 126
    %v3846 = vpop.permute.xlu0 %3845
    %3847 = vrot.lane.b32.xlu0 %v2560, 126
    %v3848 = vpop.permute.xlu0 %3847
    %3849 = vrot.lane.b32.xlu0 %v2634, 126
    %v3850 = vpop.permute.xlu0 %3849
    %3851 = vrot.lane.b32.xlu0 %v2708, 126
    %v3852 = vpop.permute.xlu0 %3851
    %3853 = vrot.lane.b32.xlu0 %v2782, 126
    %v3854 = vpop.permute.xlu0 %3853
    %3855 = vrot.lane.b32.xlu0 %v2856, 126
    %v3856 = vpop.permute.xlu0 %3855
    %3857 = vrot.lane.b32.xlu0 %v2930, 126
    %v3858 = vpop.permute.xlu0 %3857
    %3859 = vrot.lane.b32.xlu0 %v3004, 126
    %v3860 = vpop.permute.xlu0 %3859
    %3861 = vrot.lane.b32.xlu0 %v3078, 126
    %v3862 = vpop.permute.xlu0 %3861
    %3863 = vrot.lane.b32.xlu0 %v3152, 126
    %v3864 = vpop.permute.xlu0 %3863
    %3881 = vrot.lane.b32.xlu0 %v3219, 7
    %v3882 = vpop.permute.xlu0 %3881
    %3883 = vrot.lane.b32.xlu0 %v3220, 7
    %v3884 = vpop.permute.xlu0 %3883
    %3885 = vrot.lane.b32.xlu0 %v3221, 7
    %v3886 = vpop.permute.xlu0 %3885
    %3887 = vrot.lane.b32.xlu0 %v3222, 7
    %v3888 = vpop.permute.xlu0 %3887
    %3889 = vrot.lane.b32.xlu0 %v3223, 7
    %v3890 = vpop.permute.xlu0 %3889
    %3891 = vrot.lane.b32.xlu0 %v3224, 7
    %v3892 = vpop.permute.xlu0 %3891
    %3893 = vrot.lane.b32.xlu0 %v3225, 7
    %v3894 = vpop.permute.xlu0 %3893
    %3895 = vrot.lane.b32.xlu0 %v3226, 7
    %v3896 = vpop.permute.xlu0 %3895
    %3897 = vrot.lane.b32.xlu0 %v3227, 7
    %v3898 = vpop.permute.xlu0 %3897
    %3899 = vrot.lane.b32.xlu0 %v3228, 7
    %v3900 = vpop.permute.xlu0 %3899
    %3901 = vrot.lane.b32.xlu0 %v3229, 7
    %v3902 = vpop.permute.xlu0 %3901
    %3903 = vrot.lane.b32.xlu0 %v3230, 7
    %v3904 = vpop.permute.xlu0 %3903
    %3905 = vrot.lane.b32.xlu0 %v3231, 7
    %v3906 = vpop.permute.xlu0 %3905
    %3907 = vrot.lane.b32.xlu0 %v3232, 7
    %v3908 = vpop.permute.xlu0 %3907
    %3909 = vrot.lane.b32.xlu0 %v3233, 7
    %v3910 = vpop.permute.xlu0 %3909
    %3911 = vrot.lane.b32.xlu0 %v3234, 7
    %v3912 = vpop.permute.xlu0 %3911
    %v3929 = vsel %vm3816, %v3834, 0.0
    %v3930 = vsel %vm3816, %v3836, 0.0
    %v3931 = vsel %vm3816, %v3838, 0.0
    %v3932 = vsel %vm3816, %v3840, 0.0
    %v3933 = vsel %vm3816, %v3842, 0.0
    %v3934 = vsel %vm3816, %v3844, 0.0
    %v3935 = vsel %vm3816, %v3846, 0.0
    %v3936 = vsel %vm3816, %v3848, 0.0
    %v3937 = vsel %vm3816, %v3850, 0.0
    %v3938 = vsel %vm3816, %v3852, 0.0
    %v3939 = vsel %vm3816, %v3854, 0.0
    %v3940 = vsel %vm3816, %v3856, 0.0
    %v3941 = vsel %vm3816, %v3858, 0.0
    %v3942 = vsel %vm3816, %v3860, 0.0
    %v3943 = vsel %vm3816, %v3862, 0.0
    %v3944 = vsel %vm3816, %v3864, 0.0
    %vm3945 = vcmask 56320
    %v3946 = vsel %vm3945, %v3929, %v3882
    %v3947 = vsel %vm3945, %v3930, %v3884
    %v3948 = vsel %vm3945, %v3931, %v3886
    %v3949 = vsel %vm3945, %v3932, %v3888
    %v3950 = vsel %vm3945, %v3933, %v3890
    %v3951 = vsel %vm3945, %v3934, %v3892
    %v3952 = vsel %vm3945, %v3935, %v3894
    %v3953 = vsel %vm3945, %v3936, %v3896
    %v3954 = vsel %vm3945, %v3937, %v3898
    %v3955 = vsel %vm3945, %v3938, %v3900
    %v3956 = vsel %vm3945, %v3939, %v3902
    %v3957 = vsel %vm3945, %v3940, %v3904
    %v3958 = vsel %vm3945, %v3941, %v3906
    %v3959 = vsel %vm3945, %v3942, %v3908
    %v3960 = vsel %vm3945, %v3943, %v3910
    %v3961 = vsel %vm3945, %v3944, %v3912
    %3962 = vrot.lane.b32.xlu0 %v2042, 127
    %v3963 = vpop.permute.xlu0 %3962
    %3964 = vrot.lane.b32.xlu0 %v2116, 127
    %v3965 = vpop.permute.xlu0 %3964
    %3966 = vrot.lane.b32.xlu0 %v2190, 127
    %v3967 = vpop.permute.xlu0 %3966
    %3968 = vrot.lane.b32.xlu0 %v2264, 127
    %v3969 = vpop.permute.xlu0 %3968
    %3970 = vrot.lane.b32.xlu0 %v2338, 127
    %v3971 = vpop.permute.xlu0 %3970
    %3972 = vrot.lane.b32.xlu0 %v2412, 127
    %v3973 = vpop.permute.xlu0 %3972
    %3974 = vrot.lane.b32.xlu0 %v2486, 127
    %v3975 = vpop.permute.xlu0 %3974
    %3976 = vrot.lane.b32.xlu0 %v2560, 127
    %v3977 = vpop.permute.xlu0 %3976
    %3978 = vrot.lane.b32.xlu0 %v2634, 127
    %v3979 = vpop.permute.xlu0 %3978
    %3980 = vrot.lane.b32.xlu0 %v2708, 127
    %v3981 = vpop.permute.xlu0 %3980
    %3982 = vrot.lane.b32.xlu0 %v2782, 127
    %v3983 = vpop.permute.xlu0 %3982
    %3984 = vrot.lane.b32.xlu0 %v2856, 127
    %v3985 = vpop.permute.xlu0 %3984
    %3986 = vrot.lane.b32.xlu0 %v2930, 127
    %v3987 = vpop.permute.xlu0 %3986
    %3988 = vrot.lane.b32.xlu0 %v3004, 127
    %v3989 = vpop.permute.xlu0 %3988
    %3990 = vrot.lane.b32.xlu0 %v3078, 127
    %v3991 = vpop.permute.xlu0 %3990
    %3992 = vrot.lane.b32.xlu0 %v3152, 127
    %v3993 = vpop.permute.xlu0 %3992
    %v4010 = vsel %vm3945, %v3963, 0.0
    %v4011 = vsel %vm3945, %v3965, 0.0
    %v4012 = vsel %vm3945, %v3967, 0.0
    %v4013 = vsel %vm3945, %v3969, 0.0
    %v4014 = vsel %vm3945, %v3971, 0.0
    %v4015 = vsel %vm3945, %v3973, 0.0
    %v4016 = vsel %vm3945, %v3975, 0.0
    %v4017 = vsel %vm3945, %v3977, 0.0
    %v4018 = vsel %vm3945, %v3979, 0.0
    %v4019 = vsel %vm3945, %v3981, 0.0
    %v4020 = vsel %vm3945, %v3983, 0.0
    %v4021 = vsel %vm3945, %v3985, 0.0
    %v4022 = vsel %vm3945, %v3987, 0.0
    %v4023 = vsel %vm3945, %v3989, 0.0
    %v4024 = vsel %vm3945, %v3991, 0.0
    %v4025 = vsel %vm3945, %v3993, 0.0
    %vm4026 = vcmask 1040384
    %v4027 = vsel %vm4026, %v3301, %v3430
    %v4028 = vsel %vm4026, %v3302, %v3431
    %v4029 = vsel %vm4026, %v3303, %v3432
    %v4030 = vsel %vm4026, %v3304, %v3433
    %v4031 = vsel %vm4026, %v3305, %v3434
    %v4032 = vsel %vm4026, %v3306, %v3435
    %v4033 = vsel %vm4026, %v3307, %v3436
    %v4034 = vsel %vm4026, %v3308, %v3437
    %v4035 = vsel %vm4026, %v3309, %v3438
    %v4036 = vsel %vm4026, %v3310, %v3439
    %v4037 = vsel %vm4026, %v3311, %v3440
    %v4038 = vsel %vm4026, %v3312, %v3441
    %v4039 = vsel %vm4026, %v3313, %v3442
    %v4040 = vsel %vm4026, %v3314, %v3443
    %v4041 = vsel %vm4026, %v3315, %v3444
    %v4042 = vsel %vm4026, %v3316, %v3445
    %vm4043 = vcmask 1041408
    %v4044 = vsel %vm4043, %v4027, %v3559
    %v4045 = vsel %vm4043, %v4028, %v3560
    %v4046 = vsel %vm4043, %v4029, %v3561
    %v4047 = vsel %vm4043, %v4030, %v3562
    %v4048 = vsel %vm4043, %v4031, %v3563
    %v4049 = vsel %vm4043, %v4032, %v3564
    %v4050 = vsel %vm4043, %v4033, %v3565
    %v4051 = vsel %vm4043, %v4034, %v3566
    %v4052 = vsel %vm4043, %v4035, %v3567
    %v4053 = vsel %vm4043, %v4036, %v3568
    %v4054 = vsel %vm4043, %v4037, %v3569
    %v4055 = vsel %vm4043, %v4038, %v3570
    %v4056 = vsel %vm4043, %v4039, %v3571
    %v4057 = vsel %vm4043, %v4040, %v3572
    %v4058 = vsel %vm4043, %v4041, %v3573
    %v4059 = vsel %vm4043, %v4042, %v3574
    %vm4060 = vcmask 1042432
    %v4061 = vsel %vm4060, %v4044, %v3688
    %v4062 = vsel %vm4060, %v4045, %v3689
    %v4063 = vsel %vm4060, %v4046, %v3690
    %v4064 = vsel %vm4060, %v4047, %v3691
    %v4065 = vsel %vm4060, %v4048, %v3692
    %v4066 = vsel %vm4060, %v4049, %v3693
    %v4067 = vsel %vm4060, %v4050, %v3694
    %v4068 = vsel %vm4060, %v4051, %v3695
    %v4069 = vsel %vm4060, %v4052, %v3696
    %v4070 = vsel %vm4060, %v4053, %v3697
    %v4071 = vsel %vm4060, %v4054, %v3698
    %v4072 = vsel %vm4060, %v4055, %v3699
    %v4073 = vsel %vm4060, %v4056, %v3700
    %v4074 = vsel %vm4060, %v4057, %v3701
    %v4075 = vsel %vm4060, %v4058, %v3702
    %v4076 = vsel %vm4060, %v4059, %v3703
    %vm4077 = vcmask 1043456
    %v4078 = vsel %vm4077, %v4061, %v3817
    %v4079 = vsel %vm4077, %v4062, %v3818
    %v4080 = vsel %vm4077, %v4063, %v3819
    %v4081 = vsel %vm4077, %v4064, %v3820
    %v4082 = vsel %vm4077, %v4065, %v3821
    %v4083 = vsel %vm4077, %v4066, %v3822
    %v4084 = vsel %vm4077, %v4067, %v3823
    %v4085 = vsel %vm4077, %v4068, %v3824
    %v4086 = vsel %vm4077, %v4069, %v3825
    %v4087 = vsel %vm4077, %v4070, %v3826
    %v4088 = vsel %vm4077, %v4071, %v3827
    %v4089 = vsel %vm4077, %v4072, %v3828
    %v4090 = vsel %vm4077, %v4073, %v3829
    %v4091 = vsel %vm4077, %v4074, %v3830
    %v4092 = vsel %vm4077, %v4075, %v3831
    %v4093 = vsel %vm4077, %v4076, %v3832
    %vm4094 = vcmask 1044480
    %v4095 = vsel %vm4094, %v4078, %v3946
    %v4096 = vsel %vm4094, %v4079, %v3947
    %v4097 = vsel %vm4094, %v4080, %v3948
    %v4098 = vsel %vm4094, %v4081, %v3949
    %v4099 = vsel %vm4094, %v4082, %v3950
    %v4100 = vsel %vm4094, %v4083, %v3951
    %v4101 = vsel %vm4094, %v4084, %v3952
    %v4102 = vsel %vm4094, %v4085, %v3953
    %v4103 = vsel %vm4094, %v4086, %v3954
    %v4104 = vsel %vm4094, %v4087, %v3955
    %v4105 = vsel %vm4094, %v4088, %v3956
    %v4106 = vsel %vm4094, %v4089, %v3957
    %v4107 = vsel %vm4094, %v4090, %v3958
    %v4108 = vsel %vm4094, %v4091, %v3959
    %v4109 = vsel %vm4094, %v4092, %v3960
    %v4110 = vsel %vm4094, %v4093, %v3961
    %vm4111 = vcmask 1045504
    %v4112 = vsel %vm4111, %v4095, %v4010
    %v4113 = vsel %vm4111, %v4096, %v4011
    %v4114 = vsel %vm4111, %v4097, %v4012
    %v4115 = vsel %vm4111, %v4098, %v4013
    %v4116 = vsel %vm4111, %v4099, %v4014
    %v4117 = vsel %vm4111, %v4100, %v4015
    %v4118 = vsel %vm4111, %v4101, %v4016
    %v4119 = vsel %vm4111, %v4102, %v4017
    %v4120 = vsel %vm4111, %v4103, %v4018
    %v4121 = vsel %vm4111, %v4104, %v4019
    %v4122 = vsel %vm4111, %v4105, %v4020
    %v4123 = vsel %vm4111, %v4106, %v4021
    %v4124 = vsel %vm4111, %v4107, %v4022
    %v4125 = vsel %vm4111, %v4108, %v4023
    %v4126 = vsel %vm4111, %v4109, %v4024
    %v4127 = vsel %vm4111, %v4110, %v4025
    %vm4128 = vcmask 1046528
    %v4129 = vsel %vm4128, %v4112, %v2042
    %v4130 = vsel %vm4128, %v4113, %v2116
    %v4131 = vsel %vm4128, %v4114, %v2190
    %v4132 = vsel %vm4128, %v4115, %v2264
    %v4133 = vsel %vm4128, %v4116, %v2338
    %v4134 = vsel %vm4128, %v4117, %v2412
    %v4135 = vsel %vm4128, %v4118, %v2486
    %v4136 = vsel %vm4128, %v4119, %v2560
    %v4137 = vsel %vm4128, %v4120, %v2634
    %v4138 = vsel %vm4128, %v4121, %v2708
    %v4139 = vsel %vm4128, %v4122, %v2782
    %v4140 = vsel %vm4128, %v4123, %v2856
    %v4141 = vsel %vm4128, %v4124, %v2930
    %v4142 = vsel %vm4128, %v4125, %v3004
    %v4143 = vsel %vm4128, %v4126, %v3078
    %v4144 = vsel %vm4128, %v4127, %v3152
    %v4145 = vadd.f32 %v858, %v4129
    %v4146 = vadd.f32 %v932, %v4130
    %v4147 = vadd.f32 %v1006, %v4131
    %v4148 = vadd.f32 %v1080, %v4132
    %v4149 = vadd.f32 %v1154, %v4133
    %v4150 = vadd.f32 %v1228, %v4134
    %v4151 = vadd.f32 %v1302, %v4135
    %v4152 = vadd.f32 %v1376, %v4136
    %v4153 = vadd.f32 %v1450, %v4137
    %v4154 = vadd.f32 %v1524, %v4138
    %v4155 = vadd.f32 %v1598, %v4139
    %v4156 = vadd.f32 %v1672, %v4140
    %v4157 = vadd.f32 %v1746, %v4141
    %v4158 = vadd.f32 %v1820, %v4142
    %v4159 = vadd.f32 %v1894, %v4143
    %v4160 = vadd.f32 %v1968, %v4144
    %v4161 = vsel %vm786, %v4145, -inf
    %4162 = vmax.xlane.f32.xlu0 %v4161
    %v4163 = vpop.xlane.xlu0 %4162
    %v4164 = vsel %vm786, %v4146, -inf
    %4165 = vmax.xlane.f32.xlu0 %v4164
    %v4166 = vpop.xlane.xlu0 %4165
    %v4167 = vsel %vm786, %v4147, -inf
    %4168 = vmax.xlane.f32.xlu0 %v4167
    %v4169 = vpop.xlane.xlu0 %4168
    %v4170 = vsel %vm786, %v4148, -inf
    %4171 = vmax.xlane.f32.xlu0 %v4170
    %v4172 = vpop.xlane.xlu0 %4171
    %v4173 = vsel %vm786, %v4149, -inf
    %4174 = vmax.xlane.f32.xlu0 %v4173
    %v4175 = vpop.xlane.xlu0 %4174
    %v4176 = vsel %vm786, %v4150, -inf
    %4177 = vmax.xlane.f32.xlu0 %v4176
    %v4178 = vpop.xlane.xlu0 %4177
    %v4179 = vsel %vm786, %v4151, -inf
    %4180 = vmax.xlane.f32.xlu0 %v4179
    %v4181 = vpop.xlane.xlu0 %4180
    %v4182 = vsel %vm786, %v4152, -inf
    %4183 = vmax.xlane.f32.xlu0 %v4182
    %v4184 = vpop.xlane.xlu0 %4183
    %v4185 = vsel %vm786, %v4153, -inf
    %4186 = vmax.xlane.f32.xlu0 %v4185
    %v4187 = vpop.xlane.xlu0 %4186
    %v4188 = vsel %vm786, %v4154, -inf
    %4189 = vmax.xlane.f32.xlu0 %v4188
    %v4190 = vpop.xlane.xlu0 %4189
    %v4191 = vsel %vm786, %v4155, -inf
    %4192 = vmax.xlane.f32.xlu0 %v4191
    %v4193 = vpop.xlane.xlu0 %4192
    %v4194 = vsel %vm786, %v4156, -inf
    %4195 = vmax.xlane.f32.xlu0 %v4194
    %v4196 = vpop.xlane.xlu0 %4195
    %v4197 = vsel %vm786, %v4157, -inf
    %4198 = vmax.xlane.f32.xlu0 %v4197
    %v4199 = vpop.xlane.xlu0 %4198
    %v4200 = vsel %vm786, %v4158, -inf
    %4201 = vmax.xlane.f32.xlu0 %v4200
    %v4202 = vpop.xlane.xlu0 %4201
    %v4203 = vsel %vm786, %v4159, -inf
    %4204 = vmax.xlane.f32.xlu0 %v4203
    %v4205 = vpop.xlane.xlu0 %4204
    %v4206 = vsel %vm786, %v4160, -inf
    %4207 = vmax.xlane.f32.xlu0 %v4206
    %v4208 = vpop.xlane.xlu0 %4207
    %v4209 = vsub.f32 %v4145, %v4163
    %v4210 = vsub.f32 %v4146, %v4166
    %v4211 = vsub.f32 %v4147, %v4169
    %v4212 = vsub.f32 %v4148, %v4172
    %v4213 = vsub.f32 %v4149, %v4175
    %v4214 = vsub.f32 %v4150, %v4178
    %v4215 = vsub.f32 %v4151, %v4181
    %v4216 = vsub.f32 %v4152, %v4184
    %v4217 = vsub.f32 %v4153, %v4187
    %v4218 = vsub.f32 %v4154, %v4190
    %v4219 = vsub.f32 %v4155, %v4193
    %v4220 = vsub.f32 %v4156, %v4196
    %v4221 = vsub.f32 %v4157, %v4199
    %v4222 = vsub.f32 %v4158, %v4202
    %v4223 = vsub.f32 %v4159, %v4205
    %v4224 = vsub.f32 %v4160, %v4208
    %v4225 = vmul.f32 %v4209, 1.442695
    %v4226 = vpow.pop %v4225
    %v4227 = vmul.f32 %v4210, 1.442695
    %v4228 = vpow.pop %v4227
    %v4229 = vmul.f32 %v4211, 1.442695
    %v4230 = vpow.pop %v4229
    %v4231 = vmul.f32 %v4212, 1.442695
    %v4232 = vpow.pop %v4231
    %v4233 = vmul.f32 %v4213, 1.442695
    %v4234 = vpow.pop %v4233
    %v4235 = vmul.f32 %v4214, 1.442695
    %v4236 = vpow.pop %v4235
    %v4237 = vmul.f32 %v4215, 1.442695
    %v4238 = vpow.pop %v4237
    %v4239 = vmul.f32 %v4216, 1.442695
    %v4240 = vpow.pop %v4239
    %v4241 = vmul.f32 %v4217, 1.442695
    %v4242 = vpow.pop %v4241
    %v4243 = vmul.f32 %v4218, 1.442695
    %v4244 = vpow.pop %v4243
    %v4245 = vmul.f32 %v4219, 1.442695
    %v4246 = vpow.pop %v4245
    %v4247 = vmul.f32 %v4220, 1.442695
    %v4248 = vpow.pop %v4247
    %v4249 = vmul.f32 %v4221, 1.442695
    %v4250 = vpow.pop %v4249
    %v4251 = vmul.f32 %v4222, 1.442695
    %v4252 = vpow.pop %v4251
    %v4253 = vmul.f32 %v4223, 1.442695
    %v4254 = vpow.pop %v4253
    %v4255 = vmul.f32 %v4224, 1.442695
    %v4256 = vpow.pop %v4255
    %v4257 = vsel %vm786, %v4226, 0.0
    %4258 = vadd.xlane.f32.xlu0 %v4257
    %v4259 = vpop.xlane.xlu0 %4258
    %v4260 = vsel %vm786, %v4228, 0.0
    %4261 = vadd.xlane.f32.xlu0 %v4260
    %v4262 = vpop.xlane.xlu0 %4261
    %v4263 = vsel %vm786, %v4230, 0.0
    %4264 = vadd.xlane.f32.xlu0 %v4263
    %v4265 = vpop.xlane.xlu0 %4264
    %v4266 = vsel %vm786, %v4232, 0.0
    %4267 = vadd.xlane.f32.xlu0 %v4266
    %v4268 = vpop.xlane.xlu0 %4267
    %v4269 = vsel %vm786, %v4234, 0.0
    %4270 = vadd.xlane.f32.xlu0 %v4269
    %v4271 = vpop.xlane.xlu0 %4270
    %v4272 = vsel %vm786, %v4236, 0.0
    %4273 = vadd.xlane.f32.xlu0 %v4272
    %v4274 = vpop.xlane.xlu0 %4273
    %v4275 = vsel %vm786, %v4238, 0.0
    %4276 = vadd.xlane.f32.xlu0 %v4275
    %v4277 = vpop.xlane.xlu0 %4276
    %v4278 = vsel %vm786, %v4240, 0.0
    %4279 = vadd.xlane.f32.xlu0 %v4278
    %v4280 = vpop.xlane.xlu0 %4279
    %v4281 = vsel %vm786, %v4242, 0.0
    %4282 = vadd.xlane.f32.xlu0 %v4281
    %v4283 = vpop.xlane.xlu0 %4282
    %v4284 = vsel %vm786, %v4244, 0.0
    %4285 = vadd.xlane.f32.xlu0 %v4284
    %v4286 = vpop.xlane.xlu0 %4285
    %v4287 = vsel %vm786, %v4246, 0.0
    %4288 = vadd.xlane.f32.xlu0 %v4287
    %v4289 = vpop.xlane.xlu0 %4288
    %v4290 = vsel %vm786, %v4248, 0.0
    %4291 = vadd.xlane.f32.xlu0 %v4290
    %v4292 = vpop.xlane.xlu0 %4291
    %v4293 = vsel %vm786, %v4250, 0.0
    %4294 = vadd.xlane.f32.xlu0 %v4293
    %v4295 = vpop.xlane.xlu0 %4294
    %v4296 = vsel %vm786, %v4252, 0.0
    %4297 = vadd.xlane.f32.xlu0 %v4296
    %v4298 = vpop.xlane.xlu0 %4297
    %v4299 = vsel %vm786, %v4254, 0.0
    %4300 = vadd.xlane.f32.xlu0 %v4299
    %v4301 = vpop.xlane.xlu0 %4300
    %v4302 = vsel %vm786, %v4256, 0.0
    %4303 = vadd.xlane.f32.xlu0 %v4302
    %v4304 = vpop.xlane.xlu0 %4303
    %v4305 = vrcp.pop %v4259
    %v4306 = vmul.f32 %v4226, %v4305
    %v4307 = vrcp.pop %v4262
    %v4308 = vmul.f32 %v4228, %v4307
    %v4309 = vrcp.pop %v4265
    %v4310 = vmul.f32 %v4230, %v4309
    %v4311 = vrcp.pop %v4268
    %v4312 = vmul.f32 %v4232, %v4311
    %v4313 = vrcp.pop %v4271
    %v4314 = vmul.f32 %v4234, %v4313
    %v4315 = vrcp.pop %v4274
    %v4316 = vmul.f32 %v4236, %v4315
    %v4317 = vrcp.pop %v4277
    %v4318 = vmul.f32 %v4238, %v4317
    %v4319 = vrcp.pop %v4280
    %v4320 = vmul.f32 %v4240, %v4319
    %v4321 = vrcp.pop %v4283
    %v4322 = vmul.f32 %v4242, %v4321
    %v4323 = vrcp.pop %v4286
    %v4324 = vmul.f32 %v4244, %v4323
    %v4325 = vrcp.pop %v4289
    %v4326 = vmul.f32 %v4246, %v4325
    %v4327 = vrcp.pop %v4292
    %v4328 = vmul.f32 %v4248, %v4327
    %v4329 = vrcp.pop %v4295
    %v4330 = vmul.f32 %v4250, %v4329
    %v4331 = vrcp.pop %v4298
    %v4332 = vmul.f32 %v4252, %v4331
    %v4333 = vrcp.pop %v4301
    %v4334 = vmul.f32 %v4254, %v4333
    %v4335 = vrcp.pop %v4304
    %v4336 = vmul.f32 %v4256, %v4335
    %v4338 = vsel %vm786, %v4306, 0
    %v4340 = vsel %vm786, %v658, 0
    %4342 = vmatprep.subr.mxu0 0.0
    %4343 = vmatpush1.xpose.msra.mxu0 %v4340
    %4344 = vmatprep.subr.mxu0 0.0
    %4345 = vmatpush1.xpose.msra.mxu0 0.0
    %4346 = vmatprep.subr.mxu0 0.0
    %4347 = vmatpush1.xpose.msra.mxu0 0.0
    %4348 = vmatprep.subr.mxu0 0.0
    %4349 = vmatpush1.xpose.msra.mxu0 0.0
    %4350 = vmatprep.subr.mxu0 0.0
    %4351 = vmatpush1.xpose.msra.mxu0 0.0
    %4352 = vmatprep.subr.mxu0 0.0
    %4353 = vmatpush1.xpose.msra.mxu0 0.0
    %4354 = vmatprep.subr.mxu0 0.0
    %4355 = vmatpush1.xpose.msra.mxu0 0.0
    %4356 = vmatprep.subr.mxu0 0.0
    %4357 = vmatpush1.xpose.msra.mxu0 0.0
    %4358 = vmatprep.subr.mxu0 0.0
    %4359 = vmatpush1.xpose.msra.mxu0 0.0
    %4360 = vmatprep.subr.mxu0 0.0
    %4361 = vmatpush1.xpose.msra.mxu0 0.0
    %4362 = vmatprep.subr.mxu0 0.0
    %4363 = vmatpush1.xpose.msra.mxu0 0.0
    %4364 = vmatprep.subr.mxu0 0.0
    %4365 = vmatpush1.xpose.msra.mxu0 0.0
    %4366 = vmatprep.subr.mxu0 0.0
    %4367 = vmatpush1.xpose.msra.mxu0 0.0
    %4368 = vmatprep.subr.mxu0 0.0
    %4369 = vmatpush1.xpose.msra.mxu0 0.0
    %4370 = vmatprep.subr.mxu0 0.0
    %4371 = vmatpush1.xpose.msra.mxu0 0.0
    %4372 = vmatprep.subr.mxu0 0.0
    %4373 = vmatpush1.xpose.msra.mxu0 0.0
    %4374 = vmatprep.subr.mxu0 0.0
    %4375 = vmatpush1.xpose.msra.mxu0 0.0
    %4376 = vmatprep.subr.mxu0 0.0
    %4377 = vmatpush1.xpose.msra.mxu0 0.0
    %4378 = vmatprep.subr.mxu0 0.0
    %4379 = vmatpush1.xpose.msra.mxu0 0.0
    %4380 = vmatprep.subr.mxu0 0.0
    %4381 = vmatpush1.xpose.msra.mxu0 0.0
    %4382 = vmatprep.subr.mxu0 0.0
    %4383 = vmatpush1.xpose.msra.mxu0 0.0
    %4384 = vmatprep.subr.mxu0 0.0
    %4385 = vmatpush1.xpose.msra.mxu0 0.0
    %4386 = vmatprep.subr.mxu0 0.0
    %4387 = vmatpush1.xpose.msra.mxu0 0.0
    %4388 = vmatprep.subr.mxu0 0.0
    %4389 = vmatpush1.xpose.msra.mxu0 0.0
    %4390 = vmatprep.subr.mxu0 0.0
    %4391 = vmatpush1.xpose.msra.mxu0 0.0
    %4392 = vmatprep.subr.mxu0 0.0
    %4393 = vmatpush1.xpose.msra.mxu0 0.0
    %4394 = vmatprep.subr.mxu0 0.0
    %4395 = vmatpush1.xpose.msra.mxu0 0.0
    %4396 = vmatprep.subr.mxu0 0.0
    %4397 = vmatpush1.xpose.msra.mxu0 0.0
    %4398 = vmatprep.subr.mxu0 0.0
    %4399 = vmatpush1.xpose.msra.mxu0 0.0
    %4400 = vmatprep.subr.mxu0 0.0
    %4401 = vmatpush1.xpose.msra.mxu0 0.0
    %4402 = vmatprep.subr.mxu0 0.0
    %4403 = vmatpush1.xpose.msra.mxu0 0.0
    %4404 = vmatprep.subr.mxu0 0.0
    %4405 = vmatpush1.xpose.msra.mxu0 0.0
    %4406 = vmatprep.mubr.f32.mxu0 0.0
    %4407 = vmatmul.mubr.f32.gmra.mrb[0].mxu0 %v4338
    %v4408 = vpop.f32.mrb[0].mxu0
    %v4409 = vadd.f32 0.0, %v4408
    %v4410 = vpop.f32.mrb[0].mxu0
    %4411 = vdwg.mxu0
    %v4413 = vsel %vm786, %v4308, 0
    %v4415 = vsel %vm786, %v659, 0
    %4417 = vmatprep.subr.mxu0 0.0
    %4418 = vmatpush1.xpose.msra.mxu0 %v4415
    %4419 = vmatprep.subr.mxu0 0.0
    %4420 = vmatpush1.xpose.msra.mxu0 0.0
    %4421 = vmatprep.subr.mxu0 0.0
    %4422 = vmatpush1.xpose.msra.mxu0 0.0
    %4423 = vmatprep.subr.mxu0 0.0
    %4424 = vmatpush1.xpose.msra.mxu0 0.0
    %4425 = vmatprep.subr.mxu0 0.0
    %4426 = vmatpush1.xpose.msra.mxu0 0.0
    %4427 = vmatprep.subr.mxu0 0.0
    %4428 = vmatpush1.xpose.msra.mxu0 0.0
    %4429 = vmatprep.subr.mxu0 0.0
    %4430 = vmatpush1.xpose.msra.mxu0 0.0
    %4431 = vmatprep.subr.mxu0 0.0
    %4432 = vmatpush1.xpose.msra.mxu0 0.0
    %4433 = vmatprep.subr.mxu0 0.0
    %4434 = vmatpush1.xpose.msra.mxu0 0.0
    %4435 = vmatprep.subr.mxu0 0.0
    %4436 = vmatpush1.xpose.msra.mxu0 0.0
    %4437 = vmatprep.subr.mxu0 0.0
    %4438 = vmatpush1.xpose.msra.mxu0 0.0
    %4439 = vmatprep.subr.mxu0 0.0
    %4440 = vmatpush1.xpose.msra.mxu0 0.0
    %4441 = vmatprep.subr.mxu0 0.0
    %4442 = vmatpush1.xpose.msra.mxu0 0.0
    %4443 = vmatprep.subr.mxu0 0.0
    %4444 = vmatpush1.xpose.msra.mxu0 0.0
    %4445 = vmatprep.subr.mxu0 0.0
    %4446 = vmatpush1.xpose.msra.mxu0 0.0
    %4447 = vmatprep.subr.mxu0 0.0
    %4448 = vmatpush1.xpose.msra.mxu0 0.0
    %4449 = vmatprep.subr.mxu0 0.0
    %4450 = vmatpush1.xpose.msra.mxu0 0.0
    %4451 = vmatprep.subr.mxu0 0.0
    %4452 = vmatpush1.xpose.msra.mxu0 0.0
    %4453 = vmatprep.subr.mxu0 0.0
    %4454 = vmatpush1.xpose.msra.mxu0 0.0
    %4455 = vmatprep.subr.mxu0 0.0
    %4456 = vmatpush1.xpose.msra.mxu0 0.0
    %4457 = vmatprep.subr.mxu0 0.0
    %4458 = vmatpush1.xpose.msra.mxu0 0.0
    %4459 = vmatprep.subr.mxu0 0.0
    %4460 = vmatpush1.xpose.msra.mxu0 0.0
    %4461 = vmatprep.subr.mxu0 0.0
    %4462 = vmatpush1.xpose.msra.mxu0 0.0
    %4463 = vmatprep.subr.mxu0 0.0
    %4464 = vmatpush1.xpose.msra.mxu0 0.0
    %4465 = vmatprep.subr.mxu0 0.0
    %4466 = vmatpush1.xpose.msra.mxu0 0.0
    %4467 = vmatprep.subr.mxu0 0.0
    %4468 = vmatpush1.xpose.msra.mxu0 0.0
    %4469 = vmatprep.subr.mxu0 0.0
    %4470 = vmatpush1.xpose.msra.mxu0 0.0
    %4471 = vmatprep.subr.mxu0 0.0
    %4472 = vmatpush1.xpose.msra.mxu0 0.0
    %4473 = vmatprep.subr.mxu0 0.0
    %4474 = vmatpush1.xpose.msra.mxu0 0.0
    %4475 = vmatprep.subr.mxu0 0.0
    %4476 = vmatpush1.xpose.msra.mxu0 0.0
    %4477 = vmatprep.subr.mxu0 0.0
    %4478 = vmatpush1.xpose.msra.mxu0 0.0
    %4479 = vmatprep.subr.mxu0 0.0
    %4480 = vmatpush1.xpose.msra.mxu0 0.0
    %4481 = vmatprep.mubr.f32.mxu0 0.0
    %4482 = vmatmul.mubr.f32.gmra.mrb[0].mxu0 %v4413
    %v4483 = vpop.f32.mrb[0].mxu0
    %v4484 = vadd.f32 0.0, %v4483
    %v4485 = vpop.f32.mrb[0].mxu0
    %4486 = vdwg.mxu0
    %v4488 = vsel %vm786, %v4310, 0
    %v4490 = vsel %vm786, %v660, 0
    %4492 = vmatprep.subr.mxu0 0.0
    %4493 = vmatpush1.xpose.msra.mxu0 %v4490
    %4494 = vmatprep.subr.mxu0 0.0
    %4495 = vmatpush1.xpose.msra.mxu0 0.0
    %4496 = vmatprep.subr.mxu0 0.0
    %4497 = vmatpush1.xpose.msra.mxu0 0.0
    %4498 = vmatprep.subr.mxu0 0.0
    %4499 = vmatpush1.xpose.msra.mxu0 0.0
    %4500 = vmatprep.subr.mxu0 0.0
    %4501 = vmatpush1.xpose.msra.mxu0 0.0
    %4502 = vmatprep.subr.mxu0 0.0
    %4503 = vmatpush1.xpose.msra.mxu0 0.0
    %4504 = vmatprep.subr.mxu0 0.0
    %4505 = vmatpush1.xpose.msra.mxu0 0.0
    %4506 = vmatprep.subr.mxu0 0.0
    %4507 = vmatpush1.xpose.msra.mxu0 0.0
    %4508 = vmatprep.subr.mxu0 0.0
    %4509 = vmatpush1.xpose.msra.mxu0 0.0
    %4510 = vmatprep.subr.mxu0 0.0
    %4511 = vmatpush1.xpose.msra.mxu0 0.0
    %4512 = vmatprep.subr.mxu0 0.0
    %4513 = vmatpush1.xpose.msra.mxu0 0.0
    %4514 = vmatprep.subr.mxu0 0.0
    %4515 = vmatpush1.xpose.msra.mxu0 0.0
    %4516 = vmatprep.subr.mxu0 0.0
    %4517 = vmatpush1.xpose.msra.mxu0 0.0
    %4518 = vmatprep.subr.mxu0 0.0
    %4519 = vmatpush1.xpose.msra.mxu0 0.0
    %4520 = vmatprep.subr.mxu0 0.0
    %4521 = vmatpush1.xpose.msra.mxu0 0.0
    %4522 = vmatprep.subr.mxu0 0.0
    %4523 = vmatpush1.xpose.msra.mxu0 0.0
    %4524 = vmatprep.subr.mxu0 0.0
    %4525 = vmatpush1.xpose.msra.mxu0 0.0
    %4526 = vmatprep.subr.mxu0 0.0
    %4527 = vmatpush1.xpose.msra.mxu0 0.0
    %4528 = vmatprep.subr.mxu0 0.0
    %4529 = vmatpush1.xpose.msra.mxu0 0.0
    %4530 = vmatprep.subr.mxu0 0.0
    %4531 = vmatpush1.xpose.msra.mxu0 0.0
    %4532 = vmatprep.subr.mxu0 0.0
    %4533 = vmatpush1.xpose.msra.mxu0 0.0
    %4534 = vmatprep.subr.mxu0 0.0
    %4535 = vmatpush1.xpose.msra.mxu0 0.0
    %4536 = vmatprep.subr.mxu0 0.0
    %4537 = vmatpush1.xpose.msra.mxu0 0.0
    %4538 = vmatprep.subr.mxu0 0.0
    %4539 = vmatpush1.xpose.msra.mxu0 0.0
    %4540 = vmatprep.subr.mxu0 0.0
    %4541 = vmatpush1.xpose.msra.mxu0 0.0
    %4542 = vmatprep.subr.mxu0 0.0
    %4543 = vmatpush1.xpose.msra.mxu0 0.0
    %4544 = vmatprep.subr.mxu0 0.0
    %4545 = vmatpush1.xpose.msra.mxu0 0.0
    %4546 = vmatprep.subr.mxu0 0.0
    %4547 = vmatpush1.xpose.msra.mxu0 0.0
    %4548 = vmatprep.subr.mxu0 0.0
    %4549 = vmatpush1.xpose.msra.mxu0 0.0
    %4550 = vmatprep.subr.mxu0 0.0
    %4551 = vmatpush1.xpose.msra.mxu0 0.0
    %4552 = vmatprep.subr.mxu0 0.0
    %4553 = vmatpush1.xpose.msra.mxu0 0.0
    %4554 = vmatprep.subr.mxu0 0.0
    %4555 = vmatpush1.xpose.msra.mxu0 0.0
    %4556 = vmatprep.mubr.f32.mxu0 0.0
    %4557 = vmatmul.mubr.f32.gmra.mrb[0].mxu0 %v4488
    %v4558 = vpop.f32.mrb[0].mxu0
    %v4559 = vadd.f32 0.0, %v4558
    %v4560 = vpop.f32.mrb[0].mxu0
    %4561 = vdwg.mxu0
    %v4563 = vsel %vm786, %v4312, 0
    %v4565 = vsel %vm786, %v661, 0
    %4567 = vmatprep.subr.mxu0 0.0
    %4568 = vmatpush1.xpose.msra.mxu0 %v4565
    %4569 = vmatprep.subr.mxu0 0.0
    %4570 = vmatpush1.xpose.msra.mxu0 0.0
    %4571 = vmatprep.subr.mxu0 0.0
    %4572 = vmatpush1.xpose.msra.mxu0 0.0
    %4573 = vmatprep.subr.mxu0 0.0
    %4574 = vmatpush1.xpose.msra.mxu0 0.0
    %4575 = vmatprep.subr.mxu0 0.0
    %4576 = vmatpush1.xpose.msra.mxu0 0.0
    %4577 = vmatprep.subr.mxu0 0.0
    %4578 = vmatpush1.xpose.msra.mxu0 0.0
    %4579 = vmatprep.subr.mxu0 0.0
    %4580 = vmatpush1.xpose.msra.mxu0 0.0
    %4581 = vmatprep.subr.mxu0 0.0
    %4582 = vmatpush1.xpose.msra.mxu0 0.0
    %4583 = vmatprep.subr.mxu0 0.0
    %4584 = vmatpush1.xpose.msra.mxu0 0.0
    %4585 = vmatprep.subr.mxu0 0.0
    %4586 = vmatpush1.xpose.msra.mxu0 0.0
    %4587 = vmatprep.subr.mxu0 0.0
    %4588 = vmatpush1.xpose.msra.mxu0 0.0
    %4589 = vmatprep.subr.mxu0 0.0
    %4590 = vmatpush1.xpose.msra.mxu0 0.0
    %4591 = vmatprep.subr.mxu0 0.0
    %4592 = vmatpush1.xpose.msra.mxu0 0.0
    %4593 = vmatprep.subr.mxu0 0.0
    %4594 = vmatpush1.xpose.msra.mxu0 0.0
    %4595 = vmatprep.subr.mxu0 0.0
    %4596 = vmatpush1.xpose.msra.mxu0 0.0
    %4597 = vmatprep.subr.mxu0 0.0
    %4598 = vmatpush1.xpose.msra.mxu0 0.0
    %4599 = vmatprep.subr.mxu0 0.0
    %4600 = vmatpush1.xpose.msra.mxu0 0.0
    %4601 = vmatprep.subr.mxu0 0.0
    %4602 = vmatpush1.xpose.msra.mxu0 0.0
    %4603 = vmatprep.subr.mxu0 0.0
    %4604 = vmatpush1.xpose.msra.mxu0 0.0
    %4605 = vmatprep.subr.mxu0 0.0
    %4606 = vmatpush1.xpose.msra.mxu0 0.0
    %4607 = vmatprep.subr.mxu0 0.0
    %4608 = vmatpush1.xpose.msra.mxu0 0.0
    %4609 = vmatprep.subr.mxu0 0.0
    %4610 = vmatpush1.xpose.msra.mxu0 0.0
    %4611 = vmatprep.subr.mxu0 0.0
    %4612 = vmatpush1.xpose.msra.mxu0 0.0
    %4613 = vmatprep.subr.mxu0 0.0
    %4614 = vmatpush1.xpose.msra.mxu0 0.0
    %4615 = vmatprep.subr.mxu0 0.0
    %4616 = vmatpush1.xpose.msra.mxu0 0.0
    %4617 = vmatprep.subr.mxu0 0.0
    %4618 = vmatpush1.xpose.msra.mxu0 0.0
    %4619 = vmatprep.subr.mxu0 0.0
    %4620 = vmatpush1.xpose.msra.mxu0 0.0
    %4621 = vmatprep.subr.mxu0 0.0
    %4622 = vmatpush1.xpose.msra.mxu0 0.0
    %4623 = vmatprep.subr.mxu0 0.0
    %4624 = vmatpush1.xpose.msra.mxu0 0.0
    %4625 = vmatprep.subr.mxu0 0.0
    %4626 = vmatpush1.xpose.msra.mxu0 0.0
    %4627 = vmatprep.subr.mxu0 0.0
    %4628 = vmatpush1.xpose.msra.mxu0 0.0
    %4629 = vmatprep.subr.mxu0 0.0
    %4630 = vmatpush1.xpose.msra.mxu0 0.0
    %4631 = vmatprep.mubr.f32.mxu0 0.0
    %4632 = vmatmul.mubr.f32.gmra.mrb[0].mxu0 %v4563
    %v4633 = vpop.f32.mrb[0].mxu0
    %v4634 = vadd.f32 0.0, %v4633
    %v4635 = vpop.f32.mrb[0].mxu0
    %4636 = vdwg.mxu0
    %v4638 = vsel %vm786, %v4314, 0
    %v4640 = vsel %vm786, %v662, 0
    %4642 = vmatprep.subr.mxu0 0.0
    %4643 = vmatpush1.xpose.msra.mxu0 %v4640
    %4644 = vmatprep.subr.mxu0 0.0
    %4645 = vmatpush1.xpose.msra.mxu0 0.0
    %4646 = vmatprep.subr.mxu0 0.0
    %4647 = vmatpush1.xpose.msra.mxu0 0.0
    %4648 = vmatprep.subr.mxu0 0.0
    %4649 = vmatpush1.xpose.msra.mxu0 0.0
    %4650 = vmatprep.subr.mxu0 0.0
    %4651 = vmatpush1.xpose.msra.mxu0 0.0
    %4652 = vmatprep.subr.mxu0 0.0
    %4653 = vmatpush1.xpose.msra.mxu0 0.0
    %4654 = vmatprep.subr.mxu0 0.0
    %4655 = vmatpush1.xpose.msra.mxu0 0.0
    %4656 = vmatprep.subr.mxu0 0.0
    %4657 = vmatpush1.xpose.msra.mxu0 0.0
    %4658 = vmatprep.subr.mxu0 0.0
    %4659 = vmatpush1.xpose.msra.mxu0 0.0
    %4660 = vmatprep.subr.mxu0 0.0
    %4661 = vmatpush1.xpose.msra.mxu0 0.0
    %4662 = vmatprep.subr.mxu0 0.0
    %4663 = vmatpush1.xpose.msra.mxu0 0.0
    %4664 = vmatprep.subr.mxu0 0.0
    %4665 = vmatpush1.xpose.msra.mxu0 0.0
    %4666 = vmatprep.subr.mxu0 0.0
    %4667 = vmatpush1.xpose.msra.mxu0 0.0
    %4668 = vmatprep.subr.mxu0 0.0
    %4669 = vmatpush1.xpose.msra.mxu0 0.0
    %4670 = vmatprep.subr.mxu0 0.0
    %4671 = vmatpush1.xpose.msra.mxu0 0.0
    %4672 = vmatprep.subr.mxu0 0.0
    %4673 = vmatpush1.xpose.msra.mxu0 0.0
    %4674 = vmatprep.subr.mxu0 0.0
    %4675 = vmatpush1.xpose.msra.mxu0 0.0
    %4676 = vmatprep.subr.mxu0 0.0
    %4677 = vmatpush1.xpose.msra.mxu0 0.0
    %4678 = vmatprep.subr.mxu0 0.0
    %4679 = vmatpush1.xpose.msra.mxu0 0.0
    %4680 = vmatprep.subr.mxu0 0.0
    %4681 = vmatpush1.xpose.msra.mxu0 0.0
    %4682 = vmatprep.subr.mxu0 0.0
    %4683 = vmatpush1.xpose.msra.mxu0 0.0
    %4684 = vmatprep.subr.mxu0 0.0
    %4685 = vmatpush1.xpose.msra.mxu0 0.0
    %4686 = vmatprep.subr.mxu0 0.0
    %4687 = vmatpush1.xpose.msra.mxu0 0.0
    %4688 = vmatprep.subr.mxu0 0.0
    %4689 = vmatpush1.xpose.msra.mxu0 0.0
    %4690 = vmatprep.subr.mxu0 0.0
    %4691 = vmatpush1.xpose.msra.mxu0 0.0
    %4692 = vmatprep.subr.mxu0 0.0
    %4693 = vmatpush1.xpose.msra.mxu0 0.0
    %4694 = vmatprep.subr.mxu0 0.0
    %4695 = vmatpush1.xpose.msra.mxu0 0.0
    %4696 = vmatprep.subr.mxu0 0.0
    %4697 = vmatpush1.xpose.msra.mxu0 0.0
    %4698 = vmatprep.subr.mxu0 0.0
    %4699 = vmatpush1.xpose.msra.mxu0 0.0
    %4700 = vmatprep.subr.mxu0 0.0
    %4701 = vmatpush1.xpose.msra.mxu0 0.0
    %4702 = vmatprep.subr.mxu0 0.0
    %4703 = vmatpush1.xpose.msra.mxu0 0.0
    %4704 = vmatprep.subr.mxu0 0.0
    %4705 = vmatpush1.xpose.msra.mxu0 0.0
    %4706 = vmatprep.mubr.f32.mxu0 0.0
    %4707 = vmatmul.mubr.f32.gmra.mrb[0].mxu0 %v4638
    %v4708 = vpop.f32.mrb[0].mxu0
    %v4709 = vadd.f32 0.0, %v4708
    %v4710 = vpop.f32.mrb[0].mxu0
    %4711 = vdwg.mxu0
    %v4713 = vsel %vm786, %v4316, 0
    %v4715 = vsel %vm786, %v663, 0
    %4717 = vmatprep.subr.mxu0 0.0
    %4718 = vmatpush1.xpose.msra.mxu0 %v4715
    %4719 = vmatprep.subr.mxu0 0.0
    %4720 = vmatpush1.xpose.msra.mxu0 0.0
    %4721 = vmatprep.subr.mxu0 0.0
    %4722 = vmatpush1.xpose.msra.mxu0 0.0
    %4723 = vmatprep.subr.mxu0 0.0
    %4724 = vmatpush1.xpose.msra.mxu0 0.0
    %4725 = vmatprep.subr.mxu0 0.0
    %4726 = vmatpush1.xpose.msra.mxu0 0.0
    %4727 = vmatprep.subr.mxu0 0.0
    %4728 = vmatpush1.xpose.msra.mxu0 0.0
    %4729 = vmatprep.subr.mxu0 0.0
    %4730 = vmatpush1.xpose.msra.mxu0 0.0
    %4731 = vmatprep.subr.mxu0 0.0
    %4732 = vmatpush1.xpose.msra.mxu0 0.0
    %4733 = vmatprep.subr.mxu0 0.0
    %4734 = vmatpush1.xpose.msra.mxu0 0.0
    %4735 = vmatprep.subr.mxu0 0.0
    %4736 = vmatpush1.xpose.msra.mxu0 0.0
    %4737 = vmatprep.subr.mxu0 0.0
    %4738 = vmatpush1.xpose.msra.mxu0 0.0
    %4739 = vmatprep.subr.mxu0 0.0
    %4740 = vmatpush1.xpose.msra.mxu0 0.0
    %4741 = vmatprep.subr.mxu0 0.0
    %4742 = vmatpush1.xpose.msra.mxu0 0.0
    %4743 = vmatprep.subr.mxu0 0.0
    %4744 = vmatpush1.xpose.msra.mxu0 0.0
    %4745 = vmatprep.subr.mxu0 0.0
    %4746 = vmatpush1.xpose.msra.mxu0 0.0
    %4747 = vmatprep.subr.mxu0 0.0
    %4748 = vmatpush1.xpose.msra.mxu0 0.0
    %4749 = vmatprep.subr.mxu0 0.0
    %4750 = vmatpush1.xpose.msra.mxu0 0.0
    %4751 = vmatprep.subr.mxu0 0.0
    %4752 = vmatpush1.xpose.msra.mxu0 0.0
    %4753 = vmatprep.subr.mxu0 0.0
    %4754 = vmatpush1.xpose.msra.mxu0 0.0
    %4755 = vmatprep.subr.mxu0 0.0
    %4756 = vmatpush1.xpose.msra.mxu0 0.0
    %4757 = vmatprep.subr.mxu0 0.0
    %4758 = vmatpush1.xpose.msra.mxu0 0.0
    %4759 = vmatprep.subr.mxu0 0.0
    %4760 = vmatpush1.xpose.msra.mxu0 0.0
    %4761 = vmatprep.subr.mxu0 0.0
    %4762 = vmatpush1.xpose.msra.mxu0 0.0
    %4763 = vmatprep.subr.mxu0 0.0
    %4764 = vmatpush1.xpose.msra.mxu0 0.0
    %4765 = vmatprep.subr.mxu0 0.0
    %4766 = vmatpush1.xpose.msra.mxu0 0.0
    %4767 = vmatprep.subr.mxu0 0.0
    %4768 = vmatpush1.xpose.msra.mxu0 0.0
    %4769 = vmatprep.subr.mxu0 0.0
    %4770 = vmatpush1.xpose.msra.mxu0 0.0
    %4771 = vmatprep.subr.mxu0 0.0
    %4772 = vmatpush1.xpose.msra.mxu0 0.0
    %4773 = vmatprep.subr.mxu0 0.0
    %4774 = vmatpush1.xpose.msra.mxu0 0.0
    %4775 = vmatprep.subr.mxu0 0.0
    %4776 = vmatpush1.xpose.msra.mxu0 0.0
    %4777 = vmatprep.subr.mxu0 0.0
    %4778 = vmatpush1.xpose.msra.mxu0 0.0
    %4779 = vmatprep.subr.mxu0 0.0
    %4780 = vmatpush1.xpose.msra.mxu0 0.0
    %4781 = vmatprep.mubr.f32.mxu0 0.0
    %4782 = vmatmul.mubr.f32.gmra.mrb[0].mxu0 %v4713
    %v4783 = vpop.f32.mrb[0].mxu0
    %v4784 = vadd.f32 0.0, %v4783
    %v4785 = vpop.f32.mrb[0].mxu0
    %4786 = vdwg.mxu0
    %v4788 = vsel %vm786, %v4318, 0
    %v4790 = vsel %vm786, %v664, 0
    %4792 = vmatprep.subr.mxu0 0.0
    %4793 = vmatpush1.xpose.msra.mxu0 %v4790
    %4794 = vmatprep.subr.mxu0 0.0
    %4795 = vmatpush1.xpose.msra.mxu0 0.0
    %4796 = vmatprep.subr.mxu0 0.0
    %4797 = vmatpush1.xpose.msra.mxu0 0.0
    %4798 = vmatprep.subr.mxu0 0.0
    %4799 = vmatpush1.xpose.msra.mxu0 0.0
    %4800 = vmatprep.subr.mxu0 0.0
    %4801 = vmatpush1.xpose.msra.mxu0 0.0
    %4802 = vmatprep.subr.mxu0 0.0
    %4803 = vmatpush1.xpose.msra.mxu0 0.0
    %4804 = vmatprep.subr.mxu0 0.0
    %4805 = vmatpush1.xpose.msra.mxu0 0.0
    %4806 = vmatprep.subr.mxu0 0.0
    %4807 = vmatpush1.xpose.msra.mxu0 0.0
    %4808 = vmatprep.subr.mxu0 0.0
    %4809 = vmatpush1.xpose.msra.mxu0 0.0
    %4810 = vmatprep.subr.mxu0 0.0
    %4811 = vmatpush1.xpose.msra.mxu0 0.0
    %4812 = vmatprep.subr.mxu0 0.0
    %4813 = vmatpush1.xpose.msra.mxu0 0.0
    %4814 = vmatprep.subr.mxu0 0.0
    %4815 = vmatpush1.xpose.msra.mxu0 0.0
    %4816 = vmatprep.subr.mxu0 0.0
    %4817 = vmatpush1.xpose.msra.mxu0 0.0
    %4818 = vmatprep.subr.mxu0 0.0
    %4819 = vmatpush1.xpose.msra.mxu0 0.0
    %4820 = vmatprep.subr.mxu0 0.0
    %4821 = vmatpush1.xpose.msra.mxu0 0.0
    %4822 = vmatprep.subr.mxu0 0.0
    %4823 = vmatpush1.xpose.msra.mxu0 0.0
    %4824 = vmatprep.subr.mxu0 0.0
    %4825 = vmatpush1.xpose.msra.mxu0 0.0
    %4826 = vmatprep.subr.mxu0 0.0
    %4827 = vmatpush1.xpose.msra.mxu0 0.0
    %4828 = vmatprep.subr.mxu0 0.0
    %4829 = vmatpush1.xpose.msra.mxu0 0.0
    %4830 = vmatprep.subr.mxu0 0.0
    %4831 = vmatpush1.xpose.msra.mxu0 0.0
    %4832 = vmatprep.subr.mxu0 0.0
    %4833 = vmatpush1.xpose.msra.mxu0 0.0
    %4834 = vmatprep.subr.mxu0 0.0
    %4835 = vmatpush1.xpose.msra.mxu0 0.0
    %4836 = vmatprep.subr.mxu0 0.0
    %4837 = vmatpush1.xpose.msra.mxu0 0.0
    %4838 = vmatprep.subr.mxu0 0.0
    %4839 = vmatpush1.xpose.msra.mxu0 0.0
    %4840 = vmatprep.subr.mxu0 0.0
    %4841 = vmatpush1.xpose.msra.mxu0 0.0
    %4842 = vmatprep.subr.mxu0 0.0
    %4843 = vmatpush1.xpose.msra.mxu0 0.0
    %4844 = vmatprep.subr.mxu0 0.0
    %4845 = vmatpush1.xpose.msra.mxu0 0.0
    %4846 = vmatprep.subr.mxu0 0.0
    %4847 = vmatpush1.xpose.msra.mxu0 0.0
    %4848 = vmatprep.subr.mxu0 0.0
    %4849 = vmatpush1.xpose.msra.mxu0 0.0
    %4850 = vmatprep.subr.mxu0 0.0
    %4851 = vmatpush1.xpose.msra.mxu0 0.0
    %4852 = vmatprep.subr.mxu0 0.0
    %4853 = vmatpush1.xpose.msra.mxu0 0.0
    %4854 = vmatprep.subr.mxu0 0.0
    %4855 = vmatpush1.xpose.msra.mxu0 0.0
    %4856 = vmatprep.mubr.f32.mxu0 0.0
    %4857 = vmatmul.mubr.f32.gmra.mrb[0].mxu0 %v4788
    %v4858 = vpop.f32.mrb[0].mxu0
    %v4859 = vadd.f32 0.0, %v4858
    %v4860 = vpop.f32.mrb[0].mxu0
    %4861 = vdwg.mxu0
    %v4863 = vsel %vm786, %v4320, 0
    %v4865 = vsel %vm786, %v665, 0
    %4867 = vmatprep.subr.mxu0 0.0
    %4868 = vmatpush1.xpose.msra.mxu0 %v4865
    %4869 = vmatprep.subr.mxu0 0.0
    %4870 = vmatpush1.xpose.msra.mxu0 0.0
    %4871 = vmatprep.subr.mxu0 0.0
    %4872 = vmatpush1.xpose.msra.mxu0 0.0
    %4873 = vmatprep.subr.mxu0 0.0
    %4874 = vmatpush1.xpose.msra.mxu0 0.0
    %4875 = vmatprep.subr.mxu0 0.0
    %4876 = vmatpush1.xpose.msra.mxu0 0.0
    %4877 = vmatprep.subr.mxu0 0.0
    %4878 = vmatpush1.xpose.msra.mxu0 0.0
    %4879 = vmatprep.subr.mxu0 0.0
    %4880 = vmatpush1.xpose.msra.mxu0 0.0
    %4881 = vmatprep.subr.mxu0 0.0
    %4882 = vmatpush1.xpose.msra.mxu0 0.0
    %4883 = vmatprep.subr.mxu0 0.0
    %4884 = vmatpush1.xpose.msra.mxu0 0.0
    %4885 = vmatprep.subr.mxu0 0.0
    %4886 = vmatpush1.xpose.msra.mxu0 0.0
    %4887 = vmatprep.subr.mxu0 0.0
    %4888 = vmatpush1.xpose.msra.mxu0 0.0
    %4889 = vmatprep.subr.mxu0 0.0
    %4890 = vmatpush1.xpose.msra.mxu0 0.0
    %4891 = vmatprep.subr.mxu0 0.0
    %4892 = vmatpush1.xpose.msra.mxu0 0.0
    %4893 = vmatprep.subr.mxu0 0.0
    %4894 = vmatpush1.xpose.msra.mxu0 0.0
    %4895 = vmatprep.subr.mxu0 0.0
    %4896 = vmatpush1.xpose.msra.mxu0 0.0
    %4897 = vmatprep.subr.mxu0 0.0
    %4898 = vmatpush1.xpose.msra.mxu0 0.0
    %4899 = vmatprep.subr.mxu0 0.0
    %4900 = vmatpush1.xpose.msra.mxu0 0.0
    %4901 = vmatprep.subr.mxu0 0.0
    %4902 = vmatpush1.xpose.msra.mxu0 0.0
    %4903 = vmatprep.subr.mxu0 0.0
    %4904 = vmatpush1.xpose.msra.mxu0 0.0
    %4905 = vmatprep.subr.mxu0 0.0
    %4906 = vmatpush1.xpose.msra.mxu0 0.0
    %4907 = vmatprep.subr.mxu0 0.0
    %4908 = vmatpush1.xpose.msra.mxu0 0.0
    %4909 = vmatprep.subr.mxu0 0.0
    %4910 = vmatpush1.xpose.msra.mxu0 0.0
    %4911 = vmatprep.subr.mxu0 0.0
    %4912 = vmatpush1.xpose.msra.mxu0 0.0
    %4913 = vmatprep.subr.mxu0 0.0
    %4914 = vmatpush1.xpose.msra.mxu0 0.0
    %4915 = vmatprep.subr.mxu0 0.0
    %4916 = vmatpush1.xpose.msra.mxu0 0.0
    %4917 = vmatprep.subr.mxu0 0.0
    %4918 = vmatpush1.xpose.msra.mxu0 0.0
    %4919 = vmatprep.subr.mxu0 0.0
    %4920 = vmatpush1.xpose.msra.mxu0 0.0
    %4921 = vmatprep.subr.mxu0 0.0
    %4922 = vmatpush1.xpose.msra.mxu0 0.0
    %4923 = vmatprep.subr.mxu0 0.0
    %4924 = vmatpush1.xpose.msra.mxu0 0.0
    %4925 = vmatprep.subr.mxu0 0.0
    %4926 = vmatpush1.xpose.msra.mxu0 0.0
    %4927 = vmatprep.subr.mxu0 0.0
    %4928 = vmatpush1.xpose.msra.mxu0 0.0
    %4929 = vmatprep.subr.mxu0 0.0
    %4930 = vmatpush1.xpose.msra.mxu0 0.0
    %4931 = vmatprep.mubr.f32.mxu0 0.0
    %4932 = vmatmul.mubr.f32.gmra.mrb[0].mxu0 %v4863
    %v4933 = vpop.f32.mrb[0].mxu0
    %v4934 = vadd.f32 0.0, %v4933
    %v4935 = vpop.f32.mrb[0].mxu0
    %4936 = vdwg.mxu0
    %v4938 = vsel %vm786, %v4322, 0
    %v4940 = vsel %vm786, %v747, 0
    %4942 = vmatprep.subr.mxu0 0.0
    %4943 = vmatpush1.xpose.msra.mxu0 %v4940
    %4944 = vmatprep.subr.mxu0 0.0
    %4945 = vmatpush1.xpose.msra.mxu0 0.0
    %4946 = vmatprep.subr.mxu0 0.0
    %4947 = vmatpush1.xpose.msra.mxu0 0.0
    %4948 = vmatprep.subr.mxu0 0.0
    %4949 = vmatpush1.xpose.msra.mxu0 0.0
    %4950 = vmatprep.subr.mxu0 0.0
    %4951 = vmatpush1.xpose.msra.mxu0 0.0
    %4952 = vmatprep.subr.mxu0 0.0
    %4953 = vmatpush1.xpose.msra.mxu0 0.0
    %4954 = vmatprep.subr.mxu0 0.0
    %4955 = vmatpush1.xpose.msra.mxu0 0.0
    %4956 = vmatprep.subr.mxu0 0.0
    %4957 = vmatpush1.xpose.msra.mxu0 0.0
    %4958 = vmatprep.subr.mxu0 0.0
    %4959 = vmatpush1.xpose.msra.mxu0 0.0
    %4960 = vmatprep.subr.mxu0 0.0
    %4961 = vmatpush1.xpose.msra.mxu0 0.0
    %4962 = vmatprep.subr.mxu0 0.0
    %4963 = vmatpush1.xpose.msra.mxu0 0.0
    %4964 = vmatprep.subr.mxu0 0.0
    %4965 = vmatpush1.xpose.msra.mxu0 0.0
    %4966 = vmatprep.subr.mxu0 0.0
    %4967 = vmatpush1.xpose.msra.mxu0 0.0
    %4968 = vmatprep.subr.mxu0 0.0
    %4969 = vmatpush1.xpose.msra.mxu0 0.0
    %4970 = vmatprep.subr.mxu0 0.0
    %4971 = vmatpush1.xpose.msra.mxu0 0.0
    %4972 = vmatprep.subr.mxu0 0.0
    %4973 = vmatpush1.xpose.msra.mxu0 0.0
    %4974 = vmatprep.subr.mxu0 0.0
    %4975 = vmatpush1.xpose.msra.mxu0 0.0
    %4976 = vmatprep.subr.mxu0 0.0
    %4977 = vmatpush1.xpose.msra.mxu0 0.0
    %4978 = vmatprep.subr.mxu0 0.0
    %4979 = vmatpush1.xpose.msra.mxu0 0.0
    %4980 = vmatprep.subr.mxu0 0.0
    %4981 = vmatpush1.xpose.msra.mxu0 0.0
    %4982 = vmatprep.subr.mxu0 0.0
    %4983 = vmatpush1.xpose.msra.mxu0 0.0
    %4984 = vmatprep.subr.mxu0 0.0
    %4985 = vmatpush1.xpose.msra.mxu0 0.0
    %4986 = vmatprep.subr.mxu0 0.0
    %4987 = vmatpush1.xpose.msra.mxu0 0.0
    %4988 = vmatprep.subr.mxu0 0.0
    %4989 = vmatpush1.xpose.msra.mxu0 0.0
    %4990 = vmatprep.subr.mxu0 0.0
    %4991 = vmatpush1.xpose.msra.mxu0 0.0
    %4992 = vmatprep.subr.mxu0 0.0
    %4993 = vmatpush1.xpose.msra.mxu0 0.0
    %4994 = vmatprep.subr.mxu0 0.0
    %4995 = vmatpush1.xpose.msra.mxu0 0.0
    %4996 = vmatprep.subr.mxu0 0.0
    %4997 = vmatpush1.xpose.msra.mxu0 0.0
    %4998 = vmatprep.subr.mxu0 0.0
    %4999 = vmatpush1.xpose.msra.mxu0 0.0
    %5000 = vmatprep.subr.mxu0 0.0
    %5001 = vmatpush1.xpose.msra.mxu0 0.0
    %5002 = vmatprep.subr.mxu0 0.0
    %5003 = vmatpush1.xpose.msra.mxu0 0.0
    %5004 = vmatprep.subr.mxu0 0.0
    %5005 = vmatpush1.xpose.msra.mxu0 0.0
    %5006 = vmatprep.mubr.f32.mxu0 0.0
    %5007 = vmatmul.mubr.f32.gmra.mrb[0].mxu0 %v4938
    %v5008 = vpop.f32.mrb[0].mxu0
    %v5009 = vadd.f32 0.0, %v5008
    %v5010 = vpop.f32.mrb[0].mxu0
    %5011 = vdwg.mxu0
    %v5013 = vsel %vm786, %v4324, 0
    %v5015 = vsel %vm786, %v749, 0
    %5017 = vmatprep.subr.mxu0 0.0
    %5018 = vmatpush1.xpose.msra.mxu0 %v5015
    %5019 = vmatprep.subr.mxu0 0.0
    %5020 = vmatpush1.xpose.msra.mxu0 0.0
    %5021 = vmatprep.subr.mxu0 0.0
    %5022 = vmatpush1.xpose.msra.mxu0 0.0
    %5023 = vmatprep.subr.mxu0 0.0
    %5024 = vmatpush1.xpose.msra.mxu0 0.0
    %5025 = vmatprep.subr.mxu0 0.0
    %5026 = vmatpush1.xpose.msra.mxu0 0.0
    %5027 = vmatprep.subr.mxu0 0.0
    %5028 = vmatpush1.xpose.msra.mxu0 0.0
    %5029 = vmatprep.subr.mxu0 0.0
    %5030 = vmatpush1.xpose.msra.mxu0 0.0
    %5031 = vmatprep.subr.mxu0 0.0
    %5032 = vmatpush1.xpose.msra.mxu0 0.0
    %5033 = vmatprep.subr.mxu0 0.0
    %5034 = vmatpush1.xpose.msra.mxu0 0.0
    %5035 = vmatprep.subr.mxu0 0.0
    %5036 = vmatpush1.xpose.msra.mxu0 0.0
    %5037 = vmatprep.subr.mxu0 0.0
    %5038 = vmatpush1.xpose.msra.mxu0 0.0
    %5039 = vmatprep.subr.mxu0 0.0
    %5040 = vmatpush1.xpose.msra.mxu0 0.0
    %5041 = vmatprep.subr.mxu0 0.0
    %5042 = vmatpush1.xpose.msra.mxu0 0.0
    %5043 = vmatprep.subr.mxu0 0.0
    %5044 = vmatpush1.xpose.msra.mxu0 0.0
    %5045 = vmatprep.subr.mxu0 0.0
    %5046 = vmatpush1.xpose.msra.mxu0 0.0
    %5047 = vmatprep.subr.mxu0 0.0
    %5048 = vmatpush1.xpose.msra.mxu0 0.0
    %5049 = vmatprep.subr.mxu0 0.0
    %5050 = vmatpush1.xpose.msra.mxu0 0.0
    %5051 = vmatprep.subr.mxu0 0.0
    %5052 = vmatpush1.xpose.msra.mxu0 0.0
    %5053 = vmatprep.subr.mxu0 0.0
    %5054 = vmatpush1.xpose.msra.mxu0 0.0
    %5055 = vmatprep.subr.mxu0 0.0
    %5056 = vmatpush1.xpose.msra.mxu0 0.0
    %5057 = vmatprep.subr.mxu0 0.0
    %5058 = vmatpush1.xpose.msra.mxu0 0.0
    %5059 = vmatprep.subr.mxu0 0.0
    %5060 = vmatpush1.xpose.msra.mxu0 0.0
    %5061 = vmatprep.subr.mxu0 0.0
    %5062 = vmatpush1.xpose.msra.mxu0 0.0
    %5063 = vmatprep.subr.mxu0 0.0
    %5064 = vmatpush1.xpose.msra.mxu0 0.0
    %5065 = vmatprep.subr.mxu0 0.0
    %5066 = vmatpush1.xpose.msra.mxu0 0.0
    %5067 = vmatprep.subr.mxu0 0.0
    %5068 = vmatpush1.xpose.msra.mxu0 0.0
    %5069 = vmatprep.subr.mxu0 0.0
    %5070 = vmatpush1.xpose.msra.mxu0 0.0
    %5071 = vmatprep.subr.mxu0 0.0
    %5072 = vmatpush1.xpose.msra.mxu0 0.0
    %5073 = vmatprep.subr.mxu0 0.0
    %5074 = vmatpush1.xpose.msra.mxu0 0.0
    %5075 = vmatprep.subr.mxu0 0.0
    %5076 = vmatpush1.xpose.msra.mxu0 0.0
    %5077 = vmatprep.subr.mxu0 0.0
    %5078 = vmatpush1.xpose.msra.mxu0 0.0
    %5079 = vmatprep.subr.mxu0 0.0
    %5080 = vmatpush1.xpose.msra.mxu0 0.0
    %5081 = vmatprep.mubr.f32.mxu0 0.0
    %5082 = vmatmul.mubr.f32.gmra.mrb[0].mxu0 %v5013
    %v5083 = vpop.f32.mrb[0].mxu0
    %v5084 = vadd.f32 0.0, %v5083
    %v5085 = vpop.f32.mrb[0].mxu0
    %5086 = vdwg.mxu0
    %v5088 = vsel %vm786, %v4326, 0
    %v5090 = vsel %vm786, %v751, 0
    %5092 = vmatprep.subr.mxu0 0.0
    %5093 = vmatpush1.xpose.msra.mxu0 %v5090
    %5094 = vmatprep.subr.mxu0 0.0
    %5095 = vmatpush1.xpose.msra.mxu0 0.0
    %5096 = vmatprep.subr.mxu0 0.0
    %5097 = vmatpush1.xpose.msra.mxu0 0.0
    %5098 = vmatprep.subr.mxu0 0.0
    %5099 = vmatpush1.xpose.msra.mxu0 0.0
    %5100 = vmatprep.subr.mxu0 0.0
    %5101 = vmatpush1.xpose.msra.mxu0 0.0
    %5102 = vmatprep.subr.mxu0 0.0
    %5103 = vmatpush1.xpose.msra.mxu0 0.0
    %5104 = vmatprep.subr.mxu0 0.0
    %5105 = vmatpush1.xpose.msra.mxu0 0.0
    %5106 = vmatprep.subr.mxu0 0.0
    %5107 = vmatpush1.xpose.msra.mxu0 0.0
    %5108 = vmatprep.subr.mxu0 0.0
    %5109 = vmatpush1.xpose.msra.mxu0 0.0
    %5110 = vmatprep.subr.mxu0 0.0
    %5111 = vmatpush1.xpose.msra.mxu0 0.0
    %5112 = vmatprep.subr.mxu0 0.0
    %5113 = vmatpush1.xpose.msra.mxu0 0.0
    %5114 = vmatprep.subr.mxu0 0.0
    %5115 = vmatpush1.xpose.msra.mxu0 0.0
    %5116 = vmatprep.subr.mxu0 0.0
    %5117 = vmatpush1.xpose.msra.mxu0 0.0
    %5118 = vmatprep.subr.mxu0 0.0
    %5119 = vmatpush1.xpose.msra.mxu0 0.0
    %5120 = vmatprep.subr.mxu0 0.0
    %5121 = vmatpush1.xpose.msra.mxu0 0.0
    %5122 = vmatprep.subr.mxu0 0.0
    %5123 = vmatpush1.xpose.msra.mxu0 0.0
    %5124 = vmatprep.subr.mxu0 0.0
    %5125 = vmatpush1.xpose.msra.mxu0 0.0
    %5126 = vmatprep.subr.mxu0 0.0
    %5127 = vmatpush1.xpose.msra.mxu0 0.0
    %5128 = vmatprep.subr.mxu0 0.0
    %5129 = vmatpush1.xpose.msra.mxu0 0.0
    %5130 = vmatprep.subr.mxu0 0.0
    %5131 = vmatpush1.xpose.msra.mxu0 0.0
    %5132 = vmatprep.subr.mxu0 0.0
    %5133 = vmatpush1.xpose.msra.mxu0 0.0
    %5134 = vmatprep.subr.mxu0 0.0
    %5135 = vmatpush1.xpose.msra.mxu0 0.0
    %5136 = vmatprep.subr.mxu0 0.0
    %5137 = vmatpush1.xpose.msra.mxu0 0.0
    %5138 = vmatprep.subr.mxu0 0.0
    %5139 = vmatpush1.xpose.msra.mxu0 0.0
    %5140 = vmatprep.subr.mxu0 0.0
    %5141 = vmatpush1.xpose.msra.mxu0 0.0
    %5142 = vmatprep.subr.mxu0 0.0
    %5143 = vmatpush1.xpose.msra.mxu0 0.0
    %5144 = vmatprep.subr.mxu0 0.0
    %5145 = vmatpush1.xpose.msra.mxu0 0.0
    %5146 = vmatprep.subr.mxu0 0.0
    %5147 = vmatpush1.xpose.msra.mxu0 0.0
    %5148 = vmatprep.subr.mxu0 0.0
    %5149 = vmatpush1.xpose.msra.mxu0 0.0
    %5150 = vmatprep.subr.mxu0 0.0
    %5151 = vmatpush1.xpose.msra.mxu0 0.0
    %5152 = vmatprep.subr.mxu0 0.0
    %5153 = vmatpush1.xpose.msra.mxu0 0.0
    %5154 = vmatprep.subr.mxu0 0.0
    %5155 = vmatpush1.xpose.msra.mxu0 0.0
    %5156 = vmatprep.mubr.f32.mxu0 0.0
    %5157 = vmatmul.mubr.f32.gmra.mrb[0].mxu0 %v5088
    %v5158 = vpop.f32.mrb[0].mxu0
    %v5159 = vadd.f32 0.0, %v5158
    %v5160 = vpop.f32.mrb[0].mxu0
    %5161 = vdwg.mxu0
    %v5163 = vsel %vm786, %v4328, 0
    %v5165 = vsel %vm786, %v753, 0
    %5167 = vmatprep.subr.mxu0 0.0
    %5168 = vmatpush1.xpose.msra.mxu0 %v5165
    %5169 = vmatprep.subr.mxu0 0.0
    %5170 = vmatpush1.xpose.msra.mxu0 0.0
    %5171 = vmatprep.subr.mxu0 0.0
    %5172 = vmatpush1.xpose.msra.mxu0 0.0
    %5173 = vmatprep.subr.mxu0 0.0
    %5174 = vmatpush1.xpose.msra.mxu0 0.0
    %5175 = vmatprep.subr.mxu0 0.0
    %5176 = vmatpush1.xpose.msra.mxu0 0.0
    %5177 = vmatprep.subr.mxu0 0.0
    %5178 = vmatpush1.xpose.msra.mxu0 0.0
    %5179 = vmatprep.subr.mxu0 0.0
    %5180 = vmatpush1.xpose.msra.mxu0 0.0
    %5181 = vmatprep.subr.mxu0 0.0
    %5182 = vmatpush1.xpose.msra.mxu0 0.0
    %5183 = vmatprep.subr.mxu0 0.0
    %5184 = vmatpush1.xpose.msra.mxu0 0.0
    %5185 = vmatprep.subr.mxu0 0.0
    %5186 = vmatpush1.xpose.msra.mxu0 0.0
    %5187 = vmatprep.subr.mxu0 0.0
    %5188 = vmatpush1.xpose.msra.mxu0 0.0
    %5189 = vmatprep.subr.mxu0 0.0
    %5190 = vmatpush1.xpose.msra.mxu0 0.0
    %5191 = vmatprep.subr.mxu0 0.0
    %5192 = vmatpush1.xpose.msra.mxu0 0.0
    %5193 = vmatprep.subr.mxu0 0.0
    %5194 = vmatpush1.xpose.msra.mxu0 0.0
    %5195 = vmatprep.subr.mxu0 0.0
    %5196 = vmatpush1.xpose.msra.mxu0 0.0
    %5197 = vmatprep.subr.mxu0 0.0
    %5198 = vmatpush1.xpose.msra.mxu0 0.0
    %5199 = vmatprep.subr.mxu0 0.0
    %5200 = vmatpush1.xpose.msra.mxu0 0.0
    %5201 = vmatprep.subr.mxu0 0.0
    %5202 = vmatpush1.xpose.msra.mxu0 0.0
    %5203 = vmatprep.subr.mxu0 0.0
    %5204 = vmatpush1.xpose.msra.mxu0 0.0
    %5205 = vmatprep.subr.mxu0 0.0
    %5206 = vmatpush1.xpose.msra.mxu0 0.0
    %5207 = vmatprep.subr.mxu0 0.0
    %5208 = vmatpush1.xpose.msra.mxu0 0.0
    %5209 = vmatprep.subr.mxu0 0.0
    %5210 = vmatpush1.xpose.msra.mxu0 0.0
    %5211 = vmatprep.subr.mxu0 0.0
    %5212 = vmatpush1.xpose.msra.mxu0 0.0
    %5213 = vmatprep.subr.mxu0 0.0
    %5214 = vmatpush1.xpose.msra.mxu0 0.0
    %5215 = vmatprep.subr.mxu0 0.0
    %5216 = vmatpush1.xpose.msra.mxu0 0.0
    %5217 = vmatprep.subr.mxu0 0.0
    %5218 = vmatpush1.xpose.msra.mxu0 0.0
    %5219 = vmatprep.subr.mxu0 0.0
    %5220 = vmatpush1.xpose.msra.mxu0 0.0
    %5221 = vmatprep.subr.mxu0 0.0
    %5222 = vmatpush1.xpose.msra.mxu0 0.0
    %5223 = vmatprep.subr.mxu0 0.0
    %5224 = vmatpush1.xpose.msra.mxu0 0.0
    %5225 = vmatprep.subr.mxu0 0.0
    %5226 = vmatpush1.xpose.msra.mxu0 0.0
    %5227 = vmatprep.subr.mxu0 0.0
    %5228 = vmatpush1.xpose.msra.mxu0 0.0
    %5229 = vmatprep.subr.mxu0 0.0
    %5230 = vmatpush1.xpose.msra.mxu0 0.0
    %5231 = vmatprep.mubr.f32.mxu0 0.0
    %5232 = vmatmul.mubr.f32.gmra.mrb[0].mxu0 %v5163
    %v5233 = vpop.f32.mrb[0].mxu0
    %v5234 = vadd.f32 0.0, %v5233
    %v5235 = vpop.f32.mrb[0].mxu0
    %5236 = vdwg.mxu0
    %v5238 = vsel %vm786, %v4330, 0
    %v5240 = vsel %vm786, %v755, 0
    %5242 = vmatprep.subr.mxu0 0.0
    %5243 = vmatpush1.xpose.msra.mxu0 %v5240
    %5244 = vmatprep.subr.mxu0 0.0
    %5245 = vmatpush1.xpose.msra.mxu0 0.0
    %5246 = vmatprep.subr.mxu0 0.0
    %5247 = vmatpush1.xpose.msra.mxu0 0.0
    %5248 = vmatprep.subr.mxu0 0.0
    %5249 = vmatpush1.xpose.msra.mxu0 0.0
    %5250 = vmatprep.subr.mxu0 0.0
    %5251 = vmatpush1.xpose.msra.mxu0 0.0
    %5252 = vmatprep.subr.mxu0 0.0
    %5253 = vmatpush1.xpose.msra.mxu0 0.0
    %5254 = vmatprep.subr.mxu0 0.0
    %5255 = vmatpush1.xpose.msra.mxu0 0.0
    %5256 = vmatprep.subr.mxu0 0.0
    %5257 = vmatpush1.xpose.msra.mxu0 0.0
    %5258 = vmatprep.subr.mxu0 0.0
    %5259 = vmatpush1.xpose.msra.mxu0 0.0
    %5260 = vmatprep.subr.mxu0 0.0
    %5261 = vmatpush1.xpose.msra.mxu0 0.0
    %5262 = vmatprep.subr.mxu0 0.0
    %5263 = vmatpush1.xpose.msra.mxu0 0.0
    %5264 = vmatprep.subr.mxu0 0.0
    %5265 = vmatpush1.xpose.msra.mxu0 0.0
    %5266 = vmatprep.subr.mxu0 0.0
    %5267 = vmatpush1.xpose.msra.mxu0 0.0
    %5268 = vmatprep.subr.mxu0 0.0
    %5269 = vmatpush1.xpose.msra.mxu0 0.0
    %5270 = vmatprep.subr.mxu0 0.0
    %5271 = vmatpush1.xpose.msra.mxu0 0.0
    %5272 = vmatprep.subr.mxu0 0.0
    %5273 = vmatpush1.xpose.msra.mxu0 0.0
    %5274 = vmatprep.subr.mxu0 0.0
    %5275 = vmatpush1.xpose.msra.mxu0 0.0
    %5276 = vmatprep.subr.mxu0 0.0
    %5277 = vmatpush1.xpose.msra.mxu0 0.0
    %5278 = vmatprep.subr.mxu0 0.0
    %5279 = vmatpush1.xpose.msra.mxu0 0.0
    %5280 = vmatprep.subr.mxu0 0.0
    %5281 = vmatpush1.xpose.msra.mxu0 0.0
    %5282 = vmatprep.subr.mxu0 0.0
    %5283 = vmatpush1.xpose.msra.mxu0 0.0
    %5284 = vmatprep.subr.mxu0 0.0
    %5285 = vmatpush1.xpose.msra.mxu0 0.0
    %5286 = vmatprep.subr.mxu0 0.0
    %5287 = vmatpush1.xpose.msra.mxu0 0.0
    %5288 = vmatprep.subr.mxu0 0.0
    %5289 = vmatpush1.xpose.msra.mxu0 0.0
    %5290 = vmatprep.subr.mxu0 0.0
    %5291 = vmatpush1.xpose.msra.mxu0 0.0
    %5292 = vmatprep.subr.mxu0 0.0
    %5293 = vmatpush1.xpose.msra.mxu0 0.0
    %5294 = vmatprep.subr.mxu0 0.0
    %5295 = vmatpush1.xpose.msra.mxu0 0.0
    %5296 = vmatprep.subr.mxu0 0.0
    %5297 = vmatpush1.xpose.msra.mxu0 0.0
    %5298 = vmatprep.subr.mxu0 0.0
    %5299 = vmatpush1.xpose.msra.mxu0 0.0
    %5300 = vmatprep.subr.mxu0 0.0
    %5301 = vmatpush1.xpose.msra.mxu0 0.0
    %5302 = vmatprep.subr.mxu0 0.0
    %5303 = vmatpush1.xpose.msra.mxu0 0.0
    %5304 = vmatprep.subr.mxu0 0.0
    %5305 = vmatpush1.xpose.msra.mxu0 0.0
    %5306 = vmatprep.mubr.f32.mxu0 0.0
    %5307 = vmatmul.mubr.f32.gmra.mrb[0].mxu0 %v5238
    %v5308 = vpop.f32.mrb[0].mxu0
    %v5309 = vadd.f32 0.0, %v5308
    %v5310 = vpop.f32.mrb[0].mxu0
    %5311 = vdwg.mxu0
    %v5313 = vsel %vm786, %v4332, 0
    %v5315 = vsel %vm786, %v757, 0
    %5317 = vmatprep.subr.mxu0 0.0
    %5318 = vmatpush1.xpose.msra.mxu0 %v5315
    %5319 = vmatprep.subr.mxu0 0.0
    %5320 = vmatpush1.xpose.msra.mxu0 0.0
    %5321 = vmatprep.subr.mxu0 0.0
    %5322 = vmatpush1.xpose.msra.mxu0 0.0
    %5323 = vmatprep.subr.mxu0 0.0
    %5324 = vmatpush1.xpose.msra.mxu0 0.0
    %5325 = vmatprep.subr.mxu0 0.0
    %5326 = vmatpush1.xpose.msra.mxu0 0.0
    %5327 = vmatprep.subr.mxu0 0.0
    %5328 = vmatpush1.xpose.msra.mxu0 0.0
    %5329 = vmatprep.subr.mxu0 0.0
    %5330 = vmatpush1.xpose.msra.mxu0 0.0
    %5331 = vmatprep.subr.mxu0 0.0
    %5332 = vmatpush1.xpose.msra.mxu0 0.0
    %5333 = vmatprep.subr.mxu0 0.0
    %5334 = vmatpush1.xpose.msra.mxu0 0.0
    %5335 = vmatprep.subr.mxu0 0.0
    %5336 = vmatpush1.xpose.msra.mxu0 0.0
    %5337 = vmatprep.subr.mxu0 0.0
    %5338 = vmatpush1.xpose.msra.mxu0 0.0
    %5339 = vmatprep.subr.mxu0 0.0
    %5340 = vmatpush1.xpose.msra.mxu0 0.0
    %5341 = vmatprep.subr.mxu0 0.0
    %5342 = vmatpush1.xpose.msra.mxu0 0.0
    %5343 = vmatprep.subr.mxu0 0.0
    %5344 = vmatpush1.xpose.msra.mxu0 0.0
    %5345 = vmatprep.subr.mxu0 0.0
    %5346 = vmatpush1.xpose.msra.mxu0 0.0
    %5347 = vmatprep.subr.mxu0 0.0
    %5348 = vmatpush1.xpose.msra.mxu0 0.0
    %5349 = vmatprep.subr.mxu0 0.0
    %5350 = vmatpush1.xpose.msra.mxu0 0.0
    %5351 = vmatprep.subr.mxu0 0.0
    %5352 = vmatpush1.xpose.msra.mxu0 0.0
    %5353 = vmatprep.subr.mxu0 0.0
    %5354 = vmatpush1.xpose.msra.mxu0 0.0
    %5355 = vmatprep.subr.mxu0 0.0
    %5356 = vmatpush1.xpose.msra.mxu0 0.0
    %5357 = vmatprep.subr.mxu0 0.0
    %5358 = vmatpush1.xpose.msra.mxu0 0.0
    %5359 = vmatprep.subr.mxu0 0.0
    %5360 = vmatpush1.xpose.msra.mxu0 0.0
    %5361 = vmatprep.subr.mxu0 0.0
    %5362 = vmatpush1.xpose.msra.mxu0 0.0
    %5363 = vmatprep.subr.mxu0 0.0
    %5364 = vmatpush1.xpose.msra.mxu0 0.0
    %5365 = vmatprep.subr.mxu0 0.0
    %5366 = vmatpush1.xpose.msra.mxu0 0.0
    %5367 = vmatprep.subr.mxu0 0.0
    %5368 = vmatpush1.xpose.msra.mxu0 0.0
    %5369 = vmatprep.subr.mxu0 0.0
    %5370 = vmatpush1.xpose.msra.mxu0 0.0
    %5371 = vmatprep.subr.mxu0 0.0
    %5372 = vmatpush1.xpose.msra.mxu0 0.0
    %5373 = vmatprep.subr.mxu0 0.0
    %5374 = vmatpush1.xpose.msra.mxu0 0.0
    %5375 = vmatprep.subr.mxu0 0.0
    %5376 = vmatpush1.xpose.msra.mxu0 0.0
    %5377 = vmatprep.subr.mxu0 0.0
    %5378 = vmatpush1.xpose.msra.mxu0 0.0
    %5379 = vmatprep.subr.mxu0 0.0
    %5380 = vmatpush1.xpose.msra.mxu0 0.0
    %5381 = vmatprep.mubr.f32.mxu0 0.0
    %5382 = vmatmul.mubr.f32.gmra.mrb[0].mxu0 %v5313
    %v5383 = vpop.f32.mrb[0].mxu0
    %v5384 = vadd.f32 0.0, %v5383
    %v5385 = vpop.f32.mrb[0].mxu0
    %5386 = vdwg.mxu0
    %v5388 = vsel %vm786, %v4334, 0
    %v5390 = vsel %vm786, %v759, 0
    %5392 = vmatprep.subr.mxu0 0.0
    %5393 = vmatpush1.xpose.msra.mxu0 %v5390
    %5394 = vmatprep.subr.mxu0 0.0
    %5395 = vmatpush1.xpose.msra.mxu0 0.0
    %5396 = vmatprep.subr.mxu0 0.0
    %5397 = vmatpush1.xpose.msra.mxu0 0.0
    %5398 = vmatprep.subr.mxu0 0.0
    %5399 = vmatpush1.xpose.msra.mxu0 0.0
    %5400 = vmatprep.subr.mxu0 0.0
    %5401 = vmatpush1.xpose.msra.mxu0 0.0
    %5402 = vmatprep.subr.mxu0 0.0
    %5403 = vmatpush1.xpose.msra.mxu0 0.0
    %5404 = vmatprep.subr.mxu0 0.0
    %5405 = vmatpush1.xpose.msra.mxu0 0.0
    %5406 = vmatprep.subr.mxu0 0.0
    %5407 = vmatpush1.xpose.msra.mxu0 0.0
    %5408 = vmatprep.subr.mxu0 0.0
    %5409 = vmatpush1.xpose.msra.mxu0 0.0
    %5410 = vmatprep.subr.mxu0 0.0
    %5411 = vmatpush1.xpose.msra.mxu0 0.0
    %5412 = vmatprep.subr.mxu0 0.0
    %5413 = vmatpush1.xpose.msra.mxu0 0.0
    %5414 = vmatprep.subr.mxu0 0.0
    %5415 = vmatpush1.xpose.msra.mxu0 0.0
    %5416 = vmatprep.subr.mxu0 0.0
    %5417 = vmatpush1.xpose.msra.mxu0 0.0
    %5418 = vmatprep.subr.mxu0 0.0
    %5419 = vmatpush1.xpose.msra.mxu0 0.0
    %5420 = vmatprep.subr.mxu0 0.0
    %5421 = vmatpush1.xpose.msra.mxu0 0.0
    %5422 = vmatprep.subr.mxu0 0.0
    %5423 = vmatpush1.xpose.msra.mxu0 0.0
    %5424 = vmatprep.subr.mxu0 0.0
    %5425 = vmatpush1.xpose.msra.mxu0 0.0
    %5426 = vmatprep.subr.mxu0 0.0
    %5427 = vmatpush1.xpose.msra.mxu0 0.0
    %5428 = vmatprep.subr.mxu0 0.0
    %5429 = vmatpush1.xpose.msra.mxu0 0.0
    %5430 = vmatprep.subr.mxu0 0.0
    %5431 = vmatpush1.xpose.msra.mxu0 0.0
    %5432 = vmatprep.subr.mxu0 0.0
    %5433 = vmatpush1.xpose.msra.mxu0 0.0
    %5434 = vmatprep.subr.mxu0 0.0
    %5435 = vmatpush1.xpose.msra.mxu0 0.0
    %5436 = vmatprep.subr.mxu0 0.0
    %5437 = vmatpush1.xpose.msra.mxu0 0.0
    %5438 = vmatprep.subr.mxu0 0.0
    %5439 = vmatpush1.xpose.msra.mxu0 0.0
    %5440 = vmatprep.subr.mxu0 0.0
    %5441 = vmatpush1.xpose.msra.mxu0 0.0
    %5442 = vmatprep.subr.mxu0 0.0
    %5443 = vmatpush1.xpose.msra.mxu0 0.0
    %5444 = vmatprep.subr.mxu0 0.0
    %5445 = vmatpush1.xpose.msra.mxu0 0.0
    %5446 = vmatprep.subr.mxu0 0.0
    %5447 = vmatpush1.xpose.msra.mxu0 0.0
    %5448 = vmatprep.subr.mxu0 0.0
    %5449 = vmatpush1.xpose.msra.mxu0 0.0
    %5450 = vmatprep.subr.mxu0 0.0
    %5451 = vmatpush1.xpose.msra.mxu0 0.0
    %5452 = vmatprep.subr.mxu0 0.0
    %5453 = vmatpush1.xpose.msra.mxu0 0.0
    %5454 = vmatprep.subr.mxu0 0.0
    %5455 = vmatpush1.xpose.msra.mxu0 0.0
    %5456 = vmatprep.mubr.f32.mxu0 0.0
    %5457 = vmatmul.mubr.f32.gmra.mrb[0].mxu0 %v5388
    %v5458 = vpop.f32.mrb[0].mxu0
    %v5459 = vadd.f32 0.0, %v5458
    %v5460 = vpop.f32.mrb[0].mxu0
    %5461 = vdwg.mxu0
    %v5463 = vsel %vm786, %v4336, 0
    %v5465 = vsel %vm786, %v761, 0
    %5467 = vmatprep.subr.mxu0 0.0
    %5468 = vmatpush1.xpose.msra.mxu0 %v5465
    %5469 = vmatprep.subr.mxu0 0.0
    %5470 = vmatpush1.xpose.msra.mxu0 0.0
    %5471 = vmatprep.subr.mxu0 0.0
    %5472 = vmatpush1.xpose.msra.mxu0 0.0
    %5473 = vmatprep.subr.mxu0 0.0
    %5474 = vmatpush1.xpose.msra.mxu0 0.0
    %5475 = vmatprep.subr.mxu0 0.0
    %5476 = vmatpush1.xpose.msra.mxu0 0.0
    %5477 = vmatprep.subr.mxu0 0.0
    %5478 = vmatpush1.xpose.msra.mxu0 0.0
    %5479 = vmatprep.subr.mxu0 0.0
    %5480 = vmatpush1.xpose.msra.mxu0 0.0
    %5481 = vmatprep.subr.mxu0 0.0
    %5482 = vmatpush1.xpose.msra.mxu0 0.0
    %5483 = vmatprep.subr.mxu0 0.0
    %5484 = vmatpush1.xpose.msra.mxu0 0.0
    %5485 = vmatprep.subr.mxu0 0.0
    %5486 = vmatpush1.xpose.msra.mxu0 0.0
    %5487 = vmatprep.subr.mxu0 0.0
    %5488 = vmatpush1.xpose.msra.mxu0 0.0
    %5489 = vmatprep.subr.mxu0 0.0
    %5490 = vmatpush1.xpose.msra.mxu0 0.0
    %5491 = vmatprep.subr.mxu0 0.0
    %5492 = vmatpush1.xpose.msra.mxu0 0.0
    %5493 = vmatprep.subr.mxu0 0.0
    %5494 = vmatpush1.xpose.msra.mxu0 0.0
    %5495 = vmatprep.subr.mxu0 0.0
    %5496 = vmatpush1.xpose.msra.mxu0 0.0
    %5497 = vmatprep.subr.mxu0 0.0
    %5498 = vmatpush1.xpose.msra.mxu0 0.0
    %5499 = vmatprep.subr.mxu0 0.0
    %5500 = vmatpush1.xpose.msra.mxu0 0.0
    %5501 = vmatprep.subr.mxu0 0.0
    %5502 = vmatpush1.xpose.msra.mxu0 0.0
    %5503 = vmatprep.subr.mxu0 0.0
    %5504 = vmatpush1.xpose.msra.mxu0 0.0
    %5505 = vmatprep.subr.mxu0 0.0
    %5506 = vmatpush1.xpose.msra.mxu0 0.0
    %5507 = vmatprep.subr.mxu0 0.0
    %5508 = vmatpush1.xpose.msra.mxu0 0.0
    %5509 = vmatprep.subr.mxu0 0.0
    %5510 = vmatpush1.xpose.msra.mxu0 0.0
    %5511 = vmatprep.subr.mxu0 0.0
    %5512 = vmatpush1.xpose.msra.mxu0 0.0
    %5513 = vmatprep.subr.mxu0 0.0
    %5514 = vmatpush1.xpose.msra.mxu0 0.0
    %5515 = vmatprep.subr.mxu0 0.0
    %5516 = vmatpush1.xpose.msra.mxu0 0.0
    %5517 = vmatprep.subr.mxu0 0.0
    %5518 = vmatpush1.xpose.msra.mxu0 0.0
    %5519 = vmatprep.subr.mxu0 0.0
    %5520 = vmatpush1.xpose.msra.mxu0 0.0
    %5521 = vmatprep.subr.mxu0 0.0
    %5522 = vmatpush1.xpose.msra.mxu0 0.0
    %5523 = vmatprep.subr.mxu0 0.0
    %5524 = vmatpush1.xpose.msra.mxu0 0.0
    %5525 = vmatprep.subr.mxu0 0.0
    %5526 = vmatpush1.xpose.msra.mxu0 0.0
    %5527 = vmatprep.subr.mxu0 0.0
    %5528 = vmatpush1.xpose.msra.mxu0 0.0
    %5529 = vmatprep.subr.mxu0 0.0
    %5530 = vmatpush1.xpose.msra.mxu0 0.0
    %5531 = vmatprep.mubr.f32.mxu0 0.0
    %5532 = vmatmul.mubr.f32.gmra.mrb[0].mxu0 %v5463
    %v5533 = vpop.f32.mrb[0].mxu0
    %v5534 = vadd.f32 0.0, %v5533
    %v5535 = vpop.f32.mrb[0].mxu0
    %5536 = vdwg.mxu0
    %5539 = vrot.lane.b32.xlu0 %v4484, 8
    %v5540 = vpop.permute.xlu0 %5539
    %5541 = vrot.lane.b32.xlu0 %v5084, 8
    %v5542 = vpop.permute.xlu0 %5541
    %5547 = vrot.lane.b32.xlu0 %v4559, 16
    %v5548 = vpop.permute.xlu0 %5547
    %5549 = vrot.lane.b32.xlu0 %v5159, 16
    %v5550 = vpop.permute.xlu0 %5549
    %5555 = vrot.lane.b32.xlu0 %v4634, 24
    %v5556 = vpop.permute.xlu0 %5555
    %5557 = vrot.lane.b32.xlu0 %v5234, 24
    %v5558 = vpop.permute.xlu0 %5557
    %5563 = vrot.lane.b32.xlu0 %v4709, 32
    %v5564 = vpop.permute.xlu0 %5563
    %5565 = vrot.lane.b32.xlu0 %v5309, 32
    %v5566 = vpop.permute.xlu0 %5565
    %5571 = vrot.lane.b32.xlu0 %v4784, 40
    %v5572 = vpop.permute.xlu0 %5571
    %5573 = vrot.lane.b32.xlu0 %v5384, 40
    %v5574 = vpop.permute.xlu0 %5573
    %5579 = vrot.lane.b32.xlu0 %v4859, 48
    %v5580 = vpop.permute.xlu0 %5579
    %5581 = vrot.lane.b32.xlu0 %v5459, 48
    %v5582 = vpop.permute.xlu0 %5581
    %5587 = vrot.lane.b32.xlu0 %v4934, 56
    %v5588 = vpop.permute.xlu0 %5587
    %5589 = vrot.lane.b32.xlu0 %v5534, 56
    %v5590 = vpop.permute.xlu0 %5589
    %v5593 = vsel %vm786, %v4409, %v5540
    %v5594 = vsel %vm786, %v5009, %v5542
    %vm5595 = vcmask 130048
    %v5596 = vsel %vm5595, %v5593, %v5548
    %v5597 = vsel %vm5595, %v5594, %v5550
    %vm5598 = vcmask 195584
    %v5599 = vsel %vm5598, %v5596, %v5556
    %v5600 = vsel %vm5598, %v5597, %v5558
    %vm5601 = vcmask 261120
    %v5602 = vsel %vm5601, %v5599, %v5564
    %v5603 = vsel %vm5601, %v5600, %v5566
    %vm5604 = vcmask 326656
    %v5605 = vsel %vm5604, %v5602, %v5572
    %v5606 = vsel %vm5604, %v5603, %v5574
    %vm5607 = vcmask 392192
    %v5608 = vsel %vm5607, %v5605, %v5580
    %v5609 = vsel %vm5607, %v5606, %v5582
    %vm5610 = vcmask 457728
    %v5611 = vsel %vm5610, %v5608, %v5588
    %v5612 = vsel %vm5610, %v5609, %v5590
    %s5613 = scalar_lea.vmem %s1, 256
    %v5614 = vld [vmem:[%s5613] sm:$0xff]
    %v5615 = vld [vmem:[%s5613 + $0x8] sm:$0xff]
    %v5616 = vld [vmem:[%s5613 + $0x10] sm:$0xff]
    %v5617 = vld [vmem:[%s5613 + $0x18] sm:$0xff]
    %v5618 = vld [vmem:[%s5613 + $0x20] sm:$0xff]
    %v5619 = vld [vmem:[%s5613 + $0x28] sm:$0xff]
    %v5620 = vld [vmem:[%s5613 + $0x30] sm:$0xff]
    %v5621 = vld [vmem:[%s5613 + $0x38] sm:$0xff]
    %v5622 = vld [vmem:[%s3] sm:$0xff]
    %v5623 = vld [vmem:[%s3 + $0x8] sm:$0xff]
    %v5625 = vsel %vm82, %v5611, 0
    %v5628 = vsel %vm82, %v5612, 0
    %5630 = vmatprep.subr.mxu0 0.0
    %5631 = vmatpush1.msra.mxu0 %v5614
    %5632 = vmatprep.subr.mxu0 0.0
    %5633 = vmatpush1.msra.mxu0 %v5615
    %5634 = vmatprep.subr.mxu0 0.0
    %5635 = vmatpush1.msra.mxu0 %v5616
    %5636 = vmatprep.subr.mxu0 0.0
    %5637 = vmatpush1.msra.mxu0 %v5617
    %5638 = vmatprep.subr.mxu0 0.0
    %5639 = vmatpush1.msra.mxu0 %v5618
    %5640 = vmatprep.subr.mxu0 0.0
    %5641 = vmatpush1.msra.mxu0 %v5619
    %5642 = vmatprep.subr.mxu0 0.0
    %5643 = vmatpush1.msra.mxu0 %v5620
    %5644 = vmatprep.subr.mxu0 0.0
    %5645 = vmatpush1.msra.mxu0 %v5621
    %5646 = vmatprep.subr.mxu0 0.0
    %5647 = vmatpush1.msra.mxu0 0.0
    %5648 = vmatprep.subr.mxu0 0.0
    %5649 = vmatpush1.msra.mxu0 0.0
    %5650 = vmatprep.subr.mxu0 0.0
    %5651 = vmatpush1.msra.mxu0 0.0
    %5652 = vmatprep.subr.mxu0 0.0
    %5653 = vmatpush1.msra.mxu0 0.0
    %5654 = vmatprep.subr.mxu0 0.0
    %5655 = vmatpush1.msra.mxu0 0.0
    %5656 = vmatprep.subr.mxu0 0.0
    %5657 = vmatpush1.msra.mxu0 0.0
    %5658 = vmatprep.subr.mxu0 0.0
    %5659 = vmatpush1.msra.mxu0 0.0
    %5660 = vmatprep.subr.mxu0 0.0
    %5661 = vmatpush1.msra.mxu0 0.0
    %5662 = vmatprep.subr.mxu0 0.0
    %5663 = vmatpush1.msra.mxu0 0.0
    %5664 = vmatprep.subr.mxu0 0.0
    %5665 = vmatpush1.msra.mxu0 0.0
    %5666 = vmatprep.subr.mxu0 0.0
    %5667 = vmatpush1.msra.mxu0 0.0
    %5668 = vmatprep.subr.mxu0 0.0
    %5669 = vmatpush1.msra.mxu0 0.0
    %5670 = vmatprep.subr.mxu0 0.0
    %5671 = vmatpush1.msra.mxu0 0.0
    %5672 = vmatprep.subr.mxu0 0.0
    %5673 = vmatpush1.msra.mxu0 0.0
    %5674 = vmatprep.subr.mxu0 0.0
    %5675 = vmatpush1.msra.mxu0 0.0
    %5676 = vmatprep.subr.mxu0 0.0
    %5677 = vmatpush1.msra.mxu0 0.0
    %5678 = vmatprep.subr.mxu0 0.0
    %5679 = vmatpush1.msra.mxu0 0.0
    %5680 = vmatprep.subr.mxu0 0.0
    %5681 = vmatpush1.msra.mxu0 0.0
    %5682 = vmatprep.subr.mxu0 0.0
    %5683 = vmatpush1.msra.mxu0 0.0
    %5684 = vmatprep.subr.mxu0 0.0
    %5685 = vmatpush1.msra.mxu0 0.0
    %5686 = vmatprep.subr.mxu0 0.0
    %5687 = vmatpush1.msra.mxu0 0.0
    %5688 = vmatprep.subr.mxu0 0.0
    %5689 = vmatpush1.msra.mxu0 0.0
    %5690 = vmatprep.subr.mxu0 0.0
    %5691 = vmatpush1.msra.mxu0 0.0
    %5692 = vmatprep.subr.mxu0 0.0
    %5693 = vmatpush1.msra.mxu0 0.0
    %5694 = vmatprep.mubr.f32.mxu0 0.0
    %5695 = vmatmul.mubr.f32.gmra.mrb[0].mxu0 %v5625
    %v5696 = vpop.f32.mrb[0].mxu0
    %v5697 = vadd.f32 %v5622, %v5696
    %v5698 = vpop.f32.mrb[0].mxu0
    %5699 = vmatprep.mubr.f32.mxu0 0.0
    %5700 = vmatmul.mubr.f32.gmra.mrb[0].mxu0 %v5628
    %v5701 = vpop.f32.mrb[0].mxu0
    %v5702 = vadd.f32 %v5623, %v5701
    %v5703 = vpop.f32.mrb[0].mxu0
    %5704 = vdwg.mxu0
    %5705 = vst.msk [vmem:[#allocation2] sm:$0xff] %vm82, %v5697
    %5706 = vst.msk [vmem:[#allocation2 + $0x8] sm:$0xff] %vm82, %v5702
    // Predicated region
    $region18: #{relative_mha_forward.1} parent=1 // pred_check
      _
    $region19: #{relative_mha_forward.1} parent=1 // pred_check_branch
      %5708 = sbr.rel (0) target = $region21
    $region20: #{relative_mha_forward.1} parent=1 // pred_region
      %s5710 = ssub.s32 256, 256
      %5711 = vsyncadd [#allocation3], %s5710
      %s5712 = sshll.u32 [#allocation2], 4
      %s5713 = int_to_ptr.vmem [resolvable:$true] %s5712
      %5718 = dma.vmem_to_hbm [thread:$0]  %s5713, 256, %s4, [#allocation3], 128, 128, 8
    $region21: #{relative_mha_forward.1} parent=1 // pred_fallthru
      _
    // Predicated region
    $region22: #{relative_mha_forward.1} parent=1 // pred_check
      _
    $region23: #{relative_mha_forward.1} parent=1 // pred_check_branch
      %5720 = sbr.rel (0) target = $region25
    $region24: #{relative_mha_forward.1} parent=1 // pred_region
      %5721 = dma.done [#allocation3], 256
    $region25: #{relative_mha_forward.1} parent=1 // pred_fallthru
      _
    %5722 = vsyncpa [#allocation3], 1

</llo_original>
